<compile_context>
chip_gen: v5e
topology: v5e:2x2
jax: 0.10.0
libtpu: 0.0.40
codegen_flags: <defaults>
</compile_context>

<pallas_src>
from functools import partial

import numpy as np

import jax
import jax.numpy as jnp
from jax.experimental import pallas as pl
from jax.experimental.pallas import tpu as pltpu


# ----------------------------------------------------------------------------
# 3x3 tap boundary masks (zero padding expressed as a per-lane 0/1 mask)
# ----------------------------------------------------------------------------

def make_shift_masks(h, w):
    """masks[d, s] = 1 if the neighbour (y+dy, x+dx) of pixel s=y*w+x lies inside
    the image (d = (dy+1)*3 + (dx+1)), else 0.  Combined with a lane roll by
    -(dy*w+dx) this reproduces an exact padding=1 3x3-conv tap shift."""
    hw = h * w
    s = np.arange(hw)
    y, x = s // w, s % w
    m = np.zeros((9, hw), np.float32)
    for kh in range(3):
        for kw in range(3):
            d = kh * 3 + kw
            yy, xx = y + kh - 1, x + kw - 1
            valid = (yy >= 0) & (yy < h) & (xx >= 0) & (xx < w)
            m[d, valid] = 1.0
    return jnp.asarray(m)


# ----------------------------------------------------------------------------
# Kernel A: qkv 1x1x1 -> depthwise 3x3 -> channel attention -> project_out
# ----------------------------------------------------------------------------

def _attention_front_kernel(x_ref, m_ref, wqkv_ref, wdw_ref, wproj_ref,
                            trow_ref, hmask_ref, qkv_out_ref, proj_out_ref,
                            *, h, w):
    hw = h * w
    x = x_ref[0]                                    # (c, hw) -- hw on the lane axis
    c = x.shape[0]
    masks = m_ref[...]                              # (9, hw) boundary masks
    wdw = wdw_ref[...]                              # (3c, 9) depthwise taps

    # qkv = Conv3d(dim, 3*dim, 1x1x1): one lane-dense MXU matmul.
    qkv0 = jnp.dot(wqkv_ref[...], x, preferred_element_type=jnp.float32)     # (3c, hw)

    # qkv_dwconv: depthwise 3x3 (centre depth slice of the 3x3x3 kernel, pad=1).
    # Lane rolls (XLU) + boundary masks + FMAs (VPU); no matmuls, no pads.
    acc = qkv0 * wdw[:, 4:5]                        # centre tap: no shift, no mask
    for d in range(9):
        if d == 4:
            continue
        dy, dx = d // 3 - 1, d % 3 - 1
        shift = (-(dy * w + dx)) % hw               # roll(x,-delta)[s] == x[s+delta]
        acc = acc + pltpu.roll(qkv0, shift, 1) * masks[d:d + 1, :] * wdw[:, d:d + 1]
    qkv_dw = acc
    qkv_out_ref[0] = qkv_dw                         # full-width (256-lane) store

    # Channel attention: all heads stacked into one (c, c) score matrix; the
    # cross-head entries are masked to -inf before the softmax, which makes the
    # masked softmax + attn@v exactly the per-head block-diagonal computation.
    q = qkv_dw[0:c, :]
    k = qkv_dw[c:2 * c, :]
    v = qkv_dw[2 * c:3 * c, :]
    # torch.nn.functional.normalize(..., dim=-1), eps=1e-12 (clamped rsqrt, EUP)
    qn = q * jax.lax.rsqrt(jnp.maximum(jnp.sum(q * q, -1, keepdims=True), 1e-24))
    kn = k * jax.lax.rsqrt(jnp.maximum(jnp.sum(k * k, -1, keepdims=True), 1e-24))
    scores = jax.lax.dot_general(qn, kn, (((1,), (1,)), ((), ())),
                                 preferred_element_type=jnp.float32)          # (c, c)
    scores = scores * trow_ref[...] + hmask_ref[...]     # per-head temperature + mask
    scores = scores - jnp.max(scores, -1, keepdims=True)
    e = jnp.exp(scores)
    attn = e / jnp.sum(e, -1, keepdims=True)
    out_att = jnp.dot(attn, v, preferred_element_type=jnp.float32)            # (c, hw)
    proj_out_ref[0] = jnp.dot(wproj_ref[...], out_att,
                              preferred_element_type=jnp.float32)             # project_out


def _attention_front(x2d, kp, *, h, w):
    b, c, hw = x2d.shape
    c3 = 3 * c
    kernel = partial(_attention_front_kernel, h=h, w=w)
    return pl.pallas_call(
        kernel,
        grid=(b,),
        in_specs=[
            pl.BlockSpec((1, c, hw), lambda i: (i, 0, 0)),     # x
            pl.BlockSpec((9, hw), lambda i: (0, 0)),           # boundary masks
            pl.BlockSpec((c3, c), lambda i: (0, 0)),           # w_qkv
            pl.BlockSpec((c3, 9), lambda i: (0, 0)),           # depthwise taps
            pl.BlockSpec((c, c), lambda i: (0, 0)),            # w_proj
            pl.BlockSpec((c, 1), lambda i: (0, 0)),            # per-row temperature
            pl.BlockSpec((c, c), lambda i: (0, 0)),            # head block mask
        ],
        out_specs=(
            pl.BlockSpec((1, c3, hw), lambda i: (i, 0, 0)),    # qkv_dw
            pl.BlockSpec((1, c, hw), lambda i: (i, 0, 0)),     # project_out
        ),
        out_shape=(
            jax.ShapeDtypeStruct((b, c3, hw), jnp.float32),
            jax.ShapeDtypeStruct((b, c, hw), jnp.float32),
        ),
        compiler_params=pltpu.CompilerParams(
            dimension_semantics=("parallel",)),                # v7x: 2 TCs share batch
    )(x2d, kp["masks"], kp["w_qkv"], kp["w_dw"], kp["w_proj"],
      kp["t_row"], kp["head_mask"])


# ----------------------------------------------------------------------------
# Kernel B: fc -> grouped dep_conv -> + project_out -> cv2 (Conv+BN+SiLU) -> +x
# ----------------------------------------------------------------------------

def _conv_back_kernel(x_ref, a_ref, proj_ref, m_ref, wfd_ref, dbias_ref,
                      wcv2_ref, bcv2_ref, out_ref, *, h, w, add):
    hw = h * w
    masks = m_ref[...]                               # (9, hw)
    c = dbias_ref.shape[0]                           # dep_conv / attention channels
    c2 = out_ref.shape[1]                            # cv2 output channels

    # fc (1x1x1 + bias) folded into the grouped 3x3 dep_conv (host-side weight
    # combine): ONE tap-stacked MXU dot, then 9 lane rolls + masks.
    a_all = a_ref[0]                                 # (ch*3nh, hw) scrambled qkv view
    y_taps = jnp.dot(wfd_ref[...], a_all, preferred_element_type=jnp.float32)  # (9c, hw)
    out_conv = dbias_ref[...] + y_taps[4 * c:5 * c, :]       # b_dep + fc-bias map + centre tap
    for d in range(9):
        if d == 4:
            continue
        dy, dx = d // 3 - 1, d % 3 - 1
        shift = (-(dy * w + dx)) % hw
        out_conv = out_conv + pltpu.roll(y_taps[d * c:(d + 1) * c, :], shift, 1) \
            * masks[d:d + 1, :]

    y = proj_ref[0] + out_conv                       # Attention (cv1) output

    # cv2 = Conv2d(c, c2, 3, pad=1, bias=False) + BatchNorm2d (folded, eval) + SiLU:
    # same "channel-mix once, roll after" trick -> one MXU dot + 9 rolls.
    z_taps = jnp.dot(wcv2_ref[...], y, preferred_element_type=jnp.float32)     # (9c2, hw)
    z = z_taps[4 * c2:5 * c2, :]
    for d in range(9):
        if d == 4:
            continue
        dy, dx = d // 3 - 1, d % 3 - 1
        shift = (-(dy * w + dx)) % hw
        z = z + pltpu.roll(z_taps[d * c2:(d + 1) * c2, :], shift, 1) * masks[d:d + 1, :]
    z = z + bcv2_ref[...]
    z = z * jax.nn.sigmoid(z)                        # SiLU
    if add:
        z = z + x_ref[0]                             # shortcut
    out_ref[0] = z.astype(out_ref.dtype)


def _conv_back(x2d, scr, out_proj, kp, *, h, w, add):
    b, c, hw = x2d.shape
    c3 = scr.shape[1]                                # ch * 3 * num_heads (== 3c)
    c2 = kp["b_cv2"].shape[0]
    kernel = partial(_conv_back_kernel, h=h, w=w, add=add)
    return pl.pallas_call(
        kernel,
        grid=(b,),
        in_specs=[
            pl.BlockSpec((1, c, hw), lambda i: (i, 0, 0)),     # x (residual)
            pl.BlockSpec((1, c3, hw), lambda i: (i, 0, 0)),    # scrambled qkv view
            pl.BlockSpec((1, c, hw), lambda i: (i, 0, 0)),     # project_out
            pl.BlockSpec((9, hw), lambda i: (0, 0)),           # boundary masks
            pl.BlockSpec((9 * c, c3), lambda i: (0, 0)),       # fc∘dep, tap-stacked
            pl.BlockSpec((c, hw), lambda i: (0, 0)),           # dep bias map
            pl.BlockSpec((9 * c2, c), lambda i: (0, 0)),       # cv2 (BN folded)
            pl.BlockSpec((c2, 1), lambda i: (0, 0)),           # cv2 bias
        ],
        out_specs=pl.BlockSpec((1, c2, hw), lambda i: (i, 0, 0)),
        out_shape=jax.ShapeDtypeStruct((b, c2, hw), jnp.float32),
        compiler_params=pltpu.CompilerParams(
            dimension_semantics=("parallel",)),
    )(x2d, scr, out_proj, kp["masks"], kp["w_fcdep"], kp["dep_bias"],
      kp["w_cv2"], kp["b_cv2"])


# ----------------------------------------------------------------------------
# Module forward (two fused Pallas calls + one tiny XLA transpose)
# ----------------------------------------------------------------------------

def bottleneck_at_forward(x, kp, *, c1, c2, shortcut=True, e=1.0, num_heads=4):
    """Bottleneck_AT.forward: x + cv2(cv1(x)), cv1 = CAFM Attention."""
    c_ = int(c2 * e)
    assert c_ == c1, "Attention(c1) outputs c1 channels; cv2 expects int(c2*e)"
    b, c, h, w = x.shape
    hw = h * w
    assert hw % 128 == 0 and c % num_heads == 0
    ch = c // num_heads
    add = bool(shortcut and c1 == c2)

    x2d = x.reshape(b, c, hw)                          # NCHW -> (b, C, H*W), free
    qkv_dw, out_proj = _attention_front(x2d, kp, h=h, w=w)
    # torch: qkv.reshape(b, h*w, 3*num_heads, -1) + permutes around fc().  This
    # reinterprets the channel-major memory (mixes channel & spatial indices),
    # so it is kept as one tiny XLA transpose between the two fused kernels.
    scr = jnp.transpose(qkv_dw.reshape(b, hw, 3 * num_heads, ch),
                        (0, 3, 2, 1)).reshape(b, 3 * num_heads * ch, hw)
    out2d = _conv_back(x2d, scr, out_proj, kp, h=h, w=w, add=add)
    return out2d.reshape(b, c2, h, w)


# ----------------------------------------------------------------------------
# Parameters (fresh module, no checkpoint) and kernel-layout preparation
# ----------------------------------------------------------------------------

def init_params(key, dim, c2, num_heads=4):
    ks = jax.random.split(key, 12)

    def rnd(k, shape, scale=0.25):
        return scale * jax.random.normal(k, shape, jnp.float32)

    p = {}
    # temperature is learnable (torch init = ones); use distinct values so the
    # per-head scaling path is actually exercised.
    p["temperature"] = 1.0 + 0.25 * jnp.arange(num_heads, dtype=jnp.float32)
    p["w_qkv"] = rnd(ks[0], (3 * dim, dim))             # Conv3d 1x1x1, no bias
    p["w_qkv_dw"] = rnd(ks[1], (3 * dim, 3, 3))         # centre depth slice of 3x3x3
    p["w_proj"] = rnd(ks[2], (dim, dim))                # Conv3d 1x1x1, no bias
    p["w_fc"] = rnd(ks[3], (9, 3 * num_heads))          # Conv3d 1x1x1 + bias
    p["b_fc"] = rnd(ks[4], (9,))
    p["w_dep"] = rnd(ks[5], (dim, 9, 3, 3))             # grouped (groups = dim//heads)
    p["b_dep"] = rnd(ks[6], (dim,))
    p["w_cv2"] = rnd(ks[7], (c2, dim, 3, 3))            # Conv2d 3x3, no bias
    p["bn_gamma"] = 1.0 + rnd(ks[8], (c2,), 0.1)
    p["bn_beta"] = rnd(ks[9], (c2,), 0.1)
    p["bn_mean"] = rnd(ks[10], (c2,), 0.1)
    p["bn_var"] = 0.5 + jnp.abs(rnd(ks[11], (c2,), 0.5))
    p["bn_eps"] = 1e-3                                   # ultralytics BatchNorm2d eps
    return p


def prepare_kernel_params(p, h, w, num_heads=4):
    c = int(p["w_qkv"].shape[1])
    c2 = int(p["w_cv2"].shape[0])
    nh = num_heads
    ch = c // nh                  # head dim == dep_conv group count
    masks = np.asarray(make_shift_masks(h, w))                     # (9, hw)

    kp = {"masks": jnp.asarray(masks)}

    # ---- kernel A ----
    kp["w_qkv"] = jnp.asarray(p["w_qkv"], jnp.float32)                      # (3c, c)
    kp["w_dw"] = jnp.asarray(p["w_qkv_dw"], jnp.float32).reshape(3 * c, 9)  # taps d=kh*3+kw
    kp["w_proj"] = jnp.asarray(p["w_proj"], jnp.float32)                    # (c, c)
    kp["t_row"] = jnp.asarray(
        np.repeat(np.asarray(p["temperature"], np.float32), ch).reshape(c, 1))
    head = np.arange(c) // ch
    kp["head_mask"] = jnp.asarray(
        np.where(head[:, None] == head[None, :], 0.0, -1e30).astype(np.float32))

    # ---- kernel B: fc folded into the grouped dep_conv, tap-stacked on M ----
    wfc = np.asarray(p["w_fc"], np.float32)                        # (9, 3nh)
    bfc = np.asarray(p["b_fc"], np.float32)                        # (9,)
    wdep = np.asarray(p["w_dep"], np.float32).reshape(ch, nh, 9, 9)  # (g, o, t, d)
    wcomb = np.einsum('gotd,tj->gdoj', wdep, wfc)                  # (g, d, o, 3nh)
    wstack = np.zeros((9 * c, ch * 3 * nh), np.float32)            # block-diag per group
    for d in range(9):
        for g in range(ch):
            r0, col0 = d * c + g * nh, g * 3 * nh
            wstack[r0:r0 + nh, col0:col0 + 3 * nh] = wcomb[g, d]
    kp["w_fcdep"] = jnp.asarray(wstack)
    # bias map: b_dep + sum_d mask_d * (W_dep[g,d] @ b_fc)  (fc bias through dep_conv)
    wdep_bfc = np.einsum('gotd,t->dgo', wdep, bfc).reshape(9, c)   # (d, c)
    dep_bias = np.asarray(p["b_dep"], np.float32)[:, None] + wdep_bfc.T @ masks
    kp["dep_bias"] = jnp.asarray(dep_bias.astype(np.float32))      # (c, hw)

    # cv2 conv with eval BatchNorm folded, tap-stacked on M -> (9*c2, c)
    scale = np.asarray(p["bn_gamma"], np.float32) / np.sqrt(
        np.asarray(p["bn_var"], np.float32) + p["bn_eps"])
    wcv2 = np.asarray(p["w_cv2"], np.float32) * scale[:, None, None, None]
    kp["w_cv2"] = jnp.asarray(wcv2.transpose(2, 3, 0, 1).reshape(9 * c2, c))
    kp["b_cv2"] = jnp.asarray(
        (np.asarray(p["bn_beta"], np.float32)
         - np.asarray(p["bn_mean"], np.float32) * scale).reshape(c2, 1))
    return kp


# ----------------------------------------------------------------------------
# Pure-JAX/XLA reference of the PyTorch module (for correctness checking)
# ----------------------------------------------------------------------------

def reference_forward(x, p, num_heads=4, shortcut=True):
    PH = jax.lax.Precision.HIGHEST
    b, c, h, w = x.shape
    hw = h * w
    ch = c // num_heads
    dn = ('NCHW', 'OIHW', 'NCHW')
    # ---- Attention (cv1) ----
    qkv = jnp.einsum('oc,bchw->bohw', p["w_qkv"], x, precision=PH)
    qkv = jax.lax.conv_general_dilated(
        qkv, p["w_qkv_dw"][:, None, :, :], (1, 1), ((1, 1), (1, 1)),
        dimension_numbers=dn, feature_group_count=3 * c, precision=PH)
    # conv-attention branch
    f_all = qkv.reshape(b, hw, 3 * num_heads, ch).transpose(0, 2, 1, 3)
    f_all = jnp.einsum('nm,bmsr->bnsr', p["w_fc"], f_all, precision=PH) \
        + p["b_fc"][None, :, None, None]
    f_conv = f_all.transpose(0, 3, 1, 2).reshape(b, 9 * ch, h, w)
    out_conv = jax.lax.conv_general_dilated(
        f_conv, p["w_dep"], (1, 1), ((1, 1), (1, 1)),
        dimension_numbers=dn, feature_group_count=ch, precision=PH)
    out_conv = out_conv + p["b_dep"][None, :, None, None]
    # channel attention branch
    q, k, v = jnp.split(qkv, 3, axis=1)
    q = q.reshape(b, num_heads, ch, hw)
    k = k.reshape(b, num_heads, ch, hw)
    v = v.reshape(b, num_heads, ch, hw)
    qn = q / jnp.maximum(jnp.sqrt(jnp.sum(q * q, -1, keepdims=True)), 1e-12)
    kn = k / jnp.maximum(jnp.sqrt(jnp.sum(k * k, -1, keepdims=True)), 1e-12)
    attn = jnp.einsum('bhcs,bhds->bhcd', qn, kn, precision=PH)
    attn = attn * p["temperature"][None, :, None, None]
    attn = jax.nn.softmax(attn, axis=-1)
    out = jnp.einsum('bhcd,bhds->bhcs', attn, v, precision=PH).reshape(b, c, h, w)
    out = jnp.einsum('oc,bchw->bohw', p["w_proj"], out, precision=PH)
    y = out + out_conv
    # ---- cv2 = Conv2d 3x3 + BatchNorm2d(eval) + SiLU ----
    z = jax.lax.conv_general_dilated(
        y, p["w_cv2"], (1, 1), ((1, 1), (1, 1)), dimension_numbers=dn, precision=PH)
    scale = p["bn_gamma"] / jnp.sqrt(p["bn_var"] + p["bn_eps"])
    z = (z - p["bn_mean"][None, :, None, None]) * scale[None, :, None, None] \
        + p["bn_beta"][None, :, None, None]
    z = z * jax.nn.sigmoid(z)
    return x + z if shortcut else z


# ----------------------------------------------------------------------------

if __name__ == "__main__":
    # Keep every matmul (Pallas MXU dots and the XLA reference) at f32 accuracy
    # so the element-wise check below is tight.
    jax.config.update("jax_default_matmul_precision", "highest")

    key = jax.random.PRNGKey(0)
    b, c1, c2, h, w = 2, 8, 8, 16, 16
    num_heads = 4
    kx, kparam = jax.random.split(key)

    x = jax.random.normal(kx, (b, c1, h, w), jnp.float32)
    params = init_params(kparam, c1, c2, num_heads=num_heads)
    kp = prepare_kernel_params(params, h, w, num_heads=num_heads)

    fwd = jax.jit(lambda xx, kpp: bottleneck_at_forward(
        xx, kpp, c1=c1, c2=c2, shortcut=True, e=1.0, num_heads=num_heads))
    out = fwd(x, kp)
    jax.block_until_ready(out)

    assert out.shape == (b, c2, h, w), out.shape
    assert bool(jnp.all(jnp.isfinite(out)))

    # Element-wise check against a pure-JAX/XLA implementation of the module
    # (covers the qkv reshape/scramble, roll directions, conv orientation, BN folding).
    ref_fn = jax.jit(lambda xx, pp: reference_forward(xx, pp, num_heads=num_heads))
    ref = ref_fn(x, params)
    max_err = float(jnp.max(jnp.abs(out - ref)))
    assert max_err < 2e-3, f"Pallas output mismatches reference: max_err={max_err}"

    print("KERNEL_OK")
</pallas_src>

<mosaic_0001>
module attributes {stable_mosaic.version = 11 : i64} {
  func.func @_attention_front_kernel(%arg0: i32, %arg1: memref<1x8x256xf32, #tpu.memory_space<vmem>>, %arg2: memref<9x256xf32, #tpu.memory_space<vmem>>, %arg3: memref<24x8xf32, #tpu.memory_space<vmem>>, %arg4: memref<24x9xf32, #tpu.memory_space<vmem>>, %arg5: memref<8x8xf32, #tpu.memory_space<vmem>>, %arg6: memref<8x1xf32, #tpu.memory_space<vmem>>, %arg7: memref<8x8xf32, #tpu.memory_space<vmem>>, %arg8: memref<1x24x256xf32, #tpu.memory_space<vmem>>, %arg9: memref<1x8x256xf32, #tpu.memory_space<vmem>>) attributes {dimension_semantics = [#tpu.dimension_semantics<parallel>], iteration_bounds = array<i64: 2>, scalar_prefetch = 0 : i64, scratch_operands = 0 : i64, tpu.core_type = #tpu.core_type<tc>, window_params = [{transform_indices = @transform_0, window_bounds = array<i64: 1, 8, 256>}, {pipeline_mode = #tpu.pipeline_mode<synchronous>, transform_indices = @transform_1, window_bounds = array<i64: 9, 256>}, {pipeline_mode = #tpu.pipeline_mode<synchronous>, transform_indices = @transform_2, window_bounds = array<i64: 24, 8>}, {pipeline_mode = #tpu.pipeline_mode<synchronous>, transform_indices = @transform_3, window_bounds = array<i64: 24, 9>}, {pipeline_mode = #tpu.pipeline_mode<synchronous>, transform_indices = @transform_4, window_bounds = array<i64: 8, 8>}, {pipeline_mode = #tpu.pipeline_mode<synchronous>, transform_indices = @transform_5, window_bounds = array<i64: 8, 1>}, {pipeline_mode = #tpu.pipeline_mode<synchronous>, transform_indices = @transform_6, window_bounds = array<i64: 8, 8>}, {transform_indices = @transform_7, window_bounds = array<i64: 1, 24, 256>}, {transform_indices = @transform_8, window_bounds = array<i64: 1, 8, 256>}]} {
    %c0 = arith.constant 0 : index
    %c0_0 = arith.constant 0 : index
    %c0_1 = arith.constant 0 : index
    %0 = vector.load %arg1[%c0, %c0_0, %c0_1] : memref<1x8x256xf32, #tpu.memory_space<vmem>>, vector<1x8x256xf32>
    %1 = vector.shape_cast %0 : vector<1x8x256xf32> to vector<8x256xf32>
    %c0_2 = arith.constant 0 : index
    %c0_3 = arith.constant 0 : index
    %2 = vector.load %arg2[%c0_2, %c0_3] : memref<9x256xf32, #tpu.memory_space<vmem>>, vector<9x256xf32>
    %c0_4 = arith.constant 0 : index
    %c0_5 = arith.constant 0 : index
    %3 = vector.load %arg4[%c0_4, %c0_5] : memref<24x9xf32, #tpu.memory_space<vmem>>, vector<24x9xf32>
    %c0_6 = arith.constant 0 : index
    %c0_7 = arith.constant 0 : index
    %4 = vector.load %arg3[%c0_6, %c0_7] : memref<24x8xf32, #tpu.memory_space<vmem>>, vector<24x8xf32>
    %cst = arith.constant dense<0.000000e+00> : vector<24x256xf32>
    %5 = tpu.matmul %4, %1, %cst {dimension_numbers = #tpu.dot_dimension_numbers<[1], [0], [0], [1], [0, 0, 1, 1], [], []>, precision = #tpu.contract_precision<fp32>} : vector<24x8xf32>, vector<8x256xf32>, vector<24x256xf32> -> vector<24x256xf32>
    %6 = vector.extract_strided_slice %3 {offsets = [0, 4], sizes = [24, 1], strides = [1, 1]} : vector<24x9xf32> to vector<24x1xf32>
    %7 = vector.broadcast %6 : vector<24x1xf32> to vector<24x256xf32>
    %8 = arith.mulf %5, %7 : vector<24x256xf32>
    %c17_i32 = arith.constant 17 : i32
    %9 = tpu.dynamic_rotate %5 by %c17_i32 dim 1 : vector<24x256xf32>, i32 -> vector<24x256xf32>
    %10 = vector.extract_strided_slice %2 {offsets = [0, 0], sizes = [1, 256], strides = [1, 1]} : vector<9x256xf32> to vector<1x256xf32>
    %11 = vector.broadcast %10 : vector<1x256xf32> to vector<24x256xf32>
    %12 = arith.mulf %9, %11 : vector<24x256xf32>
    %13 = vector.extract_strided_slice %3 {offsets = [0, 0], sizes = [24, 1], strides = [1, 1]} : vector<24x9xf32> to vector<24x1xf32>
    %14 = vector.broadcast %13 : vector<24x1xf32> to vector<24x256xf32>
    %15 = arith.mulf %12, %14 : vector<24x256xf32>
    %16 = arith.addf %8, %15 : vector<24x256xf32>
    %c16_i32 = arith.constant 16 : i32
    %17 = tpu.dynamic_rotate %5 by %c16_i32 dim 1 : vector<24x256xf32>, i32 -> vector<24x256xf32>
    %18 = vector.extract_strided_slice %2 {offsets = [1, 0], sizes = [1, 256], strides = [1, 1]} : vector<9x256xf32> to vector<1x256xf32>
    %19 = vector.broadcast %18 : vector<1x256xf32> to vector<24x256xf32>
    %20 = arith.mulf %17, %19 : vector<24x256xf32>
    %21 = vector.extract_strided_slice %3 {offsets = [0, 1], sizes = [24, 1], strides = [1, 1]} : vector<24x9xf32> to vector<24x1xf32>
    %22 = vector.broadcast %21 : vector<24x1xf32> to vector<24x256xf32>
    %23 = arith.mulf %20, %22 : vector<24x256xf32>
    %24 = arith.addf %16, %23 : vector<24x256xf32>
    %c15_i32 = arith.constant 15 : i32
    %25 = tpu.dynamic_rotate %5 by %c15_i32 dim 1 : vector<24x256xf32>, i32 -> vector<24x256xf32>
    %26 = vector.extract_strided_slice %2 {offsets = [2, 0], sizes = [1, 256], strides = [1, 1]} : vector<9x256xf32> to vector<1x256xf32>
    %27 = vector.broadcast %26 : vector<1x256xf32> to vector<24x256xf32>
    %28 = arith.mulf %25, %27 : vector<24x256xf32>
    %29 = vector.extract_strided_slice %3 {offsets = [0, 2], sizes = [24, 1], strides = [1, 1]} : vector<24x9xf32> to vector<24x1xf32>
    %30 = vector.broadcast %29 : vector<24x1xf32> to vector<24x256xf32>
    %31 = arith.mulf %28, %30 : vector<24x256xf32>
    %32 = arith.addf %24, %31 : vector<24x256xf32>
    %c1_i32 = arith.constant 1 : i32
    %33 = tpu.dynamic_rotate %5 by %c1_i32 dim 1 : vector<24x256xf32>, i32 -> vector<24x256xf32>
    %34 = vector.extract_strided_slice %2 {offsets = [3, 0], sizes = [1, 256], strides = [1, 1]} : vector<9x256xf32> to vector<1x256xf32>
    %35 = vector.broadcast %34 : vector<1x256xf32> to vector<24x256xf32>
    %36 = arith.mulf %33, %35 : vector<24x256xf32>
    %37 = vector.extract_strided_slice %3 {offsets = [0, 3], sizes = [24, 1], strides = [1, 1]} : vector<24x9xf32> to vector<24x1xf32>
    %38 = vector.broadcast %37 : vector<24x1xf32> to vector<24x256xf32>
    %39 = arith.mulf %36, %38 : vector<24x256xf32>
    %40 = arith.addf %32, %39 : vector<24x256xf32>
    %c255_i32 = arith.constant 255 : i32
    %41 = tpu.dynamic_rotate %5 by %c255_i32 dim 1 : vector<24x256xf32>, i32 -> vector<24x256xf32>
    %42 = vector.extract_strided_slice %2 {offsets = [5, 0], sizes = [1, 256], strides = [1, 1]} : vector<9x256xf32> to vector<1x256xf32>
    %43 = vector.broadcast %42 : vector<1x256xf32> to vector<24x256xf32>
    %44 = arith.mulf %41, %43 : vector<24x256xf32>
    %45 = vector.extract_strided_slice %3 {offsets = [0, 5], sizes = [24, 1], strides = [1, 1]} : vector<24x9xf32> to vector<24x1xf32>
    %46 = vector.broadcast %45 : vector<24x1xf32> to vector<24x256xf32>
    %47 = arith.mulf %44, %46 : vector<24x256xf32>
    %48 = arith.addf %40, %47 : vector<24x256xf32>
    %c241_i32 = arith.constant 241 : i32
    %49 = tpu.dynamic_rotate %5 by %c241_i32 dim 1 : vector<24x256xf32>, i32 -> vector<24x256xf32>
    %50 = vector.extract_strided_slice %2 {offsets = [6, 0], sizes = [1, 256], strides = [1, 1]} : vector<9x256xf32> to vector<1x256xf32>
    %51 = vector.broadcast %50 : vector<1x256xf32> to vector<24x256xf32>
    %52 = arith.mulf %49, %51 : vector<24x256xf32>
    %53 = vector.extract_strided_slice %3 {offsets = [0, 6], sizes = [24, 1], strides = [1, 1]} : vector<24x9xf32> to vector<24x1xf32>
    %54 = vector.broadcast %53 : vector<24x1xf32> to vector<24x256xf32>
    %55 = arith.mulf %52, %54 : vector<24x256xf32>
    %56 = arith.addf %48, %55 : vector<24x256xf32>
    %c240_i32 = arith.constant 240 : i32
    %57 = tpu.dynamic_rotate %5 by %c240_i32 dim 1 : vector<24x256xf32>, i32 -> vector<24x256xf32>
    %58 = vector.extract_strided_slice %2 {offsets = [7, 0], sizes = [1, 256], strides = [1, 1]} : vector<9x256xf32> to vector<1x256xf32>
    %59 = vector.broadcast %58 : vector<1x256xf32> to vector<24x256xf32>
    %60 = arith.mulf %57, %59 : vector<24x256xf32>
    %61 = vector.extract_strided_slice %3 {offsets = [0, 7], sizes = [24, 1], strides = [1, 1]} : vector<24x9xf32> to vector<24x1xf32>
    %62 = vector.broadcast %61 : vector<24x1xf32> to vector<24x256xf32>
    %63 = arith.mulf %60, %62 : vector<24x256xf32>
    %64 = arith.addf %56, %63 : vector<24x256xf32>
    %c239_i32 = arith.constant 239 : i32
    %65 = tpu.dynamic_rotate %5 by %c239_i32 dim 1 : vector<24x256xf32>, i32 -> vector<24x256xf32>
    %66 = vector.extract_strided_slice %2 {offsets = [8, 0], sizes = [1, 256], strides = [1, 1]} : vector<9x256xf32> to vector<1x256xf32>
    %67 = vector.broadcast %66 : vector<1x256xf32> to vector<24x256xf32>
    %68 = arith.mulf %65, %67 : vector<24x256xf32>
    %69 = vector.extract_strided_slice %3 {offsets = [0, 8], sizes = [24, 1], strides = [1, 1]} : vector<24x9xf32> to vector<24x1xf32>
    %70 = vector.broadcast %69 : vector<24x1xf32> to vector<24x256xf32>
    %71 = arith.mulf %68, %70 : vector<24x256xf32>
    %72 = arith.addf %64, %71 : vector<24x256xf32>
    %c0_8 = arith.constant 0 : index
    %c0_9 = arith.constant 0 : index
    %c0_10 = arith.constant 0 : index
    %73 = vector.load %arg8[%c0_8, %c0_9, %c0_10] : memref<1x24x256xf32, #tpu.memory_space<vmem>>, vector<1x24x256xf32>
    %74 = vector.shape_cast %73 : vector<1x24x256xf32> to vector<24x256xf32>
    %75 = vector.shape_cast %72 : vector<24x256xf32> to vector<1x24x256xf32>
    tpu.vector_store %arg8[%c0_8, %c0_9, %c0_10], %75 {strides = array<i32>} : memref<1x24x256xf32, #tpu.memory_space<vmem>>, vector<1x24x256xf32>,
    %76 = vector.extract_strided_slice %72 {offsets = [0, 0], sizes = [8, 256], strides = [1, 1]} : vector<24x256xf32> to vector<8x256xf32>
    %77 = vector.extract_strided_slice %72 {offsets = [8, 0], sizes = [8, 256], strides = [1, 1]} : vector<24x256xf32> to vector<8x256xf32>
    %78 = vector.extract_strided_slice %72 {offsets = [16, 0], sizes = [8, 256], strides = [1, 1]} : vector<24x256xf32> to vector<8x256xf32>
    %79 = arith.mulf %76, %76 : vector<8x256xf32>
    %cst_11 = arith.constant dense<0.000000e+00> : vector<8xf32>
    %80 = vector.multi_reduction <add>, %79, %cst_11 [1] : vector<8x256xf32> to vector<8xf32>
    %81 = vector.shape_cast %80 : vector<8xf32> to vector<8x1xf32>
    %cst_12 = arith.constant 1.000000e-24 : f32
    %82 = vector.broadcast %cst_12 : f32 to vector<8x1xf32>
    %83 = arith.maximumf %81, %82 : vector<8x1xf32>
    %84 = math.rsqrt %83 : vector<8x1xf32>
    %85 = vector.broadcast %84 : vector<8x1xf32> to vector<8x256xf32>
    %86 = arith.mulf %76, %85 : vector<8x256xf32>
    %87 = arith.mulf %77, %77 : vector<8x256xf32>
    %cst_13 = arith.constant dense<0.000000e+00> : vector<8xf32>
    %88 = vector.multi_reduction <add>, %87, %cst_13 [1] : vector<8x256xf32> to vector<8xf32>
    %89 = vector.shape_cast %88 : vector<8xf32> to vector<8x1xf32>
    %cst_14 = arith.constant 1.000000e-24 : f32
    %90 = vector.broadcast %cst_14 : f32 to vector<8x1xf32>
    %91 = arith.maximumf %89, %90 : vector<8x1xf32>
    %92 = math.rsqrt %91 : vector<8x1xf32>
    %93 = vector.broadcast %92 : vector<8x1xf32> to vector<8x256xf32>
    %94 = arith.mulf %77, %93 : vector<8x256xf32>
    %cst_15 = arith.constant dense<0.000000e+00> : vector<8x8xf32>
    %95 = tpu.matmul %86, %94, %cst_15 {dimension_numbers = #tpu.dot_dimension_numbers<[1], [1], [0], [0], [0, 0, 1, 0], [], []>, precision = #tpu.contract_precision<fp32>} : vector<8x256xf32>, vector<8x256xf32>, vector<8x8xf32> -> vector<8x8xf32>
    %c0_16 = arith.constant 0 : index
    %c0_17 = arith.constant 0 : index
    %96 = vector.load %arg6[%c0_16, %c0_17] : memref<8x1xf32, #tpu.memory_space<vmem>>, vector<8x1xf32>
    %97 = vector.broadcast %96 : vector<8x1xf32> to vector<8x8xf32>
    %98 = arith.mulf %95, %97 : vector<8x8xf32>
    %c0_18 = arith.constant 0 : index
    %c0_19 = arith.constant 0 : index
    %99 = vector.load %arg7[%c0_18, %c0_19] : memref<8x8xf32, #tpu.memory_space<vmem>>, vector<8x8xf32>
    %100 = arith.addf %98, %99 : vector<8x8xf32>
    %cst_20 = arith.constant dense<0xFF800000> : vector<8xf32>
    %101 = vector.multi_reduction <maximumf>, %100, %cst_20 [1] : vector<8x8xf32> to vector<8xf32>
    %102 = vector.shape_cast %101 : vector<8xf32> to vector<8x1xf32>
    %103 = vector.broadcast %102 : vector<8x1xf32> to vector<8x8xf32>
    %104 = arith.subf %100, %103 : vector<8x8xf32>
    %105 = math.exp %104 : vector<8x8xf32>
    %cst_21 = arith.constant dense<0.000000e+00> : vector<8xf32>
    %106 = vector.multi_reduction <add>, %105, %cst_21 [1] : vector<8x8xf32> to vector<8xf32>
    %107 = vector.shape_cast %106 : vector<8xf32> to vector<8x1xf32>
    %108 = vector.broadcast %107 : vector<8x1xf32> to vector<8x8xf32>
    %109 = arith.divf %105, %108 : vector<8x8xf32>
    %cst_22 = arith.constant dense<0.000000e+00> : vector<8x256xf32>
    %110 = tpu.matmul %109, %78, %cst_22 {dimension_numbers = #tpu.dot_dimension_numbers<[1], [0], [0], [1], [0, 0, 1, 1], [], []>, precision = #tpu.contract_precision<fp32>} : vector<8x8xf32>, vector<8x256xf32>, vector<8x256xf32> -> vector<8x256xf32>
    %c0_23 = arith.constant 0 : index
    %c0_24 = arith.constant 0 : index
    %111 = vector.load %arg5[%c0_23, %c0_24] : memref<8x8xf32, #tpu.memory_space<vmem>>, vector<8x8xf32>
    %cst_25 = arith.constant dense<0.000000e+00> : vector<8x256xf32>
    %112 = tpu.matmul %111, %110, %cst_25 {dimension_numbers = #tpu.dot_dimension_numbers<[1], [0], [0], [1], [0, 0, 1, 1], [], []>, precision = #tpu.contract_precision<fp32>} : vector<8x8xf32>, vector<8x256xf32>, vector<8x256xf32> -> vector<8x256xf32>
    %c0_26 = arith.constant 0 : index
    %c0_27 = arith.constant 0 : index
    %c0_28 = arith.constant 0 : index
    %113 = vector.load %arg9[%c0_26, %c0_27, %c0_28] : memref<1x8x256xf32, #tpu.memory_space<vmem>>, vector<1x8x256xf32>
    %114 = vector.shape_cast %113 : vector<1x8x256xf32> to vector<8x256xf32>
    %115 = vector.shape_cast %112 : vector<8x256xf32> to vector<1x8x256xf32>
    tpu.vector_store %arg9[%c0_26, %c0_27, %c0_28], %115 {strides = array<i32>} : memref<1x8x256xf32, #tpu.memory_space<vmem>>, vector<1x8x256xf32>,
    return
  }
  func.func @transform_0(%arg0: i32) -> (i32, i32, i32) {
    %c0_i32 = arith.constant 0 : i32
    %c0_i32_0 = arith.constant 0 : i32
    %c0_i32_1 = arith.constant 0 : i32
    return %arg0, %c0_i32, %c0_i32_0 : i32, i32, i32
  }
  func.func @transform_1(%arg0: i32) -> (i32, i32) {
    %c0_i32 = arith.constant 0 : i32
    %c0_i32_0 = arith.constant 0 : i32
    %c0_i32_1 = arith.constant 0 : i32
    return %c0_i32, %c0_i32_0 : i32, i32
  }
  func.func @transform_2(%arg0: i32) -> (i32, i32) {
    %c0_i32 = arith.constant 0 : i32
    %c0_i32_0 = arith.constant 0 : i32
    %c0_i32_1 = arith.constant 0 : i32
    return %c0_i32, %c0_i32_0 : i32, i32
  }
  func.func @transform_3(%arg0: i32) -> (i32, i32) {
    %c0_i32 = arith.constant 0 : i32
    %c0_i32_0 = arith.constant 0 : i32
    %c0_i32_1 = arith.constant 0 : i32
    return %c0_i32, %c0_i32_0 : i32, i32
  }
  func.func @transform_4(%arg0: i32) -> (i32, i32) {
    %c0_i32 = arith.constant 0 : i32
    %c0_i32_0 = arith.constant 0 : i32
    %c0_i32_1 = arith.constant 0 : i32
    return %c0_i32, %c0_i32_0 : i32, i32
  }
  func.func @transform_5(%arg0: i32) -> (i32, i32) {
    %c0_i32 = arith.constant 0 : i32
    %c0_i32_0 = arith.constant 0 : i32
    %c0_i32_1 = arith.constant 0 : i32
    return %c0_i32, %c0_i32_0 : i32, i32
  }
  func.func @transform_6(%arg0: i32) -> (i32, i32) {
    %c0_i32 = arith.constant 0 : i32
    %c0_i32_0 = arith.constant 0 : i32
    %c0_i32_1 = arith.constant 0 : i32
    return %c0_i32, %c0_i32_0 : i32, i32
  }
  func.func @transform_7(%arg0: i32) -> (i32, i32, i32) {
    %c0_i32 = arith.constant 0 : i32
    %c0_i32_0 = arith.constant 0 : i32
    %c0_i32_1 = arith.constant 0 : i32
    return %arg0, %c0_i32, %c0_i32_0 : i32, i32, i32
  }
  func.func @transform_8(%arg0: i32) -> (i32, i32, i32) {
    %c0_i32 = arith.constant 0 : i32
    %c0_i32_0 = arith.constant 0 : i32
    %c0_i32_1 = arith.constant 0 : i32
    return %arg0, %c0_i32, %c0_i32_0 : i32, i32, i32
  }
}

module attributes {stable_mosaic.version = 11 : i64} {
  func.func @_conv_back_kernel(%arg0: i32, %arg1: memref<1x8x256xf32, #tpu.memory_space<vmem>>, %arg2: memref<1x24x256xf32, #tpu.memory_space<vmem>>, %arg3: memref<1x8x256xf32, #tpu.memory_space<vmem>>, %arg4: memref<9x256xf32, #tpu.memory_space<vmem>>, %arg5: memref<72x24xf32, #tpu.memory_space<vmem>>, %arg6: memref<8x256xf32, #tpu.memory_space<vmem>>, %arg7: memref<72x8xf32, #tpu.memory_space<vmem>>, %arg8: memref<8x1xf32, #tpu.memory_space<vmem>>, %arg9: memref<1x8x256xf32, #tpu.memory_space<vmem>>) attributes {dimension_semantics = [#tpu.dimension_semantics<parallel>], iteration_bounds = array<i64: 2>, scalar_prefetch = 0 : i64, scratch_operands = 0 : i64, tpu.core_type = #tpu.core_type<tc>, window_params = [{transform_indices = @transform_0, window_bounds = array<i64: 1, 8, 256>}, {transform_indices = @transform_1, window_bounds = array<i64: 1, 24, 256>}, {transform_indices = @transform_2, window_bounds = array<i64: 1, 8, 256>}, {pipeline_mode = #tpu.pipeline_mode<synchronous>, transform_indices = @transform_3, window_bounds = array<i64: 9, 256>}, {pipeline_mode = #tpu.pipeline_mode<synchronous>, transform_indices = @transform_4, window_bounds = array<i64: 72, 24>}, {pipeline_mode = #tpu.pipeline_mode<synchronous>, transform_indices = @transform_5, window_bounds = array<i64: 8, 256>}, {pipeline_mode = #tpu.pipeline_mode<synchronous>, transform_indices = @transform_6, window_bounds = array<i64: 72, 8>}, {pipeline_mode = #tpu.pipeline_mode<synchronous>, transform_indices = @transform_7, window_bounds = array<i64: 8, 1>}, {transform_indices = @transform_8, window_bounds = array<i64: 1, 8, 256>}]} {
    %c0 = arith.constant 0 : index
    %c0_0 = arith.constant 0 : index
    %0 = vector.load %arg4[%c0, %c0_0] : memref<9x256xf32, #tpu.memory_space<vmem>>, vector<9x256xf32>
    %c0_1 = arith.constant 0 : index
    %c0_2 = arith.constant 0 : index
    %c0_3 = arith.constant 0 : index
    %1 = vector.load %arg2[%c0_1, %c0_2, %c0_3] : memref<1x24x256xf32, #tpu.memory_space<vmem>>, vector<1x24x256xf32>
    %2 = vector.shape_cast %1 : vector<1x24x256xf32> to vector<24x256xf32>
    %c0_4 = arith.constant 0 : index
    %c0_5 = arith.constant 0 : index
    %3 = vector.load %arg5[%c0_4, %c0_5] : memref<72x24xf32, #tpu.memory_space<vmem>>, vector<72x24xf32>
    %cst = arith.constant dense<0.000000e+00> : vector<72x256xf32>
    %4 = tpu.matmul %3, %2, %cst {dimension_numbers = #tpu.dot_dimension_numbers<[1], [0], [0], [1], [0, 0, 1, 1], [], []>, precision = #tpu.contract_precision<fp32>} : vector<72x24xf32>, vector<24x256xf32>, vector<72x256xf32> -> vector<72x256xf32>
    %c0_6 = arith.constant 0 : index
    %c0_7 = arith.constant 0 : index
    %5 = vector.load %arg6[%c0_6, %c0_7] : memref<8x256xf32, #tpu.memory_space<vmem>>, vector<8x256xf32>
    %6 = vector.extract_strided_slice %4 {offsets = [32, 0], sizes = [8, 256], strides = [1, 1]} : vector<72x256xf32> to vector<8x256xf32>
    %7 = arith.addf %5, %6 : vector<8x256xf32>
    %8 = vector.extract_strided_slice %4 {offsets = [0, 0], sizes = [8, 256], strides = [1, 1]} : vector<72x256xf32> to vector<8x256xf32>
    %c17_i32 = arith.constant 17 : i32
    %9 = tpu.dynamic_rotate %8 by %c17_i32 dim 1 : vector<8x256xf32>, i32 -> vector<8x256xf32>
    %10 = vector.extract_strided_slice %0 {offsets = [0, 0], sizes = [1, 256], strides = [1, 1]} : vector<9x256xf32> to vector<1x256xf32>
    %11 = vector.broadcast %10 : vector<1x256xf32> to vector<8x256xf32>
    %12 = arith.mulf %9, %11 : vector<8x256xf32>
    %13 = arith.addf %7, %12 : vector<8x256xf32>
    %14 = vector.extract_strided_slice %4 {offsets = [8, 0], sizes = [8, 256], strides = [1, 1]} : vector<72x256xf32> to vector<8x256xf32>
    %c16_i32 = arith.constant 16 : i32
    %15 = tpu.dynamic_rotate %14 by %c16_i32 dim 1 : vector<8x256xf32>, i32 -> vector<8x256xf32>
    %16 = vector.extract_strided_slice %0 {offsets = [1, 0], sizes = [1, 256], strides = [1, 1]} : vector<9x256xf32> to vector<1x256xf32>
    %17 = vector.broadcast %16 : vector<1x256xf32> to vector<8x256xf32>
    %18 = arith.mulf %15, %17 : vector<8x256xf32>
    %19 = arith.addf %13, %18 : vector<8x256xf32>
    %20 = vector.extract_strided_slice %4 {offsets = [16, 0], sizes = [8, 256], strides = [1, 1]} : vector<72x256xf32> to vector<8x256xf32>
    %c15_i32 = arith.constant 15 : i32
    %21 = tpu.dynamic_rotate %20 by %c15_i32 dim 1 : vector<8x256xf32>, i32 -> vector<8x256xf32>
    %22 = vector.extract_strided_slice %0 {offsets = [2, 0], sizes = [1, 256], strides = [1, 1]} : vector<9x256xf32> to vector<1x256xf32>
    %23 = vector.broadcast %22 : vector<1x256xf32> to vector<8x256xf32>
    %24 = arith.mulf %21, %23 : vector<8x256xf32>
    %25 = arith.addf %19, %24 : vector<8x256xf32>
    %26 = vector.extract_strided_slice %4 {offsets = [24, 0], sizes = [8, 256], strides = [1, 1]} : vector<72x256xf32> to vector<8x256xf32>
    %c1_i32 = arith.constant 1 : i32
    %27 = tpu.dynamic_rotate %26 by %c1_i32 dim 1 : vector<8x256xf32>, i32 -> vector<8x256xf32>
    %28 = vector.extract_strided_slice %0 {offsets = [3, 0], sizes = [1, 256], strides = [1, 1]} : vector<9x256xf32> to vector<1x256xf32>
    %29 = vector.broadcast %28 : vector<1x256xf32> to vector<8x256xf32>
    %30 = arith.mulf %27, %29 : vector<8x256xf32>
    %31 = arith.addf %25, %30 : vector<8x256xf32>
    %32 = vector.extract_strided_slice %4 {offsets = [40, 0], sizes = [8, 256], strides = [1, 1]} : vector<72x256xf32> to vector<8x256xf32>
    %c255_i32 = arith.constant 255 : i32
    %33 = tpu.dynamic_rotate %32 by %c255_i32 dim 1 : vector<8x256xf32>, i32 -> vector<8x256xf32>
    %34 = vector.extract_strided_slice %0 {offsets = [5, 0], sizes = [1, 256], strides = [1, 1]} : vector<9x256xf32> to vector<1x256xf32>
    %35 = vector.broadcast %34 : vector<1x256xf32> to vector<8x256xf32>
    %36 = arith.mulf %33, %35 : vector<8x256xf32>
    %37 = arith.addf %31, %36 : vector<8x256xf32>
    %38 = vector.extract_strided_slice %4 {offsets = [48, 0], sizes = [8, 256], strides = [1, 1]} : vector<72x256xf32> to vector<8x256xf32>
    %c241_i32 = arith.constant 241 : i32
    %39 = tpu.dynamic_rotate %38 by %c241_i32 dim 1 : vector<8x256xf32>, i32 -> vector<8x256xf32>
    %40 = vector.extract_strided_slice %0 {offsets = [6, 0], sizes = [1, 256], strides = [1, 1]} : vector<9x256xf32> to vector<1x256xf32>
    %41 = vector.broadcast %40 : vector<1x256xf32> to vector<8x256xf32>
    %42 = arith.mulf %39, %41 : vector<8x256xf32>
    %43 = arith.addf %37, %42 : vector<8x256xf32>
    %44 = vector.extract_strided_slice %4 {offsets = [56, 0], sizes = [8, 256], strides = [1, 1]} : vector<72x256xf32> to vector<8x256xf32>
    %c240_i32 = arith.constant 240 : i32
    %45 = tpu.dynamic_rotate %44 by %c240_i32 dim 1 : vector<8x256xf32>, i32 -> vector<8x256xf32>
    %46 = vector.extract_strided_slice %0 {offsets = [7, 0], sizes = [1, 256], strides = [1, 1]} : vector<9x256xf32> to vector<1x256xf32>
    %47 = vector.broadcast %46 : vector<1x256xf32> to vector<8x256xf32>
    %48 = arith.mulf %45, %47 : vector<8x256xf32>
    %49 = arith.addf %43, %48 : vector<8x256xf32>
    %50 = vector.extract_strided_slice %4 {offsets = [64, 0], sizes = [8, 256], strides = [1, 1]} : vector<72x256xf32> to vector<8x256xf32>
    %c239_i32 = arith.constant 239 : i32
    %51 = tpu.dynamic_rotate %50 by %c239_i32 dim 1 : vector<8x256xf32>, i32 -> vector<8x256xf32>
    %52 = vector.extract_strided_slice %0 {offsets = [8, 0], sizes = [1, 256], strides = [1, 1]} : vector<9x256xf32> to vector<1x256xf32>
    %53 = vector.broadcast %52 : vector<1x256xf32> to vector<8x256xf32>
    %54 = arith.mulf %51, %53 : vector<8x256xf32>
    %55 = arith.addf %49, %54 : vector<8x256xf32>
    %c0_8 = arith.constant 0 : index
    %c0_9 = arith.constant 0 : index
    %c0_10 = arith.constant 0 : index
    %56 = vector.load %arg3[%c0_8, %c0_9, %c0_10] : memref<1x8x256xf32, #tpu.memory_space<vmem>>, vector<1x8x256xf32>
    %57 = vector.shape_cast %56 : vector<1x8x256xf32> to vector<8x256xf32>
    %58 = arith.addf %57, %55 : vector<8x256xf32>
    %c0_11 = arith.constant 0 : index
    %c0_12 = arith.constant 0 : index
    %59 = vector.load %arg7[%c0_11, %c0_12] : memref<72x8xf32, #tpu.memory_space<vmem>>, vector<72x8xf32>
    %cst_13 = arith.constant dense<0.000000e+00> : vector<72x256xf32>
    %60 = tpu.matmul %59, %58, %cst_13 {dimension_numbers = #tpu.dot_dimension_numbers<[1], [0], [0], [1], [0, 0, 1, 1], [], []>, precision = #tpu.contract_precision<fp32>} : vector<72x8xf32>, vector<8x256xf32>, vector<72x256xf32> -> vector<72x256xf32>
    %61 = vector.extract_strided_slice %60 {offsets = [32, 0], sizes = [8, 256], strides = [1, 1]} : vector<72x256xf32> to vector<8x256xf32>
    %62 = vector.extract_strided_slice %60 {offsets = [0, 0], sizes = [8, 256], strides = [1, 1]} : vector<72x256xf32> to vector<8x256xf32>
    %c17_i32_14 = arith.constant 17 : i32
    %63 = tpu.dynamic_rotate %62 by %c17_i32_14 dim 1 : vector<8x256xf32>, i32 -> vector<8x256xf32>
    %64 = vector.extract_strided_slice %0 {offsets = [0, 0], sizes = [1, 256], strides = [1, 1]} : vector<9x256xf32> to vector<1x256xf32>
    %65 = vector.broadcast %64 : vector<1x256xf32> to vector<8x256xf32>
    %66 = arith.mulf %63, %65 : vector<8x256xf32>
    %67 = arith.addf %61, %66 : vector<8x256xf32>
    %68 = vector.extract_strided_slice %60 {offsets = [8, 0], sizes = [8, 256], strides = [1, 1]} : vector<72x256xf32> to vector<8x256xf32>
    %c16_i32_15 = arith.constant 16 : i32
    %69 = tpu.dynamic_rotate %68 by %c16_i32_15 dim 1 : vector<8x256xf32>, i32 -> vector<8x256xf32>
    %70 = vector.extract_strided_slice %0 {offsets = [1, 0], sizes = [1, 256], strides = [1, 1]} : vector<9x256xf32> to vector<1x256xf32>
    %71 = vector.broadcast %70 : vector<1x256xf32> to vector<8x256xf32>
    %72 = arith.mulf %69, %71 : vector<8x256xf32>
    %73 = arith.addf %67, %72 : vector<8x256xf32>
    %74 = vector.extract_strided_slice %60 {offsets = [16, 0], sizes = [8, 256], strides = [1, 1]} : vector<72x256xf32> to vector<8x256xf32>
    %c15_i32_16 = arith.constant 15 : i32
    %75 = tpu.dynamic_rotate %74 by %c15_i32_16 dim 1 : vector<8x256xf32>, i32 -> vector<8x256xf32>
    %76 = vector.extract_strided_slice %0 {offsets = [2, 0], sizes = [1, 256], strides = [1, 1]} : vector<9x256xf32> to vector<1x256xf32>
    %77 = vector.broadcast %76 : vector<1x256xf32> to vector<8x256xf32>
    %78 = arith.mulf %75, %77 : vector<8x256xf32>
    %79 = arith.addf %73, %78 : vector<8x256xf32>
    %80 = vector.extract_strided_slice %60 {offsets = [24, 0], sizes = [8, 256], strides = [1, 1]} : vector<72x256xf32> to vector<8x256xf32>
    %c1_i32_17 = arith.constant 1 : i32
    %81 = tpu.dynamic_rotate %80 by %c1_i32_17 dim 1 : vector<8x256xf32>, i32 -> vector<8x256xf32>
    %82 = vector.extract_strided_slice %0 {offsets = [3, 0], sizes = [1, 256], strides = [1, 1]} : vector<9x256xf32> to vector<1x256xf32>
    %83 = vector.broadcast %82 : vector<1x256xf32> to vector<8x256xf32>
    %84 = arith.mulf %81, %83 : vector<8x256xf32>
    %85 = arith.addf %79, %84 : vector<8x256xf32>
    %86 = vector.extract_strided_slice %60 {offsets = [40, 0], sizes = [8, 256], strides = [1, 1]} : vector<72x256xf32> to vector<8x256xf32>
    %c255_i32_18 = arith.constant 255 : i32
    %87 = tpu.dynamic_rotate %86 by %c255_i32_18 dim 1 : vector<8x256xf32>, i32 -> vector<8x256xf32>
    %88 = vector.extract_strided_slice %0 {offsets = [5, 0], sizes = [1, 256], strides = [1, 1]} : vector<9x256xf32> to vector<1x256xf32>
    %89 = vector.broadcast %88 : vector<1x256xf32> to vector<8x256xf32>
    %90 = arith.mulf %87, %89 : vector<8x256xf32>
    %91 = arith.addf %85, %90 : vector<8x256xf32>
    %92 = vector.extract_strided_slice %60 {offsets = [48, 0], sizes = [8, 256], strides = [1, 1]} : vector<72x256xf32> to vector<8x256xf32>
    %c241_i32_19 = arith.constant 241 : i32
    %93 = tpu.dynamic_rotate %92 by %c241_i32_19 dim 1 : vector<8x256xf32>, i32 -> vector<8x256xf32>
    %94 = vector.extract_strided_slice %0 {offsets = [6, 0], sizes = [1, 256], strides = [1, 1]} : vector<9x256xf32> to vector<1x256xf32>
    %95 = vector.broadcast %94 : vector<1x256xf32> to vector<8x256xf32>
    %96 = arith.mulf %93, %95 : vector<8x256xf32>
    %97 = arith.addf %91, %96 : vector<8x256xf32>
    %98 = vector.extract_strided_slice %60 {offsets = [56, 0], sizes = [8, 256], strides = [1, 1]} : vector<72x256xf32> to vector<8x256xf32>
    %c240_i32_20 = arith.constant 240 : i32
    %99 = tpu.dynamic_rotate %98 by %c240_i32_20 dim 1 : vector<8x256xf32>, i32 -> vector<8x256xf32>
    %100 = vector.extract_strided_slice %0 {offsets = [7, 0], sizes = [1, 256], strides = [1, 1]} : vector<9x256xf32> to vector<1x256xf32>
    %101 = vector.broadcast %100 : vector<1x256xf32> to vector<8x256xf32>
    %102 = arith.mulf %99, %101 : vector<8x256xf32>
    %103 = arith.addf %97, %102 : vector<8x256xf32>
    %104 = vector.extract_strided_slice %60 {offsets = [64, 0], sizes = [8, 256], strides = [1, 1]} : vector<72x256xf32> to vector<8x256xf32>
    %c239_i32_21 = arith.constant 239 : i32
    %105 = tpu.dynamic_rotate %104 by %c239_i32_21 dim 1 : vector<8x256xf32>, i32 -> vector<8x256xf32>
    %106 = vector.extract_strided_slice %0 {offsets = [8, 0], sizes = [1, 256], strides = [1, 1]} : vector<9x256xf32> to vector<1x256xf32>
    %107 = vector.broadcast %106 : vector<1x256xf32> to vector<8x256xf32>
    %108 = arith.mulf %105, %107 : vector<8x256xf32>
    %109 = arith.addf %103, %108 : vector<8x256xf32>
    %c0_22 = arith.constant 0 : index
    %c0_23 = arith.constant 0 : index
    %110 = vector.load %arg8[%c0_22, %c0_23] : memref<8x1xf32, #tpu.memory_space<vmem>>, vector<8x1xf32>
    %111 = vector.broadcast %110 : vector<8x1xf32> to vector<8x256xf32>
    %112 = arith.addf %109, %111 : vector<8x256xf32>
    %113 = arith.negf %112 : vector<8x256xf32>
    %114 = math.exp %113 : vector<8x256xf32>
    %cst_24 = arith.constant 1.000000e+00 : f32
    %115 = vector.broadcast %cst_24 : f32 to vector<8x256xf32>
    %116 = arith.addf %115, %114 : vector<8x256xf32>
    %117 = arith.divf %115, %116 : vector<8x256xf32>
    %118 = arith.mulf %112, %117 : vector<8x256xf32>
    %c0_25 = arith.constant 0 : index
    %c0_26 = arith.constant 0 : index
    %c0_27 = arith.constant 0 : index
    %119 = vector.load %arg1[%c0_25, %c0_26, %c0_27] : memref<1x8x256xf32, #tpu.memory_space<vmem>>, vector<1x8x256xf32>
    %120 = vector.shape_cast %119 : vector<1x8x256xf32> to vector<8x256xf32>
    %121 = arith.addf %118, %120 : vector<8x256xf32>
    %c0_28 = arith.constant 0 : index
    %c0_29 = arith.constant 0 : index
    %c0_30 = arith.constant 0 : index
    %122 = vector.load %arg9[%c0_28, %c0_29, %c0_30] : memref<1x8x256xf32, #tpu.memory_space<vmem>>, vector<1x8x256xf32>
    %123 = vector.shape_cast %122 : vector<1x8x256xf32> to vector<8x256xf32>
    %124 = vector.shape_cast %121 : vector<8x256xf32> to vector<1x8x256xf32>
    tpu.vector_store %arg9[%c0_28, %c0_29, %c0_30], %124 {strides = array<i32>} : memref<1x8x256xf32, #tpu.memory_space<vmem>>, vector<1x8x256xf32>,
    return
  }
  func.func @transform_0(%arg0: i32) -> (i32, i32, i32) {
    %c0_i32 = arith.constant 0 : i32
    %c0_i32_0 = arith.constant 0 : i32
    %c0_i32_1 = arith.constant 0 : i32
    return %arg0, %c0_i32, %c0_i32_0 : i32, i32, i32
  }
  func.func @transform_1(%arg0: i32) -> (i32, i32, i32) {
    %c0_i32 = arith.constant 0 : i32
    %c0_i32_0 = arith.constant 0 : i32
    %c0_i32_1 = arith.constant 0 : i32
    return %arg0, %c0_i32, %c0_i32_0 : i32, i32, i32
  }
  func.func @transform_2(%arg0: i32) -> (i32, i32, i32) {
    %c0_i32 = arith.constant 0 : i32
    %c0_i32_0 = arith.constant 0 : i32
    %c0_i32_1 = arith.constant 0 : i32
    return %arg0, %c0_i32, %c0_i32_0 : i32, i32, i32
  }
  func.func @transform_3(%arg0: i32) -> (i32, i32) {
    %c0_i32 = arith.constant 0 : i32
    %c0_i32_0 = arith.constant 0 : i32
    %c0_i32_1 = arith.constant 0 : i32
    return %c0_i32, %c0_i32_0 : i32, i32
  }
  func.func @transform_4(%arg0: i32) -> (i32, i32) {
    %c0_i32 = arith.constant 0 : i32
    %c0_i32_0 = arith.constant 0 : i32
    %c0_i32_1 = arith.constant 0 : i32
    return %c0_i32, %c0_i32_0 : i32, i32
  }
  func.func @transform_5(%arg0: i32) -> (i32, i32) {
    %c0_i32 = arith.constant 0 : i32
    %c0_i32_0 = arith.constant 0 : i32
    %c0_i32_1 = arith.constant 0 : i32
    return %c0_i32, %c0_i32_0 : i32, i32
  }
  func.func @transform_6(%arg0: i32) -> (i32, i32) {
    %c0_i32 = arith.constant 0 : i32
    %c0_i32_0 = arith.constant 0 : i32
    %c0_i32_1 = arith.constant 0 : i32
    return %c0_i32, %c0_i32_0 : i32, i32
  }
  func.func @transform_7(%arg0: i32) -> (i32, i32) {
    %c0_i32 = arith.constant 0 : i32
    %c0_i32_0 = arith.constant 0 : i32
    %c0_i32_1 = arith.constant 0 : i32
    return %c0_i32, %c0_i32_0 : i32, i32
  }
  func.func @transform_8(%arg0: i32) -> (i32, i32, i32) {
    %c0_i32 = arith.constant 0 : i32
    %c0_i32_0 = arith.constant 0 : i32
    %c0_i32_1 = arith.constant 0 : i32
    return %arg0, %c0_i32, %c0_i32_0 : i32, i32, i32
  }
}

</mosaic_0001>

<llo_original>
// kernel: _lambda_.2
$region0: #{_lambda_.2}
  #allocation0 [shape = 'u32[]', space=smem, size = 0x4, offset = 0x4, fixed_abs, tag = 'smem constant byte address 0x4 - core index']
  #allocation1 [shape = 'u32[72,128]{1,0:T(1,128)}', space=vmem, size = 0x9000, scoped, tag = 'internal scratch']
  %s0 = inlined_call_operand.vmem [shape: f32[2,8,256], index: 0, kind: input, shape index: {}]
  %s1 = inlined_call_operand.hbm [shape: f32[9,256], index: 1, kind: input, shape index: {}]
  %s2 = inlined_call_operand.vmem [shape: f32[24,8], index: 2, kind: input, shape index: {}]
  %s3 = inlined_call_operand.vmem [shape: f32[24,9], index: 3, kind: input, shape index: {}]
  %s4 = inlined_call_operand.hbm [shape: f32[8,8], index: 4, kind: input, shape index: {}]
  %s5 = inlined_call_operand.vmem [shape: f32[8,1], index: 5, kind: input, shape index: {}]
  %s6 = inlined_call_operand.hbm [shape: f32[8,8], index: 6, kind: input, shape index: {}]
  %s7 = inlined_call_operand.vmem [shape: f32[2,24,256], index: 7, kind: output, shape index: {0}]
  %s8 = inlined_call_operand.vmem [shape: f32[2,8,256], index: 8, kind: output, shape index: {1}]
  %9 = xla_tuple %s7, %s8
  %s10 = sld [smem:[#allocation0]]
  $region81: #{_lambda_.2} parent=0
    _
  %s12 = ssub.s32 1, %s10
  %s13 = scalar_select 0, %s12, %s10
  $region1: #{_lambda_.2} parent=0
    #allocation2 [shape = 'u8[16384]{0}', space=vmem, size = 0x4000, scoped, tag = 'input window, operand 1, single buffered']
    #allocation3 [shape = 's32[2]{0}', space=sflag, size = 0x8, scoped, tag = 'scoped memory for _lambda_.2']
    #allocation4 [shape = 'u8[4096]{0}', space=vmem, size = 0x1000, scoped, tag = 'input window, operand 4, single buffered']
    #allocation5 [shape = 's32[1]{0}', space=sflag, size = 0x4, scoped, tag = 'scoped memory for _lambda_.2']
    #allocation6 [shape = 'u8[4096]{0}', space=vmem, size = 0x1000, scoped, tag = 'input window, operand 6, single buffered']
    %14 = vsyncpa [#allocation3], 0
    %15 = vsyncpa [#allocation5], 0
    loop: start=0, step=1, limit=4
    $region2: #{_lambda_.2} parent=1 // loop_pre_header
      _
    $region3: #{_lambda_.2} parent=1 // loop_header
      %s17 = sphi 0, %s21
      %p18 = scmp.ge.s32.totalorder %s17, 4
      %s27 = sphi 0, %s29
      %s30 = sphi 0, %s27
      %s31 = sphi 0, %s30
      %s47 = sphi 0, %s31
      %s51 = sphi 0, %s51
      %s53 = sphi 0, %s51
      %s54 = sphi 0, %s53
      %s68 = sphi 0, %s54
      %s72 = sphi 0, %s72
      %s74 = sphi 0, %s72
      %s75 = sphi 0, %s74
      %s89 = sphi 0, %s75
      %s93 = sphi 0, %s93
      %s95 = sphi 0, %s93
      %s96 = sphi 0, %s95
      %s110 = sphi 0, %s96
      %s114 = sphi 0, %s114
      %s116 = sphi 0, %s114
      %s117 = sphi 0, %s116
      %s131 = sphi 0, %s117
      %s135 = sphi 0, %s135
      %s137 = sphi 0, %s135
      %s138 = sphi 0, %s137
      %s152 = sphi 0, %s138
      %s156 = sphi 0, %s156
      %s158 = sphi 0, %s156
      %s159 = sphi 0, %s158
      %s173 = sphi 0, %s159
      %s179 = sphi 0, %s181
      %s182 = sphi 0, %s179
      %s183 = sphi 0, %s182
      %s199 = sphi 0, %s183
      %s205 = sphi 0, %s207
      %s208 = sphi 0, %s205
      %s209 = sphi 0, %s208
      %s225 = sphi 0, %s209
    $region4: #{_lambda_.2} parent=1 // loop_header_branch
      %20 = sbr.rel (%p18) target = $region8
    $region5: #{_lambda_.2} parent=1 // loop_body
      %s22 = ssub.s32 %s17, 1
      %s23 = ssub.s32 %s17, 2
      %s24 = sadd.s32 %s17, 1
      %s25 = ssub.s32 %s17, %s24
      %p26 = scmp.eq.s32.totalorder %s25, 0
      %s28 = sadd.s32 %s27, 1
      %s29 = scalar_select %p26, %s27, %s28
      %p32 = pneg %p26
      %p33 = scmp.eq.s32.totalorder %s17, 1
      %p34 = por %p32, %p33
      %p35 = scmp.ne.s32.totalorder %s27, %s30
      %p36 = scmp.eq.s32.totalorder %s17, 0
      %p37 = por %p35, %p36
      %p38 = scmp.ne.s32.totalorder %s27, %s30
      %p39 = scmp.eq.s32.totalorder %s22, 1
      %p40 = por %p38, %p39
      %p41 = scmp.ne.s32.totalorder %s30, %s31
      %p42 = scmp.eq.s32.totalorder %s22, 0
      %p43 = por %p41, %p42
      %p44 = scmp.ne.s32.totalorder %s30, %s31
      %p45 = scmp.eq.s32.totalorder %s23, 1
      %p46 = por %p44, %p45
      %p48 = scmp.ne.s32.totalorder %s31, %s47
      %p49 = scmp.eq.s32.totalorder %s23, 0
      %p50 = por %p48, %p49
      %s52 = sadd.s32 %s51, 1
      %p55 = scmp.eq.s32.totalorder %s17, 1
      %p56 = scmp.ne.s32.totalorder %s51, %s53
      %p57 = scmp.eq.s32.totalorder %s17, 0
      %p58 = por %p56, %p57
      %p59 = scmp.ne.s32.totalorder %s51, %s53
      %p60 = scmp.eq.s32.totalorder %s22, 1
      %p61 = por %p59, %p60
      %p62 = scmp.ne.s32.totalorder %s53, %s54
      %p63 = scmp.eq.s32.totalorder %s22, 0
      %p64 = por %p62, %p63
      %p65 = scmp.ne.s32.totalorder %s53, %s54
      %p66 = scmp.eq.s32.totalorder %s23, 1
      %p67 = por %p65, %p66
      %p69 = scmp.ne.s32.totalorder %s54, %s68
      %p70 = scmp.eq.s32.totalorder %s23, 0
      %p71 = por %p69, %p70
      %s73 = sadd.s32 %s72, 1
      %p76 = scmp.eq.s32.totalorder %s17, 1
      %p77 = scmp.ne.s32.totalorder %s72, %s74
      %p78 = scmp.eq.s32.totalorder %s17, 0
      %p79 = por %p77, %p78
      %p80 = scmp.ne.s32.totalorder %s72, %s74
      %p81 = scmp.eq.s32.totalorder %s22, 1
      %p82 = por %p80, %p81
      %p83 = scmp.ne.s32.totalorder %s74, %s75
      %p84 = scmp.eq.s32.totalorder %s22, 0
      %p85 = por %p83, %p84
      %p86 = scmp.ne.s32.totalorder %s74, %s75
      %p87 = scmp.eq.s32.totalorder %s23, 1
      %p88 = por %p86, %p87
      %p90 = scmp.ne.s32.totalorder %s75, %s89
      %p91 = scmp.eq.s32.totalorder %s23, 0
      %p92 = por %p90, %p91
      %s94 = sadd.s32 %s93, 1
      %p97 = scmp.eq.s32.totalorder %s17, 1
      %p98 = scmp.ne.s32.totalorder %s93, %s95
      %p99 = scmp.eq.s32.totalorder %s17, 0
      %p100 = por %p98, %p99
      %p101 = scmp.ne.s32.totalorder %s93, %s95
      %p102 = scmp.eq.s32.totalorder %s22, 1
      %p103 = por %p101, %p102
      %p104 = scmp.ne.s32.totalorder %s95, %s96
      %p105 = scmp.eq.s32.totalorder %s22, 0
      %p106 = por %p104, %p105
      %p107 = scmp.ne.s32.totalorder %s95, %s96
      %p108 = scmp.eq.s32.totalorder %s23, 1
      %p109 = por %p107, %p108
      %p111 = scmp.ne.s32.totalorder %s96, %s110
      %p112 = scmp.eq.s32.totalorder %s23, 0
      %p113 = por %p111, %p112
      %s115 = sadd.s32 %s114, 1
      %p118 = scmp.eq.s32.totalorder %s17, 1
      %p119 = scmp.ne.s32.totalorder %s114, %s116
      %p120 = scmp.eq.s32.totalorder %s17, 0
      %p121 = por %p119, %p120
      %p122 = scmp.ne.s32.totalorder %s114, %s116
      %p123 = scmp.eq.s32.totalorder %s22, 1
      %p124 = por %p122, %p123
      %p125 = scmp.ne.s32.totalorder %s116, %s117
      %p126 = scmp.eq.s32.totalorder %s22, 0
      %p127 = por %p125, %p126
      %p128 = scmp.ne.s32.totalorder %s116, %s117
      %p129 = scmp.eq.s32.totalorder %s23, 1
      %p130 = por %p128, %p129
      %p132 = scmp.ne.s32.totalorder %s117, %s131
      %p133 = scmp.eq.s32.totalorder %s23, 0
      %p134 = por %p132, %p133
      %s136 = sadd.s32 %s135, 1
      %p139 = scmp.eq.s32.totalorder %s17, 1
      %p140 = scmp.ne.s32.totalorder %s135, %s137
      %p141 = scmp.eq.s32.totalorder %s17, 0
      %p142 = por %p140, %p141
      %p143 = scmp.ne.s32.totalorder %s135, %s137
      %p144 = scmp.eq.s32.totalorder %s22, 1
      %p145 = por %p143, %p144
      %p146 = scmp.ne.s32.totalorder %s137, %s138
      %p147 = scmp.eq.s32.totalorder %s22, 0
      %p148 = por %p146, %p147
      %p149 = scmp.ne.s32.totalorder %s137, %s138
      %p150 = scmp.eq.s32.totalorder %s23, 1
      %p151 = por %p149, %p150
      %p153 = scmp.ne.s32.totalorder %s138, %s152
      %p154 = scmp.eq.s32.totalorder %s23, 0
      %p155 = por %p153, %p154
      %s157 = sadd.s32 %s156, 1
      %p160 = scmp.eq.s32.totalorder %s17, 1
      %p161 = scmp.ne.s32.totalorder %s156, %s158
      %p162 = scmp.eq.s32.totalorder %s17, 0
      %p163 = por %p161, %p162
      %p164 = scmp.ne.s32.totalorder %s156, %s158
      %p165 = scmp.eq.s32.totalorder %s22, 1
      %p166 = por %p164, %p165
      %p167 = scmp.ne.s32.totalorder %s158, %s159
      %p168 = scmp.eq.s32.totalorder %s22, 0
      %p169 = por %p167, %p168
      %p170 = scmp.ne.s32.totalorder %s158, %s159
      %p171 = scmp.eq.s32.totalorder %s23, 1
      %p172 = por %p170, %p171
      %p174 = scmp.ne.s32.totalorder %s159, %s173
      %p175 = scmp.eq.s32.totalorder %s23, 0
      %p176 = por %p174, %p175
      %s177 = ssub.s32 %s17, %s24
      %p178 = scmp.eq.s32.totalorder %s177, 0
      %s180 = sadd.s32 %s179, 1
      %s181 = scalar_select %p178, %s179, %s180
      %p184 = pneg %p178
      %p185 = scmp.eq.s32.totalorder %s17, 1
      %p186 = por %p184, %p185
      %p187 = scmp.ne.s32.totalorder %s179, %s182
      %p188 = scmp.eq.s32.totalorder %s17, 0
      %p189 = por %p187, %p188
      %p190 = scmp.ne.s32.totalorder %s179, %s182
      %p191 = scmp.eq.s32.totalorder %s22, 1
      %p192 = por %p190, %p191
      %p193 = scmp.ne.s32.totalorder %s182, %s183
      %p194 = scmp.eq.s32.totalorder %s22, 0
      %p195 = por %p193, %p194
      %p196 = scmp.ne.s32.totalorder %s182, %s183
      %p197 = scmp.eq.s32.totalorder %s23, 1
      %p198 = por %p196, %p197
      %p200 = scmp.ne.s32.totalorder %s183, %s199
      %p201 = scmp.eq.s32.totalorder %s23, 0
      %p202 = por %p200, %p201
      %s203 = ssub.s32 %s17, %s24
      %p204 = scmp.eq.s32.totalorder %s203, 0
      %s206 = sadd.s32 %s205, 1
      %s207 = scalar_select %p204, %s205, %s206
      %p210 = pneg %p204
      %p211 = scmp.eq.s32.totalorder %s17, 1
      %p212 = por %p210, %p211
      %p213 = scmp.ne.s32.totalorder %s205, %s208
      %p214 = scmp.eq.s32.totalorder %s17, 0
      %p215 = por %p213, %p214
      %p216 = scmp.ne.s32.totalorder %s205, %s208
      %p217 = scmp.eq.s32.totalorder %s22, 1
      %p218 = por %p216, %p217
      %p219 = scmp.ne.s32.totalorder %s208, %s209
      %p220 = scmp.eq.s32.totalorder %s22, 0
      %p221 = por %p219, %p220
      %p222 = scmp.ne.s32.totalorder %s208, %s209
      %p223 = scmp.eq.s32.totalorder %s23, 1
      %p224 = por %p222, %p223
      %p226 = scmp.ne.s32.totalorder %s209, %s225
      %p227 = scmp.eq.s32.totalorder %s23, 0
      %p228 = por %p226, %p227
      %p229 = scmp.le.s32.totalorder 1, %s17
      %p230 = scmp.lt.s32.totalorder %s17, 3
      %p231 = pnand %p229, %p230
      %p232 = pneg %p231
      // Predicated region
      $region9: #{_lambda_.2} parent=5 // pred_check
        _
      $region10: #{_lambda_.2} parent=5 // pred_check_branch
        %234 = sbr.rel (%p231) target = $region12
      $region11: #{_lambda_.2} parent=5 // pred_region
        %s235 = ssub.s32 %s17, 1
        // Predicated region
        $region13: #{_lambda_.2} parent=11 // pred_check
          %p236 = pneg %p64
        $region14: #{_lambda_.2} parent=11 // pred_check_branch
          %238 = sbr.rel (%p236) target = $region16
        $region15: #{_lambda_.2} parent=11 // pred_region
          %240 = vsyncadd [#allocation3], 0
          %s241 = sshll.u32 %s1, 4
          %s242 = int_to_ptr.hbm [resolvable:$true] %s241
          %s243 = sshll.u32 [#allocation2], 4
          %s244 = int_to_ptr.vmem [resolvable:$true] %s243
          %249 = dma.hbm_to_vmem [thread:$0]  %s242, 512, %s244, [#allocation3], 256, 256, 16
        $region16: #{_lambda_.2} parent=11 // pred_fallthru
          _
        // Predicated region
        $region17: #{_lambda_.2} parent=11 // pred_check
          %p250 = pneg %p85
        $region18: #{_lambda_.2} parent=11 // pred_check_branch
          %252 = sbr.rel (%p250) target = $region20
        $region19: #{_lambda_.2} parent=11 // pred_region
          _
        $region20: #{_lambda_.2} parent=11 // pred_fallthru
          _
        // Predicated region
        $region21: #{_lambda_.2} parent=11 // pred_check
          %p253 = pneg %p106
        $region22: #{_lambda_.2} parent=11 // pred_check_branch
          %255 = sbr.rel (%p253) target = $region24
        $region23: #{_lambda_.2} parent=11 // pred_region
          _
        $region24: #{_lambda_.2} parent=11 // pred_fallthru
          _
        // Predicated region
        $region25: #{_lambda_.2} parent=11 // pred_check
          %p256 = pneg %p127
        $region26: #{_lambda_.2} parent=11 // pred_check_branch
          %258 = sbr.rel (%p256) target = $region28
        $region27: #{_lambda_.2} parent=11 // pred_region
          %260 = vsyncadd [#allocation5], 0
          %s262 = sshll.u32 %s4, 4
          %s263 = int_to_ptr.hbm [resolvable:$true] %s262
          %s264 = sshll.u32 [#allocation4], 4
          %s265 = int_to_ptr.vmem [resolvable:$true] %s264
          %267 = dma.hbm_to_vmem [thread:$0]  %s263, 128, %s265, [#allocation5]
        $region28: #{_lambda_.2} parent=11 // pred_fallthru
          _
        // Predicated region
        $region29: #{_lambda_.2} parent=11 // pred_check
          %p268 = pneg %p148
        $region30: #{_lambda_.2} parent=11 // pred_check_branch
          %270 = sbr.rel (%p268) target = $region32
        $region31: #{_lambda_.2} parent=11 // pred_region
          _
        $region32: #{_lambda_.2} parent=11 // pred_fallthru
          _
        // Predicated region
        $region33: #{_lambda_.2} parent=11 // pred_check
          %p271 = pneg %p169
        $region34: #{_lambda_.2} parent=11 // pred_check_branch
          %273 = sbr.rel (%p271) target = $region36
        $region35: #{_lambda_.2} parent=11 // pred_region
          %275 = vsyncadd [#allocation5], 0
          %s277 = sshll.u32 %s6, 4
          %s278 = int_to_ptr.hbm [resolvable:$true] %s277
          %s279 = sshll.u32 [#allocation6], 4
          %s280 = int_to_ptr.vmem [resolvable:$true] %s279
          %282 = dma.hbm_to_vmem [thread:$0]  %s278, 128, %s280, [#allocation5]
        $region36: #{_lambda_.2} parent=11 // pred_fallthru
          _
      $region12: #{_lambda_.2} parent=5 // pred_fallthru
        _
      %p283 = scmp.lt.s32.totalorder %s17, 2
      // Predicated region
      $region37: #{_lambda_.2} parent=5 // pred_check
        %p284 = pneg %p283
      $region38: #{_lambda_.2} parent=5 // pred_check_branch
        %286 = sbr.rel (%p284) target = $region40
      $region39: #{_lambda_.2} parent=5 // pred_region
        // Predicated region
        $region41: #{_lambda_.2} parent=39 // pred_check
          %p287 = pneg %p37
        $region42: #{_lambda_.2} parent=39 // pred_check_branch
          %289 = sbr.rel (%p287) target = $region44
        $region43: #{_lambda_.2} parent=39 // pred_region
          %p290 = scmp.lt.s32.totalorder %s17, 1
          %s291 = scalar_select %p290, %s17, 1
          %s292 = smul.addr %s291, 2
          %s293 = smul.addr %s292, 8
          %s294 = scalar_lea.vmem %s0, %s293
        $region44: #{_lambda_.2} parent=39 // pred_fallthru
          _
      $region40: #{_lambda_.2} parent=5 // pred_fallthru
        _
      %p295 = scmp.le.s32.totalorder 1, %s17
      %p296 = scmp.lt.s32.totalorder %s17, 3
      %p297 = pnand %p295, %p296
      %p298 = pneg %p297
      // Predicated region
      $region45: #{_lambda_.2} parent=5 // pred_check
        _
      $region46: #{_lambda_.2} parent=5 // pred_check_branch
        %300 = sbr.rel (%p297) target = $region48
      $region47: #{_lambda_.2} parent=5 // pred_region
        %s301 = ssub.s32 %s17, 1
        // Predicated region
        $region49: #{_lambda_.2} parent=47 // pred_check
          %p302 = pneg %p64
        $region50: #{_lambda_.2} parent=47 // pred_check_branch
          %304 = sbr.rel (%p302) target = $region52
        $region51: #{_lambda_.2} parent=47 // pred_region
          %306 = dma.done [#allocation3], 512
        $region52: #{_lambda_.2} parent=47 // pred_fallthru
          _
        // Predicated region
        $region53: #{_lambda_.2} parent=47 // pred_check
          %p307 = pneg %p127
        $region54: #{_lambda_.2} parent=47 // pred_check_branch
          %309 = sbr.rel (%p307) target = $region56
        $region55: #{_lambda_.2} parent=47 // pred_region
          %311 = dma.done [#allocation5], 128
        $region56: #{_lambda_.2} parent=47 // pred_fallthru
          _
        // Predicated region
        $region57: #{_lambda_.2} parent=47 // pred_check
          %p312 = pneg %p169
        $region58: #{_lambda_.2} parent=47 // pred_check_branch
          %314 = sbr.rel (%p312) target = $region60
        $region59: #{_lambda_.2} parent=47 // pred_region
          %316 = dma.done [#allocation5], 128
        $region60: #{_lambda_.2} parent=47 // pred_fallthru
          _
        %p317 = scmp.lt.s32.totalorder %s22, 1
        %s318 = scalar_select %p317, %s22, 1
        %s319 = smul.addr %s318, 2
        %s320 = smul.addr %s319, 8
        %s321 = scalar_lea.vmem %s0, %s320
        %p322 = pneg %p43
        %p323 = pneg %p40
        %p324 = pneg %p64
        %p325 = pneg %p61
        %p326 = pneg %p85
        %p327 = pneg %p82
        %p328 = pneg %p106
        %p329 = pneg %p103
        %p330 = pneg %p127
        %p331 = pneg %p124
        %p332 = pneg %p148
        %p333 = pneg %p145
        %p334 = pneg %p169
        %p335 = pneg %p166
        %p336 = pneg %p195
        %p337 = pneg %p192
        %p338 = scmp.lt.s32.totalorder %s22, 1
        %s339 = scalar_select %p338, %s22, 1
        %s340 = smul.addr %s339, 6
        %s341 = smul.addr %s340, 8
        %s342 = scalar_lea.vmem %s7, %s341
        %p343 = pneg %p221
        %p344 = pneg %p218
        %p345 = scmp.lt.s32.totalorder %s22, 1
        %s346 = scalar_select %p345, %s22, 1
        %s347 = smul.addr %s346, 2
        %s348 = smul.addr %s347, 8
        %s349 = scalar_lea.vmem %s8, %s348
        %p350 = scmp.lt.s32.totalorder %s22, 1
        %s351 = scalar_select %p350, %s22, 1
        %s352 = smul.addr %s351, 2
        %s353 = smul.addr %s352, 8
        %s354 = scalar_lea.vmem %s0, %s353
        %p355 = scmp.lt.s32.totalorder %s22, 1
        %s356 = scalar_select %p355, %s22, 1
        %s357 = smul.addr %s356, 6
        %s358 = smul.addr %s357, 8
        %s359 = scalar_lea.vmem %s7, %s358
        %p360 = scmp.lt.s32.totalorder %s22, 1
        %s361 = scalar_select %p360, %s22, 1
        %s362 = smul.addr %s361, 2
        %s363 = smul.addr %s362, 8
        %s364 = scalar_lea.vmem %s8, %s363
        %v365 = vld [vmem:[%s354] sm:$0xff]
        %v366 = vld [vmem:[%s354 + $0x8] sm:$0xff]
        %v367 = vld [vmem:[#allocation2] sm:$0xff]
        %v368 = vld [vmem:[#allocation2 + $0x8] sm:$0xff]
        %v369 = vld [vmem:[#allocation2 + $0x10] sm:$0x1]
        %v370 = vld [vmem:[#allocation2 + $0x18] sm:$0x1]
        %v371 = vld [vmem:[%s3] sm:$0xff]
        %v372 = vld [vmem:[%s3 + $0x8] sm:$0xff]
        %v373 = vld [vmem:[%s3 + $0x10] sm:$0xff]
        %v374 = vld [vmem:[%s2] sm:$0xff]
        %v375 = vld [vmem:[%s2 + $0x8] sm:$0xff]
        %v376 = vld [vmem:[%s2 + $0x10] sm:$0xff]
        %vm377 = vcmask 64512
        %v379 = vsel %vm377, %v374, 0
        %v382 = vsel %vm377, %v375, 0
        %v385 = vsel %vm377, %v376, 0
        %387 = vmatpush.msra.mxu0 0.0
        %388 = vmatpush.msra.mxu0 0.0
        %389 = vmatpush.msra.mxu0 0.0
        %390 = vmatpush.msra.mxu0 0.0
        %391 = vmatpush.msra.mxu0 0.0
        %392 = vmatpush.msra.mxu0 0.0
        %393 = vmatpush.msra.mxu0 0.0
        %394 = vmatpush.msra.mxu0 0.0
        %395 = vmatpush.msra.mxu0 0.0
        %396 = vmatpush.msra.mxu0 0.0
        %397 = vmatpush.msra.mxu0 0.0
        %398 = vmatpush.msra.mxu0 0.0
        %399 = vmatpush.msra.mxu0 0.0
        %400 = vmatpush.msra.mxu0 0.0
        %401 = vmatpush.msra.mxu0 0.0
        %v402 = vand.u32 %v365, 4294901760
        %403 = vmatpush.msra.mxu0 %v402
        %v404 = vand.u32 %v379, 4294901760
        %v405 = vsub.f32 %v379, %v404
        %v406 = vand.u32 %v405, 4294901760
        %v407 = vsub.f32 %v405, %v406
        %v408 = vand.u32 %v407, 4294901760
        %409 = vmatmul.f32.gmra.mxu0 %v408
        %v410 = vpop.f32.mrf.mxu0
        %v411 = vadd.f32 0.0, %v410
        %v412 = vand.u32 %v382, 4294901760
        %v413 = vsub.f32 %v382, %v412
        %v414 = vand.u32 %v413, 4294901760
        %v415 = vsub.f32 %v413, %v414
        %v416 = vand.u32 %v415, 4294901760
        %417 = vmatmul.f32.gmra.mxu0 %v416
        %v418 = vpop.f32.mrf.mxu0
        %v419 = vadd.f32 0.0, %v418
        %v420 = vand.u32 %v385, 4294901760
        %v421 = vsub.f32 %v385, %v420
        %v422 = vand.u32 %v421, 4294901760
        %v423 = vsub.f32 %v421, %v422
        %v424 = vand.u32 %v423, 4294901760
        %425 = vmatmul.f32.gmra.mxu0 %v424
        %v426 = vpop.f32.mrf.mxu0
        %v427 = vadd.f32 0.0, %v426
        %428 = vdwg.mxu0
        %429 = vmatpush.msra.mxu0 0.0
        %430 = vmatpush.msra.mxu0 0.0
        %431 = vmatpush.msra.mxu0 0.0
        %432 = vmatpush.msra.mxu0 0.0
        %433 = vmatpush.msra.mxu0 0.0
        %434 = vmatpush.msra.mxu0 0.0
        %435 = vmatpush.msra.mxu0 0.0
        %436 = vmatpush.msra.mxu0 0.0
        %437 = vmatpush.msra.mxu0 0.0
        %438 = vmatpush.msra.mxu0 0.0
        %439 = vmatpush.msra.mxu0 0.0
        %440 = vmatpush.msra.mxu0 0.0
        %441 = vmatpush.msra.mxu0 0.0
        %442 = vmatpush.msra.mxu0 0.0
        %443 = vmatpush.msra.mxu0 0.0
        %v444 = vand.u32 %v365, 4294901760
        %v445 = vsub.f32 %v365, %v444
        %v446 = vand.u32 %v445, 4294901760
        %v447 = vsub.f32 %v445, %v446
        %v448 = vand.u32 %v447, 4294901760
        %449 = vmatpush.msra.mxu0 %v448
        %v450 = vand.u32 %v379, 4294901760
        %451 = vmatmul.f32.gmra.mxu0 %v450
        %v452 = vpop.f32.mrf.mxu0
        %v453 = vadd.f32 %v411, %v452
        %v454 = vand.u32 %v382, 4294901760
        %455 = vmatmul.f32.gmra.mxu0 %v454
        %v456 = vpop.f32.mrf.mxu0
        %v457 = vadd.f32 %v419, %v456
        %v458 = vand.u32 %v385, 4294901760
        %459 = vmatmul.f32.gmra.mxu0 %v458
        %v460 = vpop.f32.mrf.mxu0
        %v461 = vadd.f32 %v427, %v460
        %462 = vdwg.mxu0
        %463 = vmatpush.msra.mxu0 0.0
        %464 = vmatpush.msra.mxu0 0.0
        %465 = vmatpush.msra.mxu0 0.0
        %466 = vmatpush.msra.mxu0 0.0
        %467 = vmatpush.msra.mxu0 0.0
        %468 = vmatpush.msra.mxu0 0.0
        %469 = vmatpush.msra.mxu0 0.0
        %470 = vmatpush.msra.mxu0 0.0
        %471 = vmatpush.msra.mxu0 0.0
        %472 = vmatpush.msra.mxu0 0.0
        %473 = vmatpush.msra.mxu0 0.0
        %474 = vmatpush.msra.mxu0 0.0
        %475 = vmatpush.msra.mxu0 0.0
        %476 = vmatpush.msra.mxu0 0.0
        %477 = vmatpush.msra.mxu0 0.0
        %v478 = vand.u32 %v365, 4294901760
        %v479 = vsub.f32 %v365, %v478
        %480 = vmatpush.msra.mxu0 %v479
        %v481 = vand.u32 %v379, 4294901760
        %v482 = vsub.f32 %v379, %v481
        %483 = vmatmul.f32.gmra.mxu0 %v482
        %v484 = vpop.f32.mrf.mxu0
        %v485 = vadd.f32 %v453, %v484
        %v486 = vand.u32 %v382, 4294901760
        %v487 = vsub.f32 %v382, %v486
        %488 = vmatmul.f32.gmra.mxu0 %v487
        %v489 = vpop.f32.mrf.mxu0
        %v490 = vadd.f32 %v457, %v489
        %v491 = vand.u32 %v385, 4294901760
        %v492 = vsub.f32 %v385, %v491
        %493 = vmatmul.f32.gmra.mxu0 %v492
        %v494 = vpop.f32.mrf.mxu0
        %v495 = vadd.f32 %v461, %v494
        %496 = vdwg.mxu0
        %497 = vmatpush.msra.mxu0 0.0
        %498 = vmatpush.msra.mxu0 0.0
        %499 = vmatpush.msra.mxu0 0.0
        %500 = vmatpush.msra.mxu0 0.0
        %501 = vmatpush.msra.mxu0 0.0
        %502 = vmatpush.msra.mxu0 0.0
        %503 = vmatpush.msra.mxu0 0.0
        %504 = vmatpush.msra.mxu0 0.0
        %505 = vmatpush.msra.mxu0 0.0
        %506 = vmatpush.msra.mxu0 0.0
        %507 = vmatpush.msra.mxu0 0.0
        %508 = vmatpush.msra.mxu0 0.0
        %509 = vmatpush.msra.mxu0 0.0
        %510 = vmatpush.msra.mxu0 0.0
        %511 = vmatpush.msra.mxu0 0.0
        %v512 = vand.u32 %v365, 4294901760
        %513 = vmatpush.msra.mxu0 %v512
        %v514 = vand.u32 %v379, 4294901760
        %v515 = vsub.f32 %v379, %v514
        %v516 = vand.u32 %v515, 4294901760
        %517 = vmatmul.f32.gmra.mxu0 %v516
        %v518 = vpop.f32.mrf.mxu0
        %v519 = vadd.f32 %v485, %v518
        %v520 = vand.u32 %v382, 4294901760
        %v521 = vsub.f32 %v382, %v520
        %v522 = vand.u32 %v521, 4294901760
        %523 = vmatmul.f32.gmra.mxu0 %v522
        %v524 = vpop.f32.mrf.mxu0
        %v525 = vadd.f32 %v490, %v524
        %v526 = vand.u32 %v385, 4294901760
        %v527 = vsub.f32 %v385, %v526
        %v528 = vand.u32 %v527, 4294901760
        %529 = vmatmul.f32.gmra.mxu0 %v528
        %v530 = vpop.f32.mrf.mxu0
        %v531 = vadd.f32 %v495, %v530
        %532 = vdwg.mxu0
        %533 = vmatpush.msra.mxu0 0.0
        %534 = vmatpush.msra.mxu0 0.0
        %535 = vmatpush.msra.mxu0 0.0
        %536 = vmatpush.msra.mxu0 0.0
        %537 = vmatpush.msra.mxu0 0.0
        %538 = vmatpush.msra.mxu0 0.0
        %539 = vmatpush.msra.mxu0 0.0
        %540 = vmatpush.msra.mxu0 0.0
        %541 = vmatpush.msra.mxu0 0.0
        %542 = vmatpush.msra.mxu0 0.0
        %543 = vmatpush.msra.mxu0 0.0
        %544 = vmatpush.msra.mxu0 0.0
        %545 = vmatpush.msra.mxu0 0.0
        %546 = vmatpush.msra.mxu0 0.0
        %547 = vmatpush.msra.mxu0 0.0
        %v548 = vand.u32 %v365, 4294901760
        %v549 = vsub.f32 %v365, %v548
        %v550 = vand.u32 %v549, 4294901760
        %551 = vmatpush.msra.mxu0 %v550
        %v552 = vand.u32 %v379, 4294901760
        %553 = vmatmul.f32.gmra.mxu0 %v552
        %v554 = vpop.f32.mrf.mxu0
        %v555 = vadd.f32 %v519, %v554
        %v556 = vand.u32 %v382, 4294901760
        %557 = vmatmul.f32.gmra.mxu0 %v556
        %v558 = vpop.f32.mrf.mxu0
        %v559 = vadd.f32 %v525, %v558
        %v560 = vand.u32 %v385, 4294901760
        %561 = vmatmul.f32.gmra.mxu0 %v560
        %v562 = vpop.f32.mrf.mxu0
        %v563 = vadd.f32 %v531, %v562
        %564 = vdwg.mxu0
        %565 = vmatpush.msra.mxu0 0.0
        %566 = vmatpush.msra.mxu0 0.0
        %567 = vmatpush.msra.mxu0 0.0
        %568 = vmatpush.msra.mxu0 0.0
        %569 = vmatpush.msra.mxu0 0.0
        %570 = vmatpush.msra.mxu0 0.0
        %571 = vmatpush.msra.mxu0 0.0
        %572 = vmatpush.msra.mxu0 0.0
        %573 = vmatpush.msra.mxu0 0.0
        %574 = vmatpush.msra.mxu0 0.0
        %575 = vmatpush.msra.mxu0 0.0
        %576 = vmatpush.msra.mxu0 0.0
        %577 = vmatpush.msra.mxu0 0.0
        %578 = vmatpush.msra.mxu0 0.0
        %579 = vmatpush.msra.mxu0 0.0
        %v580 = vand.u32 %v365, 4294901760
        %581 = vmatpush.msra.mxu0 %v580
        %v582 = vand.u32 %v379, 4294901760
        %583 = vmatmul.f32.gmra.mxu0 %v582
        %v584 = vpop.f32.mrf.mxu0
        %v585 = vadd.f32 %v555, %v584
        %v586 = vand.u32 %v382, 4294901760
        %587 = vmatmul.f32.gmra.mxu0 %v586
        %v588 = vpop.f32.mrf.mxu0
        %v589 = vadd.f32 %v559, %v588
        %v590 = vand.u32 %v385, 4294901760
        %591 = vmatmul.f32.gmra.mxu0 %v590
        %v592 = vpop.f32.mrf.mxu0
        %v593 = vadd.f32 %v563, %v592
        %594 = vdwg.mxu0
        %595 = vmatpush.msra.mxu0 0.0
        %596 = vmatpush.msra.mxu0 0.0
        %597 = vmatpush.msra.mxu0 0.0
        %598 = vmatpush.msra.mxu0 0.0
        %599 = vmatpush.msra.mxu0 0.0
        %600 = vmatpush.msra.mxu0 0.0
        %601 = vmatpush.msra.mxu0 0.0
        %602 = vmatpush.msra.mxu0 0.0
        %603 = vmatpush.msra.mxu0 0.0
        %604 = vmatpush.msra.mxu0 0.0
        %605 = vmatpush.msra.mxu0 0.0
        %606 = vmatpush.msra.mxu0 0.0
        %607 = vmatpush.msra.mxu0 0.0
        %608 = vmatpush.msra.mxu0 0.0
        %609 = vmatpush.msra.mxu0 0.0
        %v610 = vand.u32 %v366, 4294901760
        %611 = vmatpush.msra.mxu0 %v610
        %v612 = vand.u32 %v379, 4294901760
        %v613 = vsub.f32 %v379, %v612
        %v614 = vand.u32 %v613, 4294901760
        %v615 = vsub.f32 %v613, %v614
        %v616 = vand.u32 %v615, 4294901760
        %617 = vmatmul.f32.gmra.mxu0 %v616
        %v618 = vpop.f32.mrf.mxu0
        %v619 = vadd.f32 0.0, %v618
        %v620 = vand.u32 %v382, 4294901760
        %v621 = vsub.f32 %v382, %v620
        %v622 = vand.u32 %v621, 4294901760
        %v623 = vsub.f32 %v621, %v622
        %v624 = vand.u32 %v623, 4294901760
        %625 = vmatmul.f32.gmra.mxu0 %v624
        %v626 = vpop.f32.mrf.mxu0
        %v627 = vadd.f32 0.0, %v626
        %v628 = vand.u32 %v385, 4294901760
        %v629 = vsub.f32 %v385, %v628
        %v630 = vand.u32 %v629, 4294901760
        %v631 = vsub.f32 %v629, %v630
        %v632 = vand.u32 %v631, 4294901760
        %633 = vmatmul.f32.gmra.mxu0 %v632
        %v634 = vpop.f32.mrf.mxu0
        %v635 = vadd.f32 0.0, %v634
        %636 = vdwg.mxu0
        %637 = vmatpush.msra.mxu0 0.0
        %638 = vmatpush.msra.mxu0 0.0
        %639 = vmatpush.msra.mxu0 0.0
        %640 = vmatpush.msra.mxu0 0.0
        %641 = vmatpush.msra.mxu0 0.0
        %642 = vmatpush.msra.mxu0 0.0
        %643 = vmatpush.msra.mxu0 0.0
        %644 = vmatpush.msra.mxu0 0.0
        %645 = vmatpush.msra.mxu0 0.0
        %646 = vmatpush.msra.mxu0 0.0
        %647 = vmatpush.msra.mxu0 0.0
        %648 = vmatpush.msra.mxu0 0.0
        %649 = vmatpush.msra.mxu0 0.0
        %650 = vmatpush.msra.mxu0 0.0
        %651 = vmatpush.msra.mxu0 0.0
        %v652 = vand.u32 %v366, 4294901760
        %v653 = vsub.f32 %v366, %v652
        %v654 = vand.u32 %v653, 4294901760
        %v655 = vsub.f32 %v653, %v654
        %v656 = vand.u32 %v655, 4294901760
        %657 = vmatpush.msra.mxu0 %v656
        %v658 = vand.u32 %v379, 4294901760
        %659 = vmatmul.f32.gmra.mxu0 %v658
        %v660 = vpop.f32.mrf.mxu0
        %v661 = vadd.f32 %v619, %v660
        %v662 = vand.u32 %v382, 4294901760
        %663 = vmatmul.f32.gmra.mxu0 %v662
        %v664 = vpop.f32.mrf.mxu0
        %v665 = vadd.f32 %v627, %v664
        %v666 = vand.u32 %v385, 4294901760
        %667 = vmatmul.f32.gmra.mxu0 %v666
        %v668 = vpop.f32.mrf.mxu0
        %v669 = vadd.f32 %v635, %v668
        %670 = vdwg.mxu0
        %671 = vmatpush.msra.mxu0 0.0
        %672 = vmatpush.msra.mxu0 0.0
        %673 = vmatpush.msra.mxu0 0.0
        %674 = vmatpush.msra.mxu0 0.0
        %675 = vmatpush.msra.mxu0 0.0
        %676 = vmatpush.msra.mxu0 0.0
        %677 = vmatpush.msra.mxu0 0.0
        %678 = vmatpush.msra.mxu0 0.0
        %679 = vmatpush.msra.mxu0 0.0
        %680 = vmatpush.msra.mxu0 0.0
        %681 = vmatpush.msra.mxu0 0.0
        %682 = vmatpush.msra.mxu0 0.0
        %683 = vmatpush.msra.mxu0 0.0
        %684 = vmatpush.msra.mxu0 0.0
        %685 = vmatpush.msra.mxu0 0.0
        %v686 = vand.u32 %v366, 4294901760
        %v687 = vsub.f32 %v366, %v686
        %688 = vmatpush.msra.mxu0 %v687
        %v689 = vand.u32 %v379, 4294901760
        %v690 = vsub.f32 %v379, %v689
        %691 = vmatmul.f32.gmra.mxu0 %v690
        %v692 = vpop.f32.mrf.mxu0
        %v693 = vadd.f32 %v661, %v692
        %v694 = vand.u32 %v382, 4294901760
        %v695 = vsub.f32 %v382, %v694
        %696 = vmatmul.f32.gmra.mxu0 %v695
        %v697 = vpop.f32.mrf.mxu0
        %v698 = vadd.f32 %v665, %v697
        %v699 = vand.u32 %v385, 4294901760
        %v700 = vsub.f32 %v385, %v699
        %701 = vmatmul.f32.gmra.mxu0 %v700
        %v702 = vpop.f32.mrf.mxu0
        %v703 = vadd.f32 %v669, %v702
        %704 = vdwg.mxu0
        %705 = vmatpush.msra.mxu0 0.0
        %706 = vmatpush.msra.mxu0 0.0
        %707 = vmatpush.msra.mxu0 0.0
        %708 = vmatpush.msra.mxu0 0.0
        %709 = vmatpush.msra.mxu0 0.0
        %710 = vmatpush.msra.mxu0 0.0
        %711 = vmatpush.msra.mxu0 0.0
        %712 = vmatpush.msra.mxu0 0.0
        %713 = vmatpush.msra.mxu0 0.0
        %714 = vmatpush.msra.mxu0 0.0
        %715 = vmatpush.msra.mxu0 0.0
        %716 = vmatpush.msra.mxu0 0.0
        %717 = vmatpush.msra.mxu0 0.0
        %718 = vmatpush.msra.mxu0 0.0
        %719 = vmatpush.msra.mxu0 0.0
        %v720 = vand.u32 %v366, 4294901760
        %721 = vmatpush.msra.mxu0 %v720
        %v722 = vand.u32 %v379, 4294901760
        %v723 = vsub.f32 %v379, %v722
        %v724 = vand.u32 %v723, 4294901760
        %725 = vmatmul.f32.gmra.mxu0 %v724
        %v726 = vpop.f32.mrf.mxu0
        %v727 = vadd.f32 %v693, %v726
        %v728 = vand.u32 %v382, 4294901760
        %v729 = vsub.f32 %v382, %v728
        %v730 = vand.u32 %v729, 4294901760
        %731 = vmatmul.f32.gmra.mxu0 %v730
        %v732 = vpop.f32.mrf.mxu0
        %v733 = vadd.f32 %v698, %v732
        %v734 = vand.u32 %v385, 4294901760
        %v735 = vsub.f32 %v385, %v734
        %v736 = vand.u32 %v735, 4294901760
        %737 = vmatmul.f32.gmra.mxu0 %v736
        %v738 = vpop.f32.mrf.mxu0
        %v739 = vadd.f32 %v703, %v738
        %740 = vdwg.mxu0
        %741 = vmatpush.msra.mxu0 0.0
        %742 = vmatpush.msra.mxu0 0.0
        %743 = vmatpush.msra.mxu0 0.0
        %744 = vmatpush.msra.mxu0 0.0
        %745 = vmatpush.msra.mxu0 0.0
        %746 = vmatpush.msra.mxu0 0.0
        %747 = vmatpush.msra.mxu0 0.0
        %748 = vmatpush.msra.mxu0 0.0
        %749 = vmatpush.msra.mxu0 0.0
        %750 = vmatpush.msra.mxu0 0.0
        %751 = vmatpush.msra.mxu0 0.0
        %752 = vmatpush.msra.mxu0 0.0
        %753 = vmatpush.msra.mxu0 0.0
        %754 = vmatpush.msra.mxu0 0.0
        %755 = vmatpush.msra.mxu0 0.0
        %v756 = vand.u32 %v366, 4294901760
        %v757 = vsub.f32 %v366, %v756
        %v758 = vand.u32 %v757, 4294901760
        %759 = vmatpush.msra.mxu0 %v758
        %v760 = vand.u32 %v379, 4294901760
        %761 = vmatmul.f32.gmra.mxu0 %v760
        %v762 = vpop.f32.mrf.mxu0
        %v763 = vadd.f32 %v727, %v762
        %v764 = vand.u32 %v382, 4294901760
        %765 = vmatmul.f32.gmra.mxu0 %v764
        %v766 = vpop.f32.mrf.mxu0
        %v767 = vadd.f32 %v733, %v766
        %v768 = vand.u32 %v385, 4294901760
        %769 = vmatmul.f32.gmra.mxu0 %v768
        %v770 = vpop.f32.mrf.mxu0
        %v771 = vadd.f32 %v739, %v770
        %772 = vdwg.mxu0
        %773 = vmatpush.msra.mxu0 0.0
        %774 = vmatpush.msra.mxu0 0.0
        %775 = vmatpush.msra.mxu0 0.0
        %776 = vmatpush.msra.mxu0 0.0
        %777 = vmatpush.msra.mxu0 0.0
        %778 = vmatpush.msra.mxu0 0.0
        %779 = vmatpush.msra.mxu0 0.0
        %780 = vmatpush.msra.mxu0 0.0
        %781 = vmatpush.msra.mxu0 0.0
        %782 = vmatpush.msra.mxu0 0.0
        %783 = vmatpush.msra.mxu0 0.0
        %784 = vmatpush.msra.mxu0 0.0
        %785 = vmatpush.msra.mxu0 0.0
        %786 = vmatpush.msra.mxu0 0.0
        %787 = vmatpush.msra.mxu0 0.0
        %v788 = vand.u32 %v366, 4294901760
        %789 = vmatpush.msra.mxu0 %v788
        %v790 = vand.u32 %v379, 4294901760
        %791 = vmatmul.f32.gmra.mxu0 %v790
        %v792 = vpop.f32.mrf.mxu0
        %v793 = vadd.f32 %v763, %v792
        %v794 = vand.u32 %v382, 4294901760
        %795 = vmatmul.f32.gmra.mxu0 %v794
        %v796 = vpop.f32.mrf.mxu0
        %v797 = vadd.f32 %v767, %v796
        %v798 = vand.u32 %v385, 4294901760
        %799 = vmatmul.f32.gmra.mxu0 %v798
        %v800 = vpop.f32.mrf.mxu0
        %v801 = vadd.f32 %v771, %v800
        %802 = vdwg.mxu0
        %804 = vset.pattern.permute.xlu0 4
        %805 = vperm.xlu0 %804, %v371
        %v806 = vpop.permute.xlu0 %805
        %809 = vset.pattern.permute.xlu0 4
        %810 = vperm.xlu0 %809, %v372
        %v811 = vpop.permute.xlu0 %810
        %814 = vset.pattern.permute.xlu0 4
        %815 = vperm.xlu0 %814, %v373
        %v816 = vpop.permute.xlu0 %815
        %v818 = vmul.f32 %v585, %v806
        %v819 = vmul.f32 %v793, %v806
        %v820 = vmul.f32 %v589, %v811
        %v821 = vmul.f32 %v797, %v811
        %v822 = vmul.f32 %v593, %v816
        %v823 = vmul.f32 %v801, %v816
        %824 = vrot.lane.b32.xlu0 %v585, 17
        %v825 = vpop.permute.xlu0 %824
        %826 = vrot.lane.b32.xlu0 %v589, 17
        %v827 = vpop.permute.xlu0 %826
        %828 = vrot.lane.b32.xlu0 %v593, 17
        %v829 = vpop.permute.xlu0 %828
        %830 = vrot.lane.b32.xlu0 %v793, 17
        %v831 = vpop.permute.xlu0 %830
        %832 = vrot.lane.b32.xlu0 %v797, 17
        %v833 = vpop.permute.xlu0 %832
        %834 = vrot.lane.b32.xlu0 %v801, 17
        %v835 = vpop.permute.xlu0 %834
        %v836 = vlaneseq
        %v837 = vand.u32 %v836, 127
        %vm838 = vcmp.lt.s32.totalorder %v837, 17
        %v839 = vsel %vm838, %v825, %v831
        %v840 = vsel %vm838, %v827, %v833
        %v841 = vsel %vm838, %v829, %v835
        %v842 = vsel %vm838, %v831, %v825
        %v843 = vsel %vm838, %v833, %v827
        %v844 = vsel %vm838, %v835, %v829
        %v845 = vperm.slane %v367, 0
        %v846 = vperm.slane %v368, 0
        %v847 = vmul.f32 %v842, %v845
        %v848 = vmul.f32 %v839, %v846
        %v849 = vmul.f32 %v843, %v845
        %v850 = vmul.f32 %v840, %v846
        %v851 = vmul.f32 %v844, %v845
        %v852 = vmul.f32 %v841, %v846
        %853 = vset.pattern.permute.xlu0 0
        %854 = vperm.xlu0 %853, %v371
        %v855 = vpop.permute.xlu0 %854
        %857 = vset.pattern.permute.xlu0 0
        %858 = vperm.xlu0 %857, %v372
        %v859 = vpop.permute.xlu0 %858
        %861 = vset.pattern.permute.xlu0 0
        %862 = vperm.xlu0 %861, %v373
        %v863 = vpop.permute.xlu0 %862
        %v865 = vmul.f32 %v847, %v855
        %v866 = vmul.f32 %v848, %v855
        %v867 = vmul.f32 %v849, %v859
        %v868 = vmul.f32 %v850, %v859
        %v869 = vmul.f32 %v851, %v863
        %v870 = vmul.f32 %v852, %v863
        %v871 = vadd.f32 %v818, %v865
        %v872 = vadd.f32 %v819, %v866
        %v873 = vadd.f32 %v820, %v867
        %v874 = vadd.f32 %v821, %v868
        %v875 = vadd.f32 %v822, %v869
        %v876 = vadd.f32 %v823, %v870
        %877 = vrot.lane.b32.xlu0 %v585, 16
        %v878 = vpop.permute.xlu0 %877
        %879 = vrot.lane.b32.xlu0 %v589, 16
        %v880 = vpop.permute.xlu0 %879
        %881 = vrot.lane.b32.xlu0 %v593, 16
        %v882 = vpop.permute.xlu0 %881
        %883 = vrot.lane.b32.xlu0 %v793, 16
        %v884 = vpop.permute.xlu0 %883
        %885 = vrot.lane.b32.xlu0 %v797, 16
        %v886 = vpop.permute.xlu0 %885
        %887 = vrot.lane.b32.xlu0 %v801, 16
        %v888 = vpop.permute.xlu0 %887
        %vm889 = vcmp.lt.s32.totalorder %v837, 16
        %v890 = vsel %vm889, %v878, %v884
        %v891 = vsel %vm889, %v880, %v886
        %v892 = vsel %vm889, %v882, %v888
        %v893 = vsel %vm889, %v884, %v878
        %v894 = vsel %vm889, %v886, %v880
        %v895 = vsel %vm889, %v888, %v882
        %v896 = vperm.slane %v367, 1
        %v897 = vperm.slane %v368, 1
        %v898 = vmul.f32 %v893, %v896
        %v899 = vmul.f32 %v890, %v897
        %v900 = vmul.f32 %v894, %v896
        %v901 = vmul.f32 %v891, %v897
        %v902 = vmul.f32 %v895, %v896
        %v903 = vmul.f32 %v892, %v897
        %904 = vset.pattern.permute.xlu0 1
        %905 = vperm.xlu0 %904, %v371
        %v906 = vpop.permute.xlu0 %905
        %908 = vset.pattern.permute.xlu0 1
        %909 = vperm.xlu0 %908, %v372
        %v910 = vpop.permute.xlu0 %909
        %912 = vset.pattern.permute.xlu0 1
        %913 = vperm.xlu0 %912, %v373
        %v914 = vpop.permute.xlu0 %913
        %v916 = vmul.f32 %v898, %v906
        %v917 = vmul.f32 %v899, %v906
        %v918 = vmul.f32 %v900, %v910
        %v919 = vmul.f32 %v901, %v910
        %v920 = vmul.f32 %v902, %v914
        %v921 = vmul.f32 %v903, %v914
        %v922 = vadd.f32 %v871, %v916
        %v923 = vadd.f32 %v872, %v917
        %v924 = vadd.f32 %v873, %v918
        %v925 = vadd.f32 %v874, %v919
        %v926 = vadd.f32 %v875, %v920
        %v927 = vadd.f32 %v876, %v921
        %928 = vrot.lane.b32.xlu0 %v585, 15
        %v929 = vpop.permute.xlu0 %928
        %930 = vrot.lane.b32.xlu0 %v589, 15
        %v931 = vpop.permute.xlu0 %930
        %932 = vrot.lane.b32.xlu0 %v593, 15
        %v933 = vpop.permute.xlu0 %932
        %934 = vrot.lane.b32.xlu0 %v793, 15
        %v935 = vpop.permute.xlu0 %934
        %936 = vrot.lane.b32.xlu0 %v797, 15
        %v937 = vpop.permute.xlu0 %936
        %938 = vrot.lane.b32.xlu0 %v801, 15
        %v939 = vpop.permute.xlu0 %938
        %vm940 = vcmp.lt.s32.totalorder %v837, 15
        %v941 = vsel %vm940, %v929, %v935
        %v942 = vsel %vm940, %v931, %v937
        %v943 = vsel %vm940, %v933, %v939
        %v944 = vsel %vm940, %v935, %v929
        %v945 = vsel %vm940, %v937, %v931
        %v946 = vsel %vm940, %v939, %v933
        %v947 = vperm.slane %v367, 2
        %v948 = vperm.slane %v368, 2
        %v949 = vmul.f32 %v944, %v947
        %v950 = vmul.f32 %v941, %v948
        %v951 = vmul.f32 %v945, %v947
        %v952 = vmul.f32 %v942, %v948
        %v953 = vmul.f32 %v946, %v947
        %v954 = vmul.f32 %v943, %v948
        %955 = vset.pattern.permute.xlu0 2
        %956 = vperm.xlu0 %955, %v371
        %v957 = vpop.permute.xlu0 %956
        %959 = vset.pattern.permute.xlu0 2
        %960 = vperm.xlu0 %959, %v372
        %v961 = vpop.permute.xlu0 %960
        %963 = vset.pattern.permute.xlu0 2
        %964 = vperm.xlu0 %963, %v373
        %v965 = vpop.permute.xlu0 %964
        %v967 = vmul.f32 %v949, %v957
        %v968 = vmul.f32 %v950, %v957
        %v969 = vmul.f32 %v951, %v961
        %v970 = vmul.f32 %v952, %v961
        %v971 = vmul.f32 %v953, %v965
        %v972 = vmul.f32 %v954, %v965
        %v973 = vadd.f32 %v922, %v967
        %v974 = vadd.f32 %v923, %v968
        %v975 = vadd.f32 %v924, %v969
        %v976 = vadd.f32 %v925, %v970
        %v977 = vadd.f32 %v926, %v971
        %v978 = vadd.f32 %v927, %v972
        %979 = vrot.lane.b32.xlu0 %v585, 1
        %v980 = vpop.permute.xlu0 %979
        %981 = vrot.lane.b32.xlu0 %v589, 1
        %v982 = vpop.permute.xlu0 %981
        %983 = vrot.lane.b32.xlu0 %v593, 1
        %v984 = vpop.permute.xlu0 %983
        %985 = vrot.lane.b32.xlu0 %v793, 1
        %v986 = vpop.permute.xlu0 %985
        %987 = vrot.lane.b32.xlu0 %v797, 1
        %v988 = vpop.permute.xlu0 %987
        %989 = vrot.lane.b32.xlu0 %v801, 1
        %v990 = vpop.permute.xlu0 %989
        %vm991 = vcmp.lt.s32.totalorder %v837, 1
        %v992 = vsel %vm991, %v980, %v986
        %v993 = vsel %vm991, %v982, %v988
        %v994 = vsel %vm991, %v984, %v990
        %v995 = vsel %vm991, %v986, %v980
        %v996 = vsel %vm991, %v988, %v982
        %v997 = vsel %vm991, %v990, %v984
        %v998 = vperm.slane %v367, 3
        %v999 = vperm.slane %v368, 3
        %v1000 = vmul.f32 %v995, %v998
        %v1001 = vmul.f32 %v992, %v999
        %v1002 = vmul.f32 %v996, %v998
        %v1003 = vmul.f32 %v993, %v999
        %v1004 = vmul.f32 %v997, %v998
        %v1005 = vmul.f32 %v994, %v999
        %1006 = vset.pattern.permute.xlu0 3
        %1007 = vperm.xlu0 %1006, %v371
        %v1008 = vpop.permute.xlu0 %1007
        %1010 = vset.pattern.permute.xlu0 3
        %1011 = vperm.xlu0 %1010, %v372
        %v1012 = vpop.permute.xlu0 %1011
        %1014 = vset.pattern.permute.xlu0 3
        %1015 = vperm.xlu0 %1014, %v373
        %v1016 = vpop.permute.xlu0 %1015
        %v1018 = vmul.f32 %v1000, %v1008
        %v1019 = vmul.f32 %v1001, %v1008
        %v1020 = vmul.f32 %v1002, %v1012
        %v1021 = vmul.f32 %v1003, %v1012
        %v1022 = vmul.f32 %v1004, %v1016
        %v1023 = vmul.f32 %v1005, %v1016
        %v1024 = vadd.f32 %v973, %v1018
        %v1025 = vadd.f32 %v974, %v1019
        %v1026 = vadd.f32 %v975, %v1020
        %v1027 = vadd.f32 %v976, %v1021
        %v1028 = vadd.f32 %v977, %v1022
        %v1029 = vadd.f32 %v978, %v1023
        %1030 = vrot.lane.b32.xlu0 %v585, 127
        %v1031 = vpop.permute.xlu0 %1030
        %1032 = vrot.lane.b32.xlu0 %v589, 127
        %v1033 = vpop.permute.xlu0 %1032
        %1034 = vrot.lane.b32.xlu0 %v593, 127
        %v1035 = vpop.permute.xlu0 %1034
        %1036 = vrot.lane.b32.xlu0 %v793, 127
        %v1037 = vpop.permute.xlu0 %1036
        %1038 = vrot.lane.b32.xlu0 %v797, 127
        %v1039 = vpop.permute.xlu0 %1038
        %1040 = vrot.lane.b32.xlu0 %v801, 127
        %v1041 = vpop.permute.xlu0 %1040
        %vm1042 = vcmp.lt.s32.totalorder %v837, 127
        %v1043 = vsel %vm1042, %v1031, %v1037
        %v1044 = vsel %vm1042, %v1033, %v1039
        %v1045 = vsel %vm1042, %v1035, %v1041
        %v1046 = vsel %vm1042, %v1037, %v1031
        %v1047 = vsel %vm1042, %v1039, %v1033
        %v1048 = vsel %vm1042, %v1041, %v1035
        %v1049 = vperm.slane %v367, 5
        %v1050 = vperm.slane %v368, 5
        %v1051 = vmul.f32 %v1043, %v1049
        %v1052 = vmul.f32 %v1046, %v1050
        %v1053 = vmul.f32 %v1044, %v1049
        %v1054 = vmul.f32 %v1047, %v1050
        %v1055 = vmul.f32 %v1045, %v1049
        %v1056 = vmul.f32 %v1048, %v1050
        %1057 = vset.pattern.permute.xlu0 5
        %1058 = vperm.xlu0 %1057, %v371
        %v1059 = vpop.permute.xlu0 %1058
        %1061 = vset.pattern.permute.xlu0 5
        %1062 = vperm.xlu0 %1061, %v372
        %v1063 = vpop.permute.xlu0 %1062
        %1065 = vset.pattern.permute.xlu0 5
        %1066 = vperm.xlu0 %1065, %v373
        %v1067 = vpop.permute.xlu0 %1066
        %v1069 = vmul.f32 %v1051, %v1059
        %v1070 = vmul.f32 %v1052, %v1059
        %v1071 = vmul.f32 %v1053, %v1063
        %v1072 = vmul.f32 %v1054, %v1063
        %v1073 = vmul.f32 %v1055, %v1067
        %v1074 = vmul.f32 %v1056, %v1067
        %v1075 = vadd.f32 %v1024, %v1069
        %v1076 = vadd.f32 %v1025, %v1070
        %v1077 = vadd.f32 %v1026, %v1071
        %v1078 = vadd.f32 %v1027, %v1072
        %v1079 = vadd.f32 %v1028, %v1073
        %v1080 = vadd.f32 %v1029, %v1074
        %1081 = vrot.lane.b32.xlu0 %v585, 113
        %v1082 = vpop.permute.xlu0 %1081
        %1083 = vrot.lane.b32.xlu0 %v589, 113
        %v1084 = vpop.permute.xlu0 %1083
        %1085 = vrot.lane.b32.xlu0 %v593, 113
        %v1086 = vpop.permute.xlu0 %1085
        %1087 = vrot.lane.b32.xlu0 %v793, 113
        %v1088 = vpop.permute.xlu0 %1087
        %1089 = vrot.lane.b32.xlu0 %v797, 113
        %v1090 = vpop.permute.xlu0 %1089
        %1091 = vrot.lane.b32.xlu0 %v801, 113
        %v1092 = vpop.permute.xlu0 %1091
        %vm1093 = vcmp.lt.s32.totalorder %v837, 113
        %v1094 = vsel %vm1093, %v1082, %v1088
        %v1095 = vsel %vm1093, %v1084, %v1090
        %v1096 = vsel %vm1093, %v1086, %v1092
        %v1097 = vsel %vm1093, %v1088, %v1082
        %v1098 = vsel %vm1093, %v1090, %v1084
        %v1099 = vsel %vm1093, %v1092, %v1086
        %v1100 = vperm.slane %v367, 6
        %v1101 = vperm.slane %v368, 6
        %v1102 = vmul.f32 %v1094, %v1100
        %v1103 = vmul.f32 %v1097, %v1101
        %v1104 = vmul.f32 %v1095, %v1100
        %v1105 = vmul.f32 %v1098, %v1101
        %v1106 = vmul.f32 %v1096, %v1100
        %v1107 = vmul.f32 %v1099, %v1101
        %1108 = vset.pattern.permute.xlu0 6
        %1109 = vperm.xlu0 %1108, %v371
        %v1110 = vpop.permute.xlu0 %1109
        %1112 = vset.pattern.permute.xlu0 6
        %1113 = vperm.xlu0 %1112, %v372
        %v1114 = vpop.permute.xlu0 %1113
        %1116 = vset.pattern.permute.xlu0 6
        %1117 = vperm.xlu0 %1116, %v373
        %v1118 = vpop.permute.xlu0 %1117
        %v1120 = vmul.f32 %v1102, %v1110
        %v1121 = vmul.f32 %v1103, %v1110
        %v1122 = vmul.f32 %v1104, %v1114
        %v1123 = vmul.f32 %v1105, %v1114
        %v1124 = vmul.f32 %v1106, %v1118
        %v1125 = vmul.f32 %v1107, %v1118
        %v1126 = vadd.f32 %v1075, %v1120
        %v1127 = vadd.f32 %v1076, %v1121
        %v1128 = vadd.f32 %v1077, %v1122
        %v1129 = vadd.f32 %v1078, %v1123
        %v1130 = vadd.f32 %v1079, %v1124
        %v1131 = vadd.f32 %v1080, %v1125
        %1132 = vrot.lane.b32.xlu0 %v585, 112
        %v1133 = vpop.permute.xlu0 %1132
        %1134 = vrot.lane.b32.xlu0 %v589, 112
        %v1135 = vpop.permute.xlu0 %1134
        %1136 = vrot.lane.b32.xlu0 %v593, 112
        %v1137 = vpop.permute.xlu0 %1136
        %1138 = vrot.lane.b32.xlu0 %v793, 112
        %v1139 = vpop.permute.xlu0 %1138
        %1140 = vrot.lane.b32.xlu0 %v797, 112
        %v1141 = vpop.permute.xlu0 %1140
        %1142 = vrot.lane.b32.xlu0 %v801, 112
        %v1143 = vpop.permute.xlu0 %1142
        %vm1144 = vcmp.lt.s32.totalorder %v837, 112
        %v1145 = vsel %vm1144, %v1133, %v1139
        %v1146 = vsel %vm1144, %v1135, %v1141
        %v1147 = vsel %vm1144, %v1137, %v1143
        %v1148 = vsel %vm1144, %v1139, %v1133
        %v1149 = vsel %vm1144, %v1141, %v1135
        %v1150 = vsel %vm1144, %v1143, %v1137
        %v1151 = vperm.slane %v367, 7
        %v1152 = vperm.slane %v368, 7
        %v1153 = vmul.f32 %v1145, %v1151
        %v1154 = vmul.f32 %v1148, %v1152
        %v1155 = vmul.f32 %v1146, %v1151
        %v1156 = vmul.f32 %v1149, %v1152
        %v1157 = vmul.f32 %v1147, %v1151
        %v1158 = vmul.f32 %v1150, %v1152
        %1159 = vset.pattern.permute.xlu0 7
        %1160 = vperm.xlu0 %1159, %v371
        %v1161 = vpop.permute.xlu0 %1160
        %1163 = vset.pattern.permute.xlu0 7
        %1164 = vperm.xlu0 %1163, %v372
        %v1165 = vpop.permute.xlu0 %1164
        %1167 = vset.pattern.permute.xlu0 7
        %1168 = vperm.xlu0 %1167, %v373
        %v1169 = vpop.permute.xlu0 %1168
        %v1171 = vmul.f32 %v1153, %v1161
        %v1172 = vmul.f32 %v1154, %v1161
        %v1173 = vmul.f32 %v1155, %v1165
        %v1174 = vmul.f32 %v1156, %v1165
        %v1175 = vmul.f32 %v1157, %v1169
        %v1176 = vmul.f32 %v1158, %v1169
        %v1177 = vadd.f32 %v1126, %v1171
        %v1178 = vadd.f32 %v1127, %v1172
        %v1179 = vadd.f32 %v1128, %v1173
        %v1180 = vadd.f32 %v1129, %v1174
        %v1181 = vadd.f32 %v1130, %v1175
        %v1182 = vadd.f32 %v1131, %v1176
        %1183 = vrot.lane.b32.xlu0 %v585, 111
        %v1184 = vpop.permute.xlu0 %1183
        %1185 = vrot.lane.b32.xlu0 %v589, 111
        %v1186 = vpop.permute.xlu0 %1185
        %1187 = vrot.lane.b32.xlu0 %v593, 111
        %v1188 = vpop.permute.xlu0 %1187
        %1189 = vrot.lane.b32.xlu0 %v793, 111
        %v1190 = vpop.permute.xlu0 %1189
        %1191 = vrot.lane.b32.xlu0 %v797, 111
        %v1192 = vpop.permute.xlu0 %1191
        %1193 = vrot.lane.b32.xlu0 %v801, 111
        %v1194 = vpop.permute.xlu0 %1193
        %vm1195 = vcmp.lt.s32.totalorder %v837, 111
        %v1196 = vsel %vm1195, %v1184, %v1190
        %v1197 = vsel %vm1195, %v1186, %v1192
        %v1198 = vsel %vm1195, %v1188, %v1194
        %v1199 = vsel %vm1195, %v1190, %v1184
        %v1200 = vsel %vm1195, %v1192, %v1186
        %v1201 = vsel %vm1195, %v1194, %v1188
        %v1202 = vperm.slane %v369, 0
        %v1203 = vperm.slane %v370, 0
        %v1204 = vmul.f32 %v1196, %v1202
        %v1205 = vmul.f32 %v1199, %v1203
        %v1206 = vmul.f32 %v1197, %v1202
        %v1207 = vmul.f32 %v1200, %v1203
        %v1208 = vmul.f32 %v1198, %v1202
        %v1209 = vmul.f32 %v1201, %v1203
        %1210 = vset.pattern.permute.xlu0 8
        %1211 = vperm.xlu0 %1210, %v371
        %v1212 = vpop.permute.xlu0 %1211
        %1214 = vset.pattern.permute.xlu0 8
        %1215 = vperm.xlu0 %1214, %v372
        %v1216 = vpop.permute.xlu0 %1215
        %1218 = vset.pattern.permute.xlu0 8
        %1219 = vperm.xlu0 %1218, %v373
        %v1220 = vpop.permute.xlu0 %1219
        %v1222 = vmul.f32 %v1204, %v1212
        %v1223 = vmul.f32 %v1205, %v1212
        %v1224 = vmul.f32 %v1206, %v1216
        %v1225 = vmul.f32 %v1207, %v1216
        %v1226 = vmul.f32 %v1208, %v1220
        %v1227 = vmul.f32 %v1209, %v1220
        %v1228 = vadd.f32 %v1177, %v1222
        %v1229 = vadd.f32 %v1178, %v1223
        %v1230 = vadd.f32 %v1179, %v1224
        %v1231 = vadd.f32 %v1180, %v1225
        %v1232 = vadd.f32 %v1181, %v1226
        %v1233 = vadd.f32 %v1182, %v1227
        %1234 = vst [vmem:[%s359] sm:$0xff] %v1228
        %1235 = vst [vmem:[%s359 + $0x8] sm:$0xff] %v1229
        %1236 = vst [vmem:[%s359 + $0x10] sm:$0xff] %v1230
        %1237 = vst [vmem:[%s359 + $0x18] sm:$0xff] %v1231
        %1238 = vst [vmem:[%s359 + $0x20] sm:$0xff] %v1232
        %1239 = vst [vmem:[%s359 + $0x28] sm:$0xff] %v1233
        %v1240 = vmul.f32 %v1228, %v1228
        %v1241 = vmul.f32 %v1229, %v1229
        %v1242 = vadd.f32 %v1240, %v1241
        %1243 = vadd.xlane.f32.xlu0 %v1242
        %v1244 = vpop.xlane.xlu0 %1243
        %v1245 = vmax.f32 %v1244, 1e-24
        %v1246 = vrsqrt.pop %v1245
        %v1247 = vmul.f32 %v1246, %v1245
        %v1248 = vmul.f32 %v1247, %v1246
        %v1249 = vmul.f32 0.5, %v1248
        %v1250 = vsub.f32 1.5, %v1249
        %v1251 = vmul.f32 %v1246, %v1250
        %vm1252 = vweird.f32 %v1245
        %vm1253 = vweird.f32 %v1246
        %vm1254 = vmor %vm1252, %vm1253
        %v1255 = vsel %vm1254, %v1246, %v1251
        %v1256 = vmul.f32 %v1228, %v1255
        %v1257 = vmul.f32 %v1229, %v1255
        %v1258 = vmul.f32 %v1230, %v1230
        %v1259 = vmul.f32 %v1231, %v1231
        %v1260 = vadd.f32 %v1258, %v1259
        %1261 = vadd.xlane.f32.xlu0 %v1260
        %v1262 = vpop.xlane.xlu0 %1261
        %v1263 = vmax.f32 %v1262, 1e-24
        %v1264 = vrsqrt.pop %v1263
        %v1265 = vmul.f32 %v1264, %v1263
        %v1266 = vmul.f32 %v1265, %v1264
        %v1267 = vmul.f32 0.5, %v1266
        %v1268 = vsub.f32 1.5, %v1267
        %v1269 = vmul.f32 %v1264, %v1268
        %vm1270 = vweird.f32 %v1263
        %vm1271 = vweird.f32 %v1264
        %vm1272 = vmor %vm1270, %vm1271
        %v1273 = vsel %vm1272, %v1264, %v1269
        %v1274 = vmul.f32 %v1230, %v1273
        %v1275 = vmul.f32 %v1231, %v1273
        %1276 = vmatpush.xpose.msra.mxu0 0.0
        %1277 = vmatpush.xpose.msra.mxu0 0.0
        %1278 = vmatpush.xpose.msra.mxu0 0.0
        %1279 = vmatpush.xpose.msra.mxu0 0.0
        %1280 = vmatpush.xpose.msra.mxu0 0.0
        %1281 = vmatpush.xpose.msra.mxu0 0.0
        %1282 = vmatpush.xpose.msra.mxu0 0.0
        %1283 = vmatpush.xpose.msra.mxu0 0.0
        %1284 = vmatpush.xpose.msra.mxu0 0.0
        %1285 = vmatpush.xpose.msra.mxu0 0.0
        %1286 = vmatpush.xpose.msra.mxu0 0.0
        %1287 = vmatpush.xpose.msra.mxu0 0.0
        %1288 = vmatpush.xpose.msra.mxu0 0.0
        %1289 = vmatpush.xpose.msra.mxu0 0.0
        %1290 = vmatpush.xpose.msra.mxu0 0.0
        %v1291 = vand.u32 %v1274, 4294901760
        %1292 = vmatpush.xpose.msra.mxu0 %v1291
        %v1293 = vand.u32 %v1256, 4294901760
        %v1294 = vsub.f32 %v1256, %v1293
        %v1295 = vand.u32 %v1294, 4294901760
        %v1296 = vsub.f32 %v1294, %v1295
        %v1297 = vand.u32 %v1296, 4294901760
        %1298 = vmatmul.f32.gmra.mxu0 %v1297
        %v1299 = vpop.f32.mrf.mxu0
        %v1300 = vadd.f32 0.0, %v1299
        %1301 = vdwg.mxu0
        %1302 = vmatpush.xpose.msra.mxu0 0.0
        %1303 = vmatpush.xpose.msra.mxu0 0.0
        %1304 = vmatpush.xpose.msra.mxu0 0.0
        %1305 = vmatpush.xpose.msra.mxu0 0.0
        %1306 = vmatpush.xpose.msra.mxu0 0.0
        %1307 = vmatpush.xpose.msra.mxu0 0.0
        %1308 = vmatpush.xpose.msra.mxu0 0.0
        %1309 = vmatpush.xpose.msra.mxu0 0.0
        %1310 = vmatpush.xpose.msra.mxu0 0.0
        %1311 = vmatpush.xpose.msra.mxu0 0.0
        %1312 = vmatpush.xpose.msra.mxu0 0.0
        %1313 = vmatpush.xpose.msra.mxu0 0.0
        %1314 = vmatpush.xpose.msra.mxu0 0.0
        %1315 = vmatpush.xpose.msra.mxu0 0.0
        %1316 = vmatpush.xpose.msra.mxu0 0.0
        %v1317 = vand.u32 %v1274, 4294901760
        %v1318 = vsub.f32 %v1274, %v1317
        %v1319 = vand.u32 %v1318, 4294901760
        %v1320 = vsub.f32 %v1318, %v1319
        %v1321 = vand.u32 %v1320, 4294901760
        %1322 = vmatpush.xpose.msra.mxu0 %v1321
        %v1323 = vand.u32 %v1256, 4294901760
        %1324 = vmatmul.f32.gmra.mxu0 %v1323
        %v1325 = vpop.f32.mrf.mxu0
        %v1326 = vadd.f32 %v1300, %v1325
        %1327 = vdwg.mxu0
        %1328 = vmatpush.xpose.msra.mxu0 0.0
        %1329 = vmatpush.xpose.msra.mxu0 0.0
        %1330 = vmatpush.xpose.msra.mxu0 0.0
        %1331 = vmatpush.xpose.msra.mxu0 0.0
        %1332 = vmatpush.xpose.msra.mxu0 0.0
        %1333 = vmatpush.xpose.msra.mxu0 0.0
        %1334 = vmatpush.xpose.msra.mxu0 0.0
        %1335 = vmatpush.xpose.msra.mxu0 0.0
        %1336 = vmatpush.xpose.msra.mxu0 0.0
        %1337 = vmatpush.xpose.msra.mxu0 0.0
        %1338 = vmatpush.xpose.msra.mxu0 0.0
        %1339 = vmatpush.xpose.msra.mxu0 0.0
        %1340 = vmatpush.xpose.msra.mxu0 0.0
        %1341 = vmatpush.xpose.msra.mxu0 0.0
        %1342 = vmatpush.xpose.msra.mxu0 0.0
        %v1343 = vand.u32 %v1274, 4294901760
        %v1344 = vsub.f32 %v1274, %v1343
        %1345 = vmatpush.xpose.msra.mxu0 %v1344
        %v1346 = vand.u32 %v1256, 4294901760
        %v1347 = vsub.f32 %v1256, %v1346
        %1348 = vmatmul.f32.gmra.mxu0 %v1347
        %v1349 = vpop.f32.mrf.mxu0
        %v1350 = vadd.f32 %v1326, %v1349
        %1351 = vdwg.mxu0
        %1352 = vmatpush.xpose.msra.mxu0 0.0
        %1353 = vmatpush.xpose.msra.mxu0 0.0
        %1354 = vmatpush.xpose.msra.mxu0 0.0
        %1355 = vmatpush.xpose.msra.mxu0 0.0
        %1356 = vmatpush.xpose.msra.mxu0 0.0
        %1357 = vmatpush.xpose.msra.mxu0 0.0
        %1358 = vmatpush.xpose.msra.mxu0 0.0
        %1359 = vmatpush.xpose.msra.mxu0 0.0
        %1360 = vmatpush.xpose.msra.mxu0 0.0
        %1361 = vmatpush.xpose.msra.mxu0 0.0
        %1362 = vmatpush.xpose.msra.mxu0 0.0
        %1363 = vmatpush.xpose.msra.mxu0 0.0
        %1364 = vmatpush.xpose.msra.mxu0 0.0
        %1365 = vmatpush.xpose.msra.mxu0 0.0
        %1366 = vmatpush.xpose.msra.mxu0 0.0
        %v1367 = vand.u32 %v1274, 4294901760
        %1368 = vmatpush.xpose.msra.mxu0 %v1367
        %v1369 = vand.u32 %v1256, 4294901760
        %v1370 = vsub.f32 %v1256, %v1369
        %v1371 = vand.u32 %v1370, 4294901760
        %1372 = vmatmul.f32.gmra.mxu0 %v1371
        %v1373 = vpop.f32.mrf.mxu0
        %v1374 = vadd.f32 %v1350, %v1373
        %1375 = vdwg.mxu0
        %1376 = vmatpush.xpose.msra.mxu0 0.0
        %1377 = vmatpush.xpose.msra.mxu0 0.0
        %1378 = vmatpush.xpose.msra.mxu0 0.0
        %1379 = vmatpush.xpose.msra.mxu0 0.0
        %1380 = vmatpush.xpose.msra.mxu0 0.0
        %1381 = vmatpush.xpose.msra.mxu0 0.0
        %1382 = vmatpush.xpose.msra.mxu0 0.0
        %1383 = vmatpush.xpose.msra.mxu0 0.0
        %1384 = vmatpush.xpose.msra.mxu0 0.0
        %1385 = vmatpush.xpose.msra.mxu0 0.0
        %1386 = vmatpush.xpose.msra.mxu0 0.0
        %1387 = vmatpush.xpose.msra.mxu0 0.0
        %1388 = vmatpush.xpose.msra.mxu0 0.0
        %1389 = vmatpush.xpose.msra.mxu0 0.0
        %1390 = vmatpush.xpose.msra.mxu0 0.0
        %v1391 = vand.u32 %v1274, 4294901760
        %v1392 = vsub.f32 %v1274, %v1391
        %v1393 = vand.u32 %v1392, 4294901760
        %1394 = vmatpush.xpose.msra.mxu0 %v1393
        %v1395 = vand.u32 %v1256, 4294901760
        %1396 = vmatmul.f32.gmra.mxu0 %v1395
        %v1397 = vpop.f32.mrf.mxu0
        %v1398 = vadd.f32 %v1374, %v1397
        %1399 = vdwg.mxu0
        %1400 = vmatpush.xpose.msra.mxu0 0.0
        %1401 = vmatpush.xpose.msra.mxu0 0.0
        %1402 = vmatpush.xpose.msra.mxu0 0.0
        %1403 = vmatpush.xpose.msra.mxu0 0.0
        %1404 = vmatpush.xpose.msra.mxu0 0.0
        %1405 = vmatpush.xpose.msra.mxu0 0.0
        %1406 = vmatpush.xpose.msra.mxu0 0.0
        %1407 = vmatpush.xpose.msra.mxu0 0.0
        %1408 = vmatpush.xpose.msra.mxu0 0.0
        %1409 = vmatpush.xpose.msra.mxu0 0.0
        %1410 = vmatpush.xpose.msra.mxu0 0.0
        %1411 = vmatpush.xpose.msra.mxu0 0.0
        %1412 = vmatpush.xpose.msra.mxu0 0.0
        %1413 = vmatpush.xpose.msra.mxu0 0.0
        %1414 = vmatpush.xpose.msra.mxu0 0.0
        %v1415 = vand.u32 %v1274, 4294901760
        %1416 = vmatpush.xpose.msra.mxu0 %v1415
        %v1417 = vand.u32 %v1256, 4294901760
        %1418 = vmatmul.f32.gmra.mxu0 %v1417
        %v1419 = vpop.f32.mrf.mxu0
        %v1420 = vadd.f32 %v1398, %v1419
        %1421 = vdwg.mxu0
        %1422 = vmatpush.xpose.msra.mxu0 0.0
        %1423 = vmatpush.xpose.msra.mxu0 0.0
        %1424 = vmatpush.xpose.msra.mxu0 0.0
        %1425 = vmatpush.xpose.msra.mxu0 0.0
        %1426 = vmatpush.xpose.msra.mxu0 0.0
        %1427 = vmatpush.xpose.msra.mxu0 0.0
        %1428 = vmatpush.xpose.msra.mxu0 0.0
        %1429 = vmatpush.xpose.msra.mxu0 0.0
        %1430 = vmatpush.xpose.msra.mxu0 0.0
        %1431 = vmatpush.xpose.msra.mxu0 0.0
        %1432 = vmatpush.xpose.msra.mxu0 0.0
        %1433 = vmatpush.xpose.msra.mxu0 0.0
        %1434 = vmatpush.xpose.msra.mxu0 0.0
        %1435 = vmatpush.xpose.msra.mxu0 0.0
        %1436 = vmatpush.xpose.msra.mxu0 0.0
        %v1437 = vand.u32 %v1275, 4294901760
        %1438 = vmatpush.xpose.msra.mxu0 %v1437
        %v1439 = vand.u32 %v1257, 4294901760
        %v1440 = vsub.f32 %v1257, %v1439
        %v1441 = vand.u32 %v1440, 4294901760
        %v1442 = vsub.f32 %v1440, %v1441
        %v1443 = vand.u32 %v1442, 4294901760
        %1444 = vmatmul.f32.gmra.mxu0 %v1443
        %v1445 = vpop.f32.mrf.mxu0
        %v1446 = vadd.f32 %v1420, %v1445
        %1447 = vdwg.mxu0
        %1448 = vmatpush.xpose.msra.mxu0 0.0
        %1449 = vmatpush.xpose.msra.mxu0 0.0
        %1450 = vmatpush.xpose.msra.mxu0 0.0
        %1451 = vmatpush.xpose.msra.mxu0 0.0
        %1452 = vmatpush.xpose.msra.mxu0 0.0
        %1453 = vmatpush.xpose.msra.mxu0 0.0
        %1454 = vmatpush.xpose.msra.mxu0 0.0
        %1455 = vmatpush.xpose.msra.mxu0 0.0
        %1456 = vmatpush.xpose.msra.mxu0 0.0
        %1457 = vmatpush.xpose.msra.mxu0 0.0
        %1458 = vmatpush.xpose.msra.mxu0 0.0
        %1459 = vmatpush.xpose.msra.mxu0 0.0
        %1460 = vmatpush.xpose.msra.mxu0 0.0
        %1461 = vmatpush.xpose.msra.mxu0 0.0
        %1462 = vmatpush.xpose.msra.mxu0 0.0
        %v1463 = vand.u32 %v1275, 4294901760
        %v1464 = vsub.f32 %v1275, %v1463
        %v1465 = vand.u32 %v1464, 4294901760
        %v1466 = vsub.f32 %v1464, %v1465
        %v1467 = vand.u32 %v1466, 4294901760
        %1468 = vmatpush.xpose.msra.mxu0 %v1467
        %v1469 = vand.u32 %v1257, 4294901760
        %1470 = vmatmul.f32.gmra.mxu0 %v1469
        %v1471 = vpop.f32.mrf.mxu0
        %v1472 = vadd.f32 %v1446, %v1471
        %1473 = vdwg.mxu0
        %1474 = vmatpush.xpose.msra.mxu0 0.0
        %1475 = vmatpush.xpose.msra.mxu0 0.0
        %1476 = vmatpush.xpose.msra.mxu0 0.0
        %1477 = vmatpush.xpose.msra.mxu0 0.0
        %1478 = vmatpush.xpose.msra.mxu0 0.0
        %1479 = vmatpush.xpose.msra.mxu0 0.0
        %1480 = vmatpush.xpose.msra.mxu0 0.0
        %1481 = vmatpush.xpose.msra.mxu0 0.0
        %1482 = vmatpush.xpose.msra.mxu0 0.0
        %1483 = vmatpush.xpose.msra.mxu0 0.0
        %1484 = vmatpush.xpose.msra.mxu0 0.0
        %1485 = vmatpush.xpose.msra.mxu0 0.0
        %1486 = vmatpush.xpose.msra.mxu0 0.0
        %1487 = vmatpush.xpose.msra.mxu0 0.0
        %1488 = vmatpush.xpose.msra.mxu0 0.0
        %v1489 = vand.u32 %v1275, 4294901760
        %v1490 = vsub.f32 %v1275, %v1489
        %1491 = vmatpush.xpose.msra.mxu0 %v1490
        %v1492 = vand.u32 %v1257, 4294901760
        %v1493 = vsub.f32 %v1257, %v1492
        %1494 = vmatmul.f32.gmra.mxu0 %v1493
        %v1495 = vpop.f32.mrf.mxu0
        %v1496 = vadd.f32 %v1472, %v1495
        %1497 = vdwg.mxu0
        %1498 = vmatpush.xpose.msra.mxu0 0.0
        %1499 = vmatpush.xpose.msra.mxu0 0.0
        %1500 = vmatpush.xpose.msra.mxu0 0.0
        %1501 = vmatpush.xpose.msra.mxu0 0.0
        %1502 = vmatpush.xpose.msra.mxu0 0.0
        %1503 = vmatpush.xpose.msra.mxu0 0.0
        %1504 = vmatpush.xpose.msra.mxu0 0.0
        %1505 = vmatpush.xpose.msra.mxu0 0.0
        %1506 = vmatpush.xpose.msra.mxu0 0.0
        %1507 = vmatpush.xpose.msra.mxu0 0.0
        %1508 = vmatpush.xpose.msra.mxu0 0.0
        %1509 = vmatpush.xpose.msra.mxu0 0.0
        %1510 = vmatpush.xpose.msra.mxu0 0.0
        %1511 = vmatpush.xpose.msra.mxu0 0.0
        %1512 = vmatpush.xpose.msra.mxu0 0.0
        %v1513 = vand.u32 %v1275, 4294901760
        %1514 = vmatpush.xpose.msra.mxu0 %v1513
        %v1515 = vand.u32 %v1257, 4294901760
        %v1516 = vsub.f32 %v1257, %v1515
        %v1517 = vand.u32 %v1516, 4294901760
        %1518 = vmatmul.f32.gmra.mxu0 %v1517
        %v1519 = vpop.f32.mrf.mxu0
        %v1520 = vadd.f32 %v1496, %v1519
        %1521 = vdwg.mxu0
        %1522 = vmatpush.xpose.msra.mxu0 0.0
        %1523 = vmatpush.xpose.msra.mxu0 0.0
        %1524 = vmatpush.xpose.msra.mxu0 0.0
        %1525 = vmatpush.xpose.msra.mxu0 0.0
        %1526 = vmatpush.xpose.msra.mxu0 0.0
        %1527 = vmatpush.xpose.msra.mxu0 0.0
        %1528 = vmatpush.xpose.msra.mxu0 0.0
        %1529 = vmatpush.xpose.msra.mxu0 0.0
        %1530 = vmatpush.xpose.msra.mxu0 0.0
        %1531 = vmatpush.xpose.msra.mxu0 0.0
        %1532 = vmatpush.xpose.msra.mxu0 0.0
        %1533 = vmatpush.xpose.msra.mxu0 0.0
        %1534 = vmatpush.xpose.msra.mxu0 0.0
        %1535 = vmatpush.xpose.msra.mxu0 0.0
        %1536 = vmatpush.xpose.msra.mxu0 0.0
        %v1537 = vand.u32 %v1275, 4294901760
        %v1538 = vsub.f32 %v1275, %v1537
        %v1539 = vand.u32 %v1538, 4294901760
        %1540 = vmatpush.xpose.msra.mxu0 %v1539
        %v1541 = vand.u32 %v1257, 4294901760
        %1542 = vmatmul.f32.gmra.mxu0 %v1541
        %v1543 = vpop.f32.mrf.mxu0
        %v1544 = vadd.f32 %v1520, %v1543
        %1545 = vdwg.mxu0
        %1546 = vmatpush.xpose.msra.mxu0 0.0
        %1547 = vmatpush.xpose.msra.mxu0 0.0
        %1548 = vmatpush.xpose.msra.mxu0 0.0
        %1549 = vmatpush.xpose.msra.mxu0 0.0
        %1550 = vmatpush.xpose.msra.mxu0 0.0
        %1551 = vmatpush.xpose.msra.mxu0 0.0
        %1552 = vmatpush.xpose.msra.mxu0 0.0
        %1553 = vmatpush.xpose.msra.mxu0 0.0
        %1554 = vmatpush.xpose.msra.mxu0 0.0
        %1555 = vmatpush.xpose.msra.mxu0 0.0
        %1556 = vmatpush.xpose.msra.mxu0 0.0
        %1557 = vmatpush.xpose.msra.mxu0 0.0
        %1558 = vmatpush.xpose.msra.mxu0 0.0
        %1559 = vmatpush.xpose.msra.mxu0 0.0
        %1560 = vmatpush.xpose.msra.mxu0 0.0
        %v1561 = vand.u32 %v1275, 4294901760
        %1562 = vmatpush.xpose.msra.mxu0 %v1561
        %v1563 = vand.u32 %v1257, 4294901760
        %1564 = vmatmul.f32.gmra.mxu0 %v1563
        %v1565 = vpop.f32.mrf.mxu0
        %v1566 = vadd.f32 %v1544, %v1565
        %1567 = vdwg.mxu0
        %v1568 = vld [vmem:[%s5] sm:$0xff]
        %1570 = vset.pattern.permute.xlu0 0
        %1571 = vperm.xlu0 %1570, %v1568
        %v1572 = vpop.permute.xlu0 %1571
        %v1574 = vmul.f32 %v1566, %v1572
        %v1575 = vld [vmem:[#allocation6] sm:$0xff]
        %v1576 = vadd.f32 %v1574, %v1575
        %v1577 = vsel %vm377, %v1576, -inf
        %1578 = vmax.xlane.f32.xlu0 %v1577
        %v1579 = vpop.xlane.xlu0 %1578
        %v1580 = vsub.f32 %v1576, %v1579
        %v1581 = vmul.f32 %v1580, 1.442695
        %v1582 = vpow.pop %v1581
        %v1583 = vsel %vm377, %v1582, 0.0
        %1584 = vadd.xlane.f32.xlu0 %v1583
        %v1585 = vpop.xlane.xlu0 %1584
        %v1586 = vrcp.pop %v1585
        %v1587 = vmul.f32 %v1585, %v1586
        %v1588 = vsub.f32 1.0, %v1587
        %v1589 = vmul.f32 %v1586, %v1588
        %v1590 = vadd.f32 %v1586, %v1589
        %vm1591 = vweird.f32 %v1585
        %vm1592 = vweird.f32 %v1586
        %vm1593 = vmor %vm1591, %vm1592
        %v1594 = vsel %vm1593, %v1586, %v1590
        %v1595 = vand.u32 2147483647, %v1585
        %vm1596 = vcmp.eq.f32.partialorder %v1595, 8.507059e+37
        %v1597 = vand.u32 %v1585, 2147483648
        %v1598 = vor.u32 1.1754944e-38, %v1597
        %v1599 = vsel %vm1596, %v1598, %v1594
        %v1600 = vmul.f32 %v1582, %v1599
        %v1602 = vsel %vm377, %v1600, 0
        %1604 = vmatpush.msra.mxu0 0.0
        %1605 = vmatpush.msra.mxu0 0.0
        %1606 = vmatpush.msra.mxu0 0.0
        %1607 = vmatpush.msra.mxu0 0.0
        %1608 = vmatpush.msra.mxu0 0.0
        %1609 = vmatpush.msra.mxu0 0.0
        %1610 = vmatpush.msra.mxu0 0.0
        %1611 = vmatpush.msra.mxu0 0.0
        %1612 = vmatpush.msra.mxu0 0.0
        %1613 = vmatpush.msra.mxu0 0.0
        %1614 = vmatpush.msra.mxu0 0.0
        %1615 = vmatpush.msra.mxu0 0.0
        %1616 = vmatpush.msra.mxu0 0.0
        %1617 = vmatpush.msra.mxu0 0.0
        %1618 = vmatpush.msra.mxu0 0.0
        %v1619 = vand.u32 %v1232, 4294901760
        %1620 = vmatpush.msra.mxu0 %v1619
        %v1621 = vand.u32 %v1602, 4294901760
        %v1622 = vsub.f32 %v1602, %v1621
        %v1623 = vand.u32 %v1622, 4294901760
        %v1624 = vsub.f32 %v1622, %v1623
        %v1625 = vand.u32 %v1624, 4294901760
        %1626 = vmatmul.f32.gmra.mxu0 %v1625
        %v1627 = vpop.f32.mrf.mxu0
        %v1628 = vadd.f32 0.0, %v1627
        %1629 = vdwg.mxu0
        %1630 = vmatpush.msra.mxu0 0.0
        %1631 = vmatpush.msra.mxu0 0.0
        %1632 = vmatpush.msra.mxu0 0.0
        %1633 = vmatpush.msra.mxu0 0.0
        %1634 = vmatpush.msra.mxu0 0.0
        %1635 = vmatpush.msra.mxu0 0.0
        %1636 = vmatpush.msra.mxu0 0.0
        %1637 = vmatpush.msra.mxu0 0.0
        %1638 = vmatpush.msra.mxu0 0.0
        %1639 = vmatpush.msra.mxu0 0.0
        %1640 = vmatpush.msra.mxu0 0.0
        %1641 = vmatpush.msra.mxu0 0.0
        %1642 = vmatpush.msra.mxu0 0.0
        %1643 = vmatpush.msra.mxu0 0.0
        %1644 = vmatpush.msra.mxu0 0.0
        %v1645 = vand.u32 %v1232, 4294901760
        %v1646 = vsub.f32 %v1232, %v1645
        %v1647 = vand.u32 %v1646, 4294901760
        %v1648 = vsub.f32 %v1646, %v1647
        %v1649 = vand.u32 %v1648, 4294901760
        %1650 = vmatpush.msra.mxu0 %v1649
        %v1651 = vand.u32 %v1602, 4294901760
        %1652 = vmatmul.f32.gmra.mxu0 %v1651
        %v1653 = vpop.f32.mrf.mxu0
        %v1654 = vadd.f32 %v1628, %v1653
        %1655 = vdwg.mxu0
        %1656 = vmatpush.msra.mxu0 0.0
        %1657 = vmatpush.msra.mxu0 0.0
        %1658 = vmatpush.msra.mxu0 0.0
        %1659 = vmatpush.msra.mxu0 0.0
        %1660 = vmatpush.msra.mxu0 0.0
        %1661 = vmatpush.msra.mxu0 0.0
        %1662 = vmatpush.msra.mxu0 0.0
        %1663 = vmatpush.msra.mxu0 0.0
        %1664 = vmatpush.msra.mxu0 0.0
        %1665 = vmatpush.msra.mxu0 0.0
        %1666 = vmatpush.msra.mxu0 0.0
        %1667 = vmatpush.msra.mxu0 0.0
        %1668 = vmatpush.msra.mxu0 0.0
        %1669 = vmatpush.msra.mxu0 0.0
        %1670 = vmatpush.msra.mxu0 0.0
        %v1671 = vand.u32 %v1232, 4294901760
        %v1672 = vsub.f32 %v1232, %v1671
        %1673 = vmatpush.msra.mxu0 %v1672
        %v1674 = vand.u32 %v1602, 4294901760
        %v1675 = vsub.f32 %v1602, %v1674
        %1676 = vmatmul.f32.gmra.mxu0 %v1675
        %v1677 = vpop.f32.mrf.mxu0
        %v1678 = vadd.f32 %v1654, %v1677
        %1679 = vdwg.mxu0
        %1680 = vmatpush.msra.mxu0 0.0
        %1681 = vmatpush.msra.mxu0 0.0
        %1682 = vmatpush.msra.mxu0 0.0
        %1683 = vmatpush.msra.mxu0 0.0
        %1684 = vmatpush.msra.mxu0 0.0
        %1685 = vmatpush.msra.mxu0 0.0
        %1686 = vmatpush.msra.mxu0 0.0
        %1687 = vmatpush.msra.mxu0 0.0
        %1688 = vmatpush.msra.mxu0 0.0
        %1689 = vmatpush.msra.mxu0 0.0
        %1690 = vmatpush.msra.mxu0 0.0
        %1691 = vmatpush.msra.mxu0 0.0
        %1692 = vmatpush.msra.mxu0 0.0
        %1693 = vmatpush.msra.mxu0 0.0
        %1694 = vmatpush.msra.mxu0 0.0
        %v1695 = vand.u32 %v1232, 4294901760
        %1696 = vmatpush.msra.mxu0 %v1695
        %v1697 = vand.u32 %v1602, 4294901760
        %v1698 = vsub.f32 %v1602, %v1697
        %v1699 = vand.u32 %v1698, 4294901760
        %1700 = vmatmul.f32.gmra.mxu0 %v1699
        %v1701 = vpop.f32.mrf.mxu0
        %v1702 = vadd.f32 %v1678, %v1701
        %1703 = vdwg.mxu0
        %1704 = vmatpush.msra.mxu0 0.0
        %1705 = vmatpush.msra.mxu0 0.0
        %1706 = vmatpush.msra.mxu0 0.0
        %1707 = vmatpush.msra.mxu0 0.0
        %1708 = vmatpush.msra.mxu0 0.0
        %1709 = vmatpush.msra.mxu0 0.0
        %1710 = vmatpush.msra.mxu0 0.0
        %1711 = vmatpush.msra.mxu0 0.0
        %1712 = vmatpush.msra.mxu0 0.0
        %1713 = vmatpush.msra.mxu0 0.0
        %1714 = vmatpush.msra.mxu0 0.0
        %1715 = vmatpush.msra.mxu0 0.0
        %1716 = vmatpush.msra.mxu0 0.0
        %1717 = vmatpush.msra.mxu0 0.0
        %1718 = vmatpush.msra.mxu0 0.0
        %v1719 = vand.u32 %v1232, 4294901760
        %v1720 = vsub.f32 %v1232, %v1719
        %v1721 = vand.u32 %v1720, 4294901760
        %1722 = vmatpush.msra.mxu0 %v1721
        %v1723 = vand.u32 %v1602, 4294901760
        %1724 = vmatmul.f32.gmra.mxu0 %v1723
        %v1725 = vpop.f32.mrf.mxu0
        %v1726 = vadd.f32 %v1702, %v1725
        %1727 = vdwg.mxu0
        %1728 = vmatpush.msra.mxu0 0.0
        %1729 = vmatpush.msra.mxu0 0.0
        %1730 = vmatpush.msra.mxu0 0.0
        %1731 = vmatpush.msra.mxu0 0.0
        %1732 = vmatpush.msra.mxu0 0.0
        %1733 = vmatpush.msra.mxu0 0.0
        %1734 = vmatpush.msra.mxu0 0.0
        %1735 = vmatpush.msra.mxu0 0.0
        %1736 = vmatpush.msra.mxu0 0.0
        %1737 = vmatpush.msra.mxu0 0.0
        %1738 = vmatpush.msra.mxu0 0.0
        %1739 = vmatpush.msra.mxu0 0.0
        %1740 = vmatpush.msra.mxu0 0.0
        %1741 = vmatpush.msra.mxu0 0.0
        %1742 = vmatpush.msra.mxu0 0.0
        %v1743 = vand.u32 %v1232, 4294901760
        %1744 = vmatpush.msra.mxu0 %v1743
        %v1745 = vand.u32 %v1602, 4294901760
        %1746 = vmatmul.f32.gmra.mxu0 %v1745
        %v1747 = vpop.f32.mrf.mxu0
        %v1748 = vadd.f32 %v1726, %v1747
        %1749 = vdwg.mxu0
        %1750 = vmatpush.msra.mxu0 0.0
        %1751 = vmatpush.msra.mxu0 0.0
        %1752 = vmatpush.msra.mxu0 0.0
        %1753 = vmatpush.msra.mxu0 0.0
        %1754 = vmatpush.msra.mxu0 0.0
        %1755 = vmatpush.msra.mxu0 0.0
        %1756 = vmatpush.msra.mxu0 0.0
        %1757 = vmatpush.msra.mxu0 0.0
        %1758 = vmatpush.msra.mxu0 0.0
        %1759 = vmatpush.msra.mxu0 0.0
        %1760 = vmatpush.msra.mxu0 0.0
        %1761 = vmatpush.msra.mxu0 0.0
        %1762 = vmatpush.msra.mxu0 0.0
        %1763 = vmatpush.msra.mxu0 0.0
        %1764 = vmatpush.msra.mxu0 0.0
        %v1765 = vand.u32 %v1233, 4294901760
        %1766 = vmatpush.msra.mxu0 %v1765
        %v1767 = vand.u32 %v1602, 4294901760
        %v1768 = vsub.f32 %v1602, %v1767
        %v1769 = vand.u32 %v1768, 4294901760
        %v1770 = vsub.f32 %v1768, %v1769
        %v1771 = vand.u32 %v1770, 4294901760
        %1772 = vmatmul.f32.gmra.mxu0 %v1771
        %v1773 = vpop.f32.mrf.mxu0
        %v1774 = vadd.f32 0.0, %v1773
        %1775 = vdwg.mxu0
        %1776 = vmatpush.msra.mxu0 0.0
        %1777 = vmatpush.msra.mxu0 0.0
        %1778 = vmatpush.msra.mxu0 0.0
        %1779 = vmatpush.msra.mxu0 0.0
        %1780 = vmatpush.msra.mxu0 0.0
        %1781 = vmatpush.msra.mxu0 0.0
        %1782 = vmatpush.msra.mxu0 0.0
        %1783 = vmatpush.msra.mxu0 0.0
        %1784 = vmatpush.msra.mxu0 0.0
        %1785 = vmatpush.msra.mxu0 0.0
        %1786 = vmatpush.msra.mxu0 0.0
        %1787 = vmatpush.msra.mxu0 0.0
        %1788 = vmatpush.msra.mxu0 0.0
        %1789 = vmatpush.msra.mxu0 0.0
        %1790 = vmatpush.msra.mxu0 0.0
        %v1791 = vand.u32 %v1233, 4294901760
        %v1792 = vsub.f32 %v1233, %v1791
        %v1793 = vand.u32 %v1792, 4294901760
        %v1794 = vsub.f32 %v1792, %v1793
        %v1795 = vand.u32 %v1794, 4294901760
        %1796 = vmatpush.msra.mxu0 %v1795
        %v1797 = vand.u32 %v1602, 4294901760
        %1798 = vmatmul.f32.gmra.mxu0 %v1797
        %v1799 = vpop.f32.mrf.mxu0
        %v1800 = vadd.f32 %v1774, %v1799
        %1801 = vdwg.mxu0
        %1802 = vmatpush.msra.mxu0 0.0
        %1803 = vmatpush.msra.mxu0 0.0
        %1804 = vmatpush.msra.mxu0 0.0
        %1805 = vmatpush.msra.mxu0 0.0
        %1806 = vmatpush.msra.mxu0 0.0
        %1807 = vmatpush.msra.mxu0 0.0
        %1808 = vmatpush.msra.mxu0 0.0
        %1809 = vmatpush.msra.mxu0 0.0
        %1810 = vmatpush.msra.mxu0 0.0
        %1811 = vmatpush.msra.mxu0 0.0
        %1812 = vmatpush.msra.mxu0 0.0
        %1813 = vmatpush.msra.mxu0 0.0
        %1814 = vmatpush.msra.mxu0 0.0
        %1815 = vmatpush.msra.mxu0 0.0
        %1816 = vmatpush.msra.mxu0 0.0
        %v1817 = vand.u32 %v1233, 4294901760
        %v1818 = vsub.f32 %v1233, %v1817
        %1819 = vmatpush.msra.mxu0 %v1818
        %v1820 = vand.u32 %v1602, 4294901760
        %v1821 = vsub.f32 %v1602, %v1820
        %1822 = vmatmul.f32.gmra.mxu0 %v1821
        %v1823 = vpop.f32.mrf.mxu0
        %v1824 = vadd.f32 %v1800, %v1823
        %1825 = vdwg.mxu0
        %1826 = vmatpush.msra.mxu0 0.0
        %1827 = vmatpush.msra.mxu0 0.0
        %1828 = vmatpush.msra.mxu0 0.0
        %1829 = vmatpush.msra.mxu0 0.0
        %1830 = vmatpush.msra.mxu0 0.0
        %1831 = vmatpush.msra.mxu0 0.0
        %1832 = vmatpush.msra.mxu0 0.0
        %1833 = vmatpush.msra.mxu0 0.0
        %1834 = vmatpush.msra.mxu0 0.0
        %1835 = vmatpush.msra.mxu0 0.0
        %1836 = vmatpush.msra.mxu0 0.0
        %1837 = vmatpush.msra.mxu0 0.0
        %1838 = vmatpush.msra.mxu0 0.0
        %1839 = vmatpush.msra.mxu0 0.0
        %1840 = vmatpush.msra.mxu0 0.0
        %v1841 = vand.u32 %v1233, 4294901760
        %1842 = vmatpush.msra.mxu0 %v1841
        %v1843 = vand.u32 %v1602, 4294901760
        %v1844 = vsub.f32 %v1602, %v1843
        %v1845 = vand.u32 %v1844, 4294901760
        %1846 = vmatmul.f32.gmra.mxu0 %v1845
        %v1847 = vpop.f32.mrf.mxu0
        %v1848 = vadd.f32 %v1824, %v1847
        %1849 = vdwg.mxu0
        %1850 = vmatpush.msra.mxu0 0.0
        %1851 = vmatpush.msra.mxu0 0.0
        %1852 = vmatpush.msra.mxu0 0.0
        %1853 = vmatpush.msra.mxu0 0.0
        %1854 = vmatpush.msra.mxu0 0.0
        %1855 = vmatpush.msra.mxu0 0.0
        %1856 = vmatpush.msra.mxu0 0.0
        %1857 = vmatpush.msra.mxu0 0.0
        %1858 = vmatpush.msra.mxu0 0.0
        %1859 = vmatpush.msra.mxu0 0.0
        %1860 = vmatpush.msra.mxu0 0.0
        %1861 = vmatpush.msra.mxu0 0.0
        %1862 = vmatpush.msra.mxu0 0.0
        %1863 = vmatpush.msra.mxu0 0.0
        %1864 = vmatpush.msra.mxu0 0.0
        %v1865 = vand.u32 %v1233, 4294901760
        %v1866 = vsub.f32 %v1233, %v1865
        %v1867 = vand.u32 %v1866, 4294901760
        %1868 = vmatpush.msra.mxu0 %v1867
        %v1869 = vand.u32 %v1602, 4294901760
        %1870 = vmatmul.f32.gmra.mxu0 %v1869
        %v1871 = vpop.f32.mrf.mxu0
        %v1872 = vadd.f32 %v1848, %v1871
        %1873 = vdwg.mxu0
        %1874 = vmatpush.msra.mxu0 0.0
        %1875 = vmatpush.msra.mxu0 0.0
        %1876 = vmatpush.msra.mxu0 0.0
        %1877 = vmatpush.msra.mxu0 0.0
        %1878 = vmatpush.msra.mxu0 0.0
        %1879 = vmatpush.msra.mxu0 0.0
        %1880 = vmatpush.msra.mxu0 0.0
        %1881 = vmatpush.msra.mxu0 0.0
        %1882 = vmatpush.msra.mxu0 0.0
        %1883 = vmatpush.msra.mxu0 0.0
        %1884 = vmatpush.msra.mxu0 0.0
        %1885 = vmatpush.msra.mxu0 0.0
        %1886 = vmatpush.msra.mxu0 0.0
        %1887 = vmatpush.msra.mxu0 0.0
        %1888 = vmatpush.msra.mxu0 0.0
        %v1889 = vand.u32 %v1233, 4294901760
        %1890 = vmatpush.msra.mxu0 %v1889
        %v1891 = vand.u32 %v1602, 4294901760
        %1892 = vmatmul.f32.gmra.mxu0 %v1891
        %v1893 = vpop.f32.mrf.mxu0
        %v1894 = vadd.f32 %v1872, %v1893
        %1895 = vdwg.mxu0
        %v1896 = vld [vmem:[#allocation4] sm:$0xff]
        %v1898 = vsel %vm377, %v1896, 0
        %1900 = vmatpush.msra.mxu0 0.0
        %1901 = vmatpush.msra.mxu0 0.0
        %1902 = vmatpush.msra.mxu0 0.0
        %1903 = vmatpush.msra.mxu0 0.0
        %1904 = vmatpush.msra.mxu0 0.0
        %1905 = vmatpush.msra.mxu0 0.0
        %1906 = vmatpush.msra.mxu0 0.0
        %1907 = vmatpush.msra.mxu0 0.0
        %1908 = vmatpush.msra.mxu0 0.0
        %1909 = vmatpush.msra.mxu0 0.0
        %1910 = vmatpush.msra.mxu0 0.0
        %1911 = vmatpush.msra.mxu0 0.0
        %1912 = vmatpush.msra.mxu0 0.0
        %1913 = vmatpush.msra.mxu0 0.0
        %1914 = vmatpush.msra.mxu0 0.0
        %v1915 = vand.u32 %v1748, 4294901760
        %1916 = vmatpush.msra.mxu0 %v1915
        %v1917 = vand.u32 %v1898, 4294901760
        %v1918 = vsub.f32 %v1898, %v1917
        %v1919 = vand.u32 %v1918, 4294901760
        %v1920 = vsub.f32 %v1918, %v1919
        %v1921 = vand.u32 %v1920, 4294901760
        %1922 = vmatmul.f32.gmra.mxu0 %v1921
        %v1923 = vpop.f32.mrf.mxu0
        %v1924 = vadd.f32 0.0, %v1923
        %1925 = vdwg.mxu0
        %1926 = vmatpush.msra.mxu0 0.0
        %1927 = vmatpush.msra.mxu0 0.0
        %1928 = vmatpush.msra.mxu0 0.0
        %1929 = vmatpush.msra.mxu0 0.0
        %1930 = vmatpush.msra.mxu0 0.0
        %1931 = vmatpush.msra.mxu0 0.0
        %1932 = vmatpush.msra.mxu0 0.0
        %1933 = vmatpush.msra.mxu0 0.0
        %1934 = vmatpush.msra.mxu0 0.0
        %1935 = vmatpush.msra.mxu0 0.0
        %1936 = vmatpush.msra.mxu0 0.0
        %1937 = vmatpush.msra.mxu0 0.0
        %1938 = vmatpush.msra.mxu0 0.0
        %1939 = vmatpush.msra.mxu0 0.0
        %1940 = vmatpush.msra.mxu0 0.0
        %v1941 = vand.u32 %v1748, 4294901760
        %v1942 = vsub.f32 %v1748, %v1941
        %v1943 = vand.u32 %v1942, 4294901760
        %v1944 = vsub.f32 %v1942, %v1943
        %v1945 = vand.u32 %v1944, 4294901760
        %1946 = vmatpush.msra.mxu0 %v1945
        %v1947 = vand.u32 %v1898, 4294901760
        %1948 = vmatmul.f32.gmra.mxu0 %v1947
        %v1949 = vpop.f32.mrf.mxu0
        %v1950 = vadd.f32 %v1924, %v1949
        %1951 = vdwg.mxu0
        %1952 = vmatpush.msra.mxu0 0.0
        %1953 = vmatpush.msra.mxu0 0.0
        %1954 = vmatpush.msra.mxu0 0.0
        %1955 = vmatpush.msra.mxu0 0.0
        %1956 = vmatpush.msra.mxu0 0.0
        %1957 = vmatpush.msra.mxu0 0.0
        %1958 = vmatpush.msra.mxu0 0.0
        %1959 = vmatpush.msra.mxu0 0.0
        %1960 = vmatpush.msra.mxu0 0.0
        %1961 = vmatpush.msra.mxu0 0.0
        %1962 = vmatpush.msra.mxu0 0.0
        %1963 = vmatpush.msra.mxu0 0.0
        %1964 = vmatpush.msra.mxu0 0.0
        %1965 = vmatpush.msra.mxu0 0.0
        %1966 = vmatpush.msra.mxu0 0.0
        %v1967 = vand.u32 %v1748, 4294901760
        %v1968 = vsub.f32 %v1748, %v1967
        %1969 = vmatpush.msra.mxu0 %v1968
        %v1970 = vand.u32 %v1898, 4294901760
        %v1971 = vsub.f32 %v1898, %v1970
        %1972 = vmatmul.f32.gmra.mxu0 %v1971
        %v1973 = vpop.f32.mrf.mxu0
        %v1974 = vadd.f32 %v1950, %v1973
        %1975 = vdwg.mxu0
        %1976 = vmatpush.msra.mxu0 0.0
        %1977 = vmatpush.msra.mxu0 0.0
        %1978 = vmatpush.msra.mxu0 0.0
        %1979 = vmatpush.msra.mxu0 0.0
        %1980 = vmatpush.msra.mxu0 0.0
        %1981 = vmatpush.msra.mxu0 0.0
        %1982 = vmatpush.msra.mxu0 0.0
        %1983 = vmatpush.msra.mxu0 0.0
        %1984 = vmatpush.msra.mxu0 0.0
        %1985 = vmatpush.msra.mxu0 0.0
        %1986 = vmatpush.msra.mxu0 0.0
        %1987 = vmatpush.msra.mxu0 0.0
        %1988 = vmatpush.msra.mxu0 0.0
        %1989 = vmatpush.msra.mxu0 0.0
        %1990 = vmatpush.msra.mxu0 0.0
        %v1991 = vand.u32 %v1748, 4294901760
        %1992 = vmatpush.msra.mxu0 %v1991
        %v1993 = vand.u32 %v1898, 4294901760
        %v1994 = vsub.f32 %v1898, %v1993
        %v1995 = vand.u32 %v1994, 4294901760
        %1996 = vmatmul.f32.gmra.mxu0 %v1995
        %v1997 = vpop.f32.mrf.mxu0
        %v1998 = vadd.f32 %v1974, %v1997
        %1999 = vdwg.mxu0
        %2000 = vmatpush.msra.mxu0 0.0
        %2001 = vmatpush.msra.mxu0 0.0
        %2002 = vmatpush.msra.mxu0 0.0
        %2003 = vmatpush.msra.mxu0 0.0
        %2004 = vmatpush.msra.mxu0 0.0
        %2005 = vmatpush.msra.mxu0 0.0
        %2006 = vmatpush.msra.mxu0 0.0
        %2007 = vmatpush.msra.mxu0 0.0
        %2008 = vmatpush.msra.mxu0 0.0
        %2009 = vmatpush.msra.mxu0 0.0
        %2010 = vmatpush.msra.mxu0 0.0
        %2011 = vmatpush.msra.mxu0 0.0
        %2012 = vmatpush.msra.mxu0 0.0
        %2013 = vmatpush.msra.mxu0 0.0
        %2014 = vmatpush.msra.mxu0 0.0
        %v2015 = vand.u32 %v1748, 4294901760
        %v2016 = vsub.f32 %v1748, %v2015
        %v2017 = vand.u32 %v2016, 4294901760
        %2018 = vmatpush.msra.mxu0 %v2017
        %v2019 = vand.u32 %v1898, 4294901760
        %2020 = vmatmul.f32.gmra.mxu0 %v2019
        %v2021 = vpop.f32.mrf.mxu0
        %v2022 = vadd.f32 %v1998, %v2021
        %2023 = vdwg.mxu0
        %2024 = vmatpush.msra.mxu0 0.0
        %2025 = vmatpush.msra.mxu0 0.0
        %2026 = vmatpush.msra.mxu0 0.0
        %2027 = vmatpush.msra.mxu0 0.0
        %2028 = vmatpush.msra.mxu0 0.0
        %2029 = vmatpush.msra.mxu0 0.0
        %2030 = vmatpush.msra.mxu0 0.0
        %2031 = vmatpush.msra.mxu0 0.0
        %2032 = vmatpush.msra.mxu0 0.0
        %2033 = vmatpush.msra.mxu0 0.0
        %2034 = vmatpush.msra.mxu0 0.0
        %2035 = vmatpush.msra.mxu0 0.0
        %2036 = vmatpush.msra.mxu0 0.0
        %2037 = vmatpush.msra.mxu0 0.0
        %2038 = vmatpush.msra.mxu0 0.0
        %v2039 = vand.u32 %v1748, 4294901760
        %2040 = vmatpush.msra.mxu0 %v2039
        %v2041 = vand.u32 %v1898, 4294901760
        %2042 = vmatmul.f32.gmra.mxu0 %v2041
        %v2043 = vpop.f32.mrf.mxu0
        %v2044 = vadd.f32 %v2022, %v2043
        %2045 = vdwg.mxu0
        %2046 = vmatpush.msra.mxu0 0.0
        %2047 = vmatpush.msra.mxu0 0.0
        %2048 = vmatpush.msra.mxu0 0.0
        %2049 = vmatpush.msra.mxu0 0.0
        %2050 = vmatpush.msra.mxu0 0.0
        %2051 = vmatpush.msra.mxu0 0.0
        %2052 = vmatpush.msra.mxu0 0.0
        %2053 = vmatpush.msra.mxu0 0.0
        %2054 = vmatpush.msra.mxu0 0.0
        %2055 = vmatpush.msra.mxu0 0.0
        %2056 = vmatpush.msra.mxu0 0.0
        %2057 = vmatpush.msra.mxu0 0.0
        %2058 = vmatpush.msra.mxu0 0.0
        %2059 = vmatpush.msra.mxu0 0.0
        %2060 = vmatpush.msra.mxu0 0.0
        %v2061 = vand.u32 %v1894, 4294901760
        %2062 = vmatpush.msra.mxu0 %v2061
        %v2063 = vand.u32 %v1898, 4294901760
        %v2064 = vsub.f32 %v1898, %v2063
        %v2065 = vand.u32 %v2064, 4294901760
        %v2066 = vsub.f32 %v2064, %v2065
        %v2067 = vand.u32 %v2066, 4294901760
        %2068 = vmatmul.f32.gmra.mxu0 %v2067
        %v2069 = vpop.f32.mrf.mxu0
        %v2070 = vadd.f32 0.0, %v2069
        %2071 = vdwg.mxu0
        %2072 = vmatpush.msra.mxu0 0.0
        %2073 = vmatpush.msra.mxu0 0.0
        %2074 = vmatpush.msra.mxu0 0.0
        %2075 = vmatpush.msra.mxu0 0.0
        %2076 = vmatpush.msra.mxu0 0.0
        %2077 = vmatpush.msra.mxu0 0.0
        %2078 = vmatpush.msra.mxu0 0.0
        %2079 = vmatpush.msra.mxu0 0.0
        %2080 = vmatpush.msra.mxu0 0.0
        %2081 = vmatpush.msra.mxu0 0.0
        %2082 = vmatpush.msra.mxu0 0.0
        %2083 = vmatpush.msra.mxu0 0.0
        %2084 = vmatpush.msra.mxu0 0.0
        %2085 = vmatpush.msra.mxu0 0.0
        %2086 = vmatpush.msra.mxu0 0.0
        %v2087 = vand.u32 %v1894, 4294901760
        %v2088 = vsub.f32 %v1894, %v2087
        %v2089 = vand.u32 %v2088, 4294901760
        %v2090 = vsub.f32 %v2088, %v2089
        %v2091 = vand.u32 %v2090, 4294901760
        %2092 = vmatpush.msra.mxu0 %v2091
        %v2093 = vand.u32 %v1898, 4294901760
        %2094 = vmatmul.f32.gmra.mxu0 %v2093
        %v2095 = vpop.f32.mrf.mxu0
        %v2096 = vadd.f32 %v2070, %v2095
        %2097 = vdwg.mxu0
        %2098 = vmatpush.msra.mxu0 0.0
        %2099 = vmatpush.msra.mxu0 0.0
        %2100 = vmatpush.msra.mxu0 0.0
        %2101 = vmatpush.msra.mxu0 0.0
        %2102 = vmatpush.msra.mxu0 0.0
        %2103 = vmatpush.msra.mxu0 0.0
        %2104 = vmatpush.msra.mxu0 0.0
        %2105 = vmatpush.msra.mxu0 0.0
        %2106 = vmatpush.msra.mxu0 0.0
        %2107 = vmatpush.msra.mxu0 0.0
        %2108 = vmatpush.msra.mxu0 0.0
        %2109 = vmatpush.msra.mxu0 0.0
        %2110 = vmatpush.msra.mxu0 0.0
        %2111 = vmatpush.msra.mxu0 0.0
        %2112 = vmatpush.msra.mxu0 0.0
        %v2113 = vand.u32 %v1894, 4294901760
        %v2114 = vsub.f32 %v1894, %v2113
        %2115 = vmatpush.msra.mxu0 %v2114
        %v2116 = vand.u32 %v1898, 4294901760
        %v2117 = vsub.f32 %v1898, %v2116
        %2118 = vmatmul.f32.gmra.mxu0 %v2117
        %v2119 = vpop.f32.mrf.mxu0
        %v2120 = vadd.f32 %v2096, %v2119
        %2121 = vdwg.mxu0
        %2122 = vmatpush.msra.mxu0 0.0
        %2123 = vmatpush.msra.mxu0 0.0
        %2124 = vmatpush.msra.mxu0 0.0
        %2125 = vmatpush.msra.mxu0 0.0
        %2126 = vmatpush.msra.mxu0 0.0
        %2127 = vmatpush.msra.mxu0 0.0
        %2128 = vmatpush.msra.mxu0 0.0
        %2129 = vmatpush.msra.mxu0 0.0
        %2130 = vmatpush.msra.mxu0 0.0
        %2131 = vmatpush.msra.mxu0 0.0
        %2132 = vmatpush.msra.mxu0 0.0
        %2133 = vmatpush.msra.mxu0 0.0
        %2134 = vmatpush.msra.mxu0 0.0
        %2135 = vmatpush.msra.mxu0 0.0
        %2136 = vmatpush.msra.mxu0 0.0
        %v2137 = vand.u32 %v1894, 4294901760
        %2138 = vmatpush.msra.mxu0 %v2137
        %v2139 = vand.u32 %v1898, 4294901760
        %v2140 = vsub.f32 %v1898, %v2139
        %v2141 = vand.u32 %v2140, 4294901760
        %2142 = vmatmul.f32.gmra.mxu0 %v2141
        %v2143 = vpop.f32.mrf.mxu0
        %v2144 = vadd.f32 %v2120, %v2143
        %2145 = vdwg.mxu0
        %2146 = vmatpush.msra.mxu0 0.0
        %2147 = vmatpush.msra.mxu0 0.0
        %2148 = vmatpush.msra.mxu0 0.0
        %2149 = vmatpush.msra.mxu0 0.0
        %2150 = vmatpush.msra.mxu0 0.0
        %2151 = vmatpush.msra.mxu0 0.0
        %2152 = vmatpush.msra.mxu0 0.0
        %2153 = vmatpush.msra.mxu0 0.0
        %2154 = vmatpush.msra.mxu0 0.0
        %2155 = vmatpush.msra.mxu0 0.0
        %2156 = vmatpush.msra.mxu0 0.0
        %2157 = vmatpush.msra.mxu0 0.0
        %2158 = vmatpush.msra.mxu0 0.0
        %2159 = vmatpush.msra.mxu0 0.0
        %2160 = vmatpush.msra.mxu0 0.0
        %v2161 = vand.u32 %v1894, 4294901760
        %v2162 = vsub.f32 %v1894, %v2161
        %v2163 = vand.u32 %v2162, 4294901760
        %2164 = vmatpush.msra.mxu0 %v2163
        %v2165 = vand.u32 %v1898, 4294901760
        %2166 = vmatmul.f32.gmra.mxu0 %v2165
        %v2167 = vpop.f32.mrf.mxu0
        %v2168 = vadd.f32 %v2144, %v2167
        %2169 = vdwg.mxu0
        %2170 = vmatpush.msra.mxu0 0.0
        %2171 = vmatpush.msra.mxu0 0.0
        %2172 = vmatpush.msra.mxu0 0.0
        %2173 = vmatpush.msra.mxu0 0.0
        %2174 = vmatpush.msra.mxu0 0.0
        %2175 = vmatpush.msra.mxu0 0.0
        %2176 = vmatpush.msra.mxu0 0.0
        %2177 = vmatpush.msra.mxu0 0.0
        %2178 = vmatpush.msra.mxu0 0.0
        %2179 = vmatpush.msra.mxu0 0.0
        %2180 = vmatpush.msra.mxu0 0.0
        %2181 = vmatpush.msra.mxu0 0.0
        %2182 = vmatpush.msra.mxu0 0.0
        %2183 = vmatpush.msra.mxu0 0.0
        %2184 = vmatpush.msra.mxu0 0.0
        %v2185 = vand.u32 %v1894, 4294901760
        %2186 = vmatpush.msra.mxu0 %v2185
        %v2187 = vand.u32 %v1898, 4294901760
        %2188 = vmatmul.f32.gmra.mxu0 %v2187
        %v2189 = vpop.f32.mrf.mxu0
        %v2190 = vadd.f32 %v2168, %v2189
        %2191 = vdwg.mxu0
        %2192 = vst [vmem:[%s364] sm:$0xff] %v2044
        %2193 = vst [vmem:[%s364 + $0x8] sm:$0xff] %v2190
        %p2194 = scmp.lt.s32.totalorder %s22, 1
        %s2195 = scalar_select %p2194, %s22, 1
        %s2196 = smul.addr %s2195, 6
        %s2197 = smul.addr %s2196, 8
        %s2198 = scalar_lea.vmem %s7, %s2197
        %p2199 = scmp.lt.s32.totalorder %s22, 1
        %s2200 = scalar_select %p2199, %s22, 1
        %s2201 = smul.addr %s2200, 2
        %s2202 = smul.addr %s2201, 8
        %s2203 = scalar_lea.vmem %s8, %s2202
        // Predicated region
        $region61: #{_lambda_.2} parent=47 // pred_check
          %p2204 = pneg %p192
        $region62: #{_lambda_.2} parent=47 // pred_check_branch
          %2206 = sbr.rel (%p2204) target = $region64
        $region63: #{_lambda_.2} parent=47 // pred_region
          _
        $region64: #{_lambda_.2} parent=47 // pred_fallthru
          _
        // Predicated region
        $region65: #{_lambda_.2} parent=47 // pred_check
          %p2207 = pneg %p218
        $region66: #{_lambda_.2} parent=47 // pred_check_branch
          %2209 = sbr.rel (%p2207) target = $region68
        $region67: #{_lambda_.2} parent=47 // pred_region
          _
        $region68: #{_lambda_.2} parent=47 // pred_fallthru
          _
      $region48: #{_lambda_.2} parent=5 // pred_fallthru
        _
      %p2210 = scmp.le.s32.totalorder 2, %s17
      // Predicated region
      $region69: #{_lambda_.2} parent=5 // pred_check
        %p2211 = pneg %p2210
      $region70: #{_lambda_.2} parent=5 // pred_check_branch
        %2213 = sbr.rel (%p2211) target = $region72
      $region71: #{_lambda_.2} parent=5 // pred_region
        %s2214 = ssub.s32 %s17, 2
        // Predicated region
        $region73: #{_lambda_.2} parent=71 // pred_check
          %p2215 = pneg %p198
        $region74: #{_lambda_.2} parent=71 // pred_check_branch
          %2217 = sbr.rel (%p2215) target = $region76
        $region75: #{_lambda_.2} parent=71 // pred_region
          %p2218 = scmp.lt.s32.totalorder %s23, 1
          %s2219 = scalar_select %p2218, %s23, 1
          %s2220 = smul.addr %s2219, 6
          %s2221 = smul.addr %s2220, 8
          %s2222 = scalar_lea.vmem %s7, %s2221
        $region76: #{_lambda_.2} parent=71 // pred_fallthru
          _
        // Predicated region
        $region77: #{_lambda_.2} parent=71 // pred_check
          %p2223 = pneg %p224
        $region78: #{_lambda_.2} parent=71 // pred_check_branch
          %2225 = sbr.rel (%p2223) target = $region80
        $region79: #{_lambda_.2} parent=71 // pred_region
          %p2226 = scmp.lt.s32.totalorder %s23, 1
          %s2227 = scalar_select %p2226, %s23, 1
          %s2228 = smul.addr %s2227, 2
          %s2229 = smul.addr %s2228, 8
          %s2230 = scalar_lea.vmem %s8, %s2229
        $region80: #{_lambda_.2} parent=71 // pred_fallthru
          _
      $region72: #{_lambda_.2} parent=5 // pred_fallthru
        _
    $region6: #{_lambda_.2} parent=1 // loop_footer
      %s21 = sadd.s32 1, %s17
    $region7: #{_lambda_.2} parent=1 // loop_footer_branch
      %16 = sbr.rel target = $region3
    $region8: #{_lambda_.2} parent=1 // loop_exit
      _
    %2231 = vsyncpa [#allocation3], 1
    %s2232 = scalar_lea.sflag [#allocation3], 1
    %2233 = vsyncpa %s2232, 1
    %2234 = vsyncpa [#allocation5], 1

// kernel: _lambda_.3
$region0: #{_lambda_.3}
  #allocation0 [shape = 'u32[]', space=smem, size = 0x4, offset = 0x4, fixed_abs, tag = 'smem constant byte address 0x4 - core index']
  #allocation1 [shape = 'u32[72,128]{1,0:T(1,128)}', space=vmem, size = 0x9000, scoped, tag = 'internal scratch']
  %s0 = inlined_call_operand.vmem [shape: f32[2,8,256], index: 0, kind: input, shape index: {}]
  %s1 = inlined_call_operand.vmem [shape: f32[2,24,256], index: 1, kind: input, shape index: {}]
  %s2 = inlined_call_operand.vmem [shape: f32[2,8,256], index: 2, kind: input, shape index: {}]
  %s3 = inlined_call_operand.vmem [shape: f32[9,256], index: 3, kind: input, shape index: {}]
  %s4 = inlined_call_operand.vmem [shape: f32[72,24], index: 4, kind: input, shape index: {}]
  %s5 = inlined_call_operand.vmem [shape: f32[8,256], index: 5, kind: input, shape index: {}]
  %s6 = inlined_call_operand.vmem [shape: f32[72,8], index: 6, kind: input, shape index: {}]
  %s7 = inlined_call_operand.vmem [shape: f32[8,1], index: 7, kind: input, shape index: {}]
  %s8 = inlined_call_operand.vmem [shape: f32[2,8,256], index: 8, kind: output, shape index: {}]
  %s9 = sld [smem:[#allocation0]]
  $region65: #{_lambda_.3} parent=0
    _
  %s11 = ssub.s32 1, %s9
  %s12 = scalar_select 0, %s11, %s9
  loop: start=0, step=1, limit=4
  $region2: #{_lambda_.3} parent=0 // loop_pre_header
    _
  $region3: #{_lambda_.3} parent=0 // loop_header
    %s14 = sphi 0, %s18
    %p15 = scmp.ge.s32.totalorder %s14, 4
    %s24 = sphi 0, %s26
    %s27 = sphi 0, %s24
    %s28 = sphi 0, %s27
    %s44 = sphi 0, %s28
    %s50 = sphi 0, %s52
    %s53 = sphi 0, %s50
    %s54 = sphi 0, %s53
    %s70 = sphi 0, %s54
    %s76 = sphi 0, %s78
    %s79 = sphi 0, %s76
    %s80 = sphi 0, %s79
    %s96 = sphi 0, %s80
    %s100 = sphi 0, %s100
    %s102 = sphi 0, %s100
    %s103 = sphi 0, %s102
    %s117 = sphi 0, %s103
    %s121 = sphi 0, %s121
    %s123 = sphi 0, %s121
    %s124 = sphi 0, %s123
    %s138 = sphi 0, %s124
    %s142 = sphi 0, %s142
    %s144 = sphi 0, %s142
    %s145 = sphi 0, %s144
    %s159 = sphi 0, %s145
    %s163 = sphi 0, %s163
    %s165 = sphi 0, %s163
    %s166 = sphi 0, %s165
    %s180 = sphi 0, %s166
    %s184 = sphi 0, %s184
    %s186 = sphi 0, %s184
    %s187 = sphi 0, %s186
    %s201 = sphi 0, %s187
    %s207 = sphi 0, %s209
    %s210 = sphi 0, %s207
    %s211 = sphi 0, %s210
    %s227 = sphi 0, %s211
  $region4: #{_lambda_.3} parent=0 // loop_header_branch
    %17 = sbr.rel (%p15) target = $region8
  $region5: #{_lambda_.3} parent=0 // loop_body
    %s19 = ssub.s32 %s14, 1
    %s20 = ssub.s32 %s14, 2
    %s21 = sadd.s32 %s14, 1
    %s22 = ssub.s32 %s14, %s21
    %p23 = scmp.eq.s32.totalorder %s22, 0
    %s25 = sadd.s32 %s24, 1
    %s26 = scalar_select %p23, %s24, %s25
    %p29 = pneg %p23
    %p30 = scmp.eq.s32.totalorder %s14, 1
    %p31 = por %p29, %p30
    %p32 = scmp.ne.s32.totalorder %s24, %s27
    %p33 = scmp.eq.s32.totalorder %s14, 0
    %p34 = por %p32, %p33
    %p35 = scmp.ne.s32.totalorder %s24, %s27
    %p36 = scmp.eq.s32.totalorder %s19, 1
    %p37 = por %p35, %p36
    %p38 = scmp.ne.s32.totalorder %s27, %s28
    %p39 = scmp.eq.s32.totalorder %s19, 0
    %p40 = por %p38, %p39
    %p41 = scmp.ne.s32.totalorder %s27, %s28
    %p42 = scmp.eq.s32.totalorder %s20, 1
    %p43 = por %p41, %p42
    %p45 = scmp.ne.s32.totalorder %s28, %s44
    %p46 = scmp.eq.s32.totalorder %s20, 0
    %p47 = por %p45, %p46
    %s48 = ssub.s32 %s14, %s21
    %p49 = scmp.eq.s32.totalorder %s48, 0
    %s51 = sadd.s32 %s50, 1
    %s52 = scalar_select %p49, %s50, %s51
    %p55 = pneg %p49
    %p56 = scmp.eq.s32.totalorder %s14, 1
    %p57 = por %p55, %p56
    %p58 = scmp.ne.s32.totalorder %s50, %s53
    %p59 = scmp.eq.s32.totalorder %s14, 0
    %p60 = por %p58, %p59
    %p61 = scmp.ne.s32.totalorder %s50, %s53
    %p62 = scmp.eq.s32.totalorder %s19, 1
    %p63 = por %p61, %p62
    %p64 = scmp.ne.s32.totalorder %s53, %s54
    %p65 = scmp.eq.s32.totalorder %s19, 0
    %p66 = por %p64, %p65
    %p67 = scmp.ne.s32.totalorder %s53, %s54
    %p68 = scmp.eq.s32.totalorder %s20, 1
    %p69 = por %p67, %p68
    %p71 = scmp.ne.s32.totalorder %s54, %s70
    %p72 = scmp.eq.s32.totalorder %s20, 0
    %p73 = por %p71, %p72
    %s74 = ssub.s32 %s14, %s21
    %p75 = scmp.eq.s32.totalorder %s74, 0
    %s77 = sadd.s32 %s76, 1
    %s78 = scalar_select %p75, %s76, %s77
    %p81 = pneg %p75
    %p82 = scmp.eq.s32.totalorder %s14, 1
    %p83 = por %p81, %p82
    %p84 = scmp.ne.s32.totalorder %s76, %s79
    %p85 = scmp.eq.s32.totalorder %s14, 0
    %p86 = por %p84, %p85
    %p87 = scmp.ne.s32.totalorder %s76, %s79
    %p88 = scmp.eq.s32.totalorder %s19, 1
    %p89 = por %p87, %p88
    %p90 = scmp.ne.s32.totalorder %s79, %s80
    %p91 = scmp.eq.s32.totalorder %s19, 0
    %p92 = por %p90, %p91
    %p93 = scmp.ne.s32.totalorder %s79, %s80
    %p94 = scmp.eq.s32.totalorder %s20, 1
    %p95 = por %p93, %p94
    %p97 = scmp.ne.s32.totalorder %s80, %s96
    %p98 = scmp.eq.s32.totalorder %s20, 0
    %p99 = por %p97, %p98
    %s101 = sadd.s32 %s100, 1
    %p104 = scmp.eq.s32.totalorder %s14, 1
    %p105 = scmp.ne.s32.totalorder %s100, %s102
    %p106 = scmp.eq.s32.totalorder %s14, 0
    %p107 = por %p105, %p106
    %p108 = scmp.ne.s32.totalorder %s100, %s102
    %p109 = scmp.eq.s32.totalorder %s19, 1
    %p110 = por %p108, %p109
    %p111 = scmp.ne.s32.totalorder %s102, %s103
    %p112 = scmp.eq.s32.totalorder %s19, 0
    %p113 = por %p111, %p112
    %p114 = scmp.ne.s32.totalorder %s102, %s103
    %p115 = scmp.eq.s32.totalorder %s20, 1
    %p116 = por %p114, %p115
    %p118 = scmp.ne.s32.totalorder %s103, %s117
    %p119 = scmp.eq.s32.totalorder %s20, 0
    %p120 = por %p118, %p119
    %s122 = sadd.s32 %s121, 1
    %p125 = scmp.eq.s32.totalorder %s14, 1
    %p126 = scmp.ne.s32.totalorder %s121, %s123
    %p127 = scmp.eq.s32.totalorder %s14, 0
    %p128 = por %p126, %p127
    %p129 = scmp.ne.s32.totalorder %s121, %s123
    %p130 = scmp.eq.s32.totalorder %s19, 1
    %p131 = por %p129, %p130
    %p132 = scmp.ne.s32.totalorder %s123, %s124
    %p133 = scmp.eq.s32.totalorder %s19, 0
    %p134 = por %p132, %p133
    %p135 = scmp.ne.s32.totalorder %s123, %s124
    %p136 = scmp.eq.s32.totalorder %s20, 1
    %p137 = por %p135, %p136
    %p139 = scmp.ne.s32.totalorder %s124, %s138
    %p140 = scmp.eq.s32.totalorder %s20, 0
    %p141 = por %p139, %p140
    %s143 = sadd.s32 %s142, 1
    %p146 = scmp.eq.s32.totalorder %s14, 1
    %p147 = scmp.ne.s32.totalorder %s142, %s144
    %p148 = scmp.eq.s32.totalorder %s14, 0
    %p149 = por %p147, %p148
    %p150 = scmp.ne.s32.totalorder %s142, %s144
    %p151 = scmp.eq.s32.totalorder %s19, 1
    %p152 = por %p150, %p151
    %p153 = scmp.ne.s32.totalorder %s144, %s145
    %p154 = scmp.eq.s32.totalorder %s19, 0
    %p155 = por %p153, %p154
    %p156 = scmp.ne.s32.totalorder %s144, %s145
    %p157 = scmp.eq.s32.totalorder %s20, 1
    %p158 = por %p156, %p157
    %p160 = scmp.ne.s32.totalorder %s145, %s159
    %p161 = scmp.eq.s32.totalorder %s20, 0
    %p162 = por %p160, %p161
    %s164 = sadd.s32 %s163, 1
    %p167 = scmp.eq.s32.totalorder %s14, 1
    %p168 = scmp.ne.s32.totalorder %s163, %s165
    %p169 = scmp.eq.s32.totalorder %s14, 0
    %p170 = por %p168, %p169
    %p171 = scmp.ne.s32.totalorder %s163, %s165
    %p172 = scmp.eq.s32.totalorder %s19, 1
    %p173 = por %p171, %p172
    %p174 = scmp.ne.s32.totalorder %s165, %s166
    %p175 = scmp.eq.s32.totalorder %s19, 0
    %p176 = por %p174, %p175
    %p177 = scmp.ne.s32.totalorder %s165, %s166
    %p178 = scmp.eq.s32.totalorder %s20, 1
    %p179 = por %p177, %p178
    %p181 = scmp.ne.s32.totalorder %s166, %s180
    %p182 = scmp.eq.s32.totalorder %s20, 0
    %p183 = por %p181, %p182
    %s185 = sadd.s32 %s184, 1
    %p188 = scmp.eq.s32.totalorder %s14, 1
    %p189 = scmp.ne.s32.totalorder %s184, %s186
    %p190 = scmp.eq.s32.totalorder %s14, 0
    %p191 = por %p189, %p190
    %p192 = scmp.ne.s32.totalorder %s184, %s186
    %p193 = scmp.eq.s32.totalorder %s19, 1
    %p194 = por %p192, %p193
    %p195 = scmp.ne.s32.totalorder %s186, %s187
    %p196 = scmp.eq.s32.totalorder %s19, 0
    %p197 = por %p195, %p196
    %p198 = scmp.ne.s32.totalorder %s186, %s187
    %p199 = scmp.eq.s32.totalorder %s20, 1
    %p200 = por %p198, %p199
    %p202 = scmp.ne.s32.totalorder %s187, %s201
    %p203 = scmp.eq.s32.totalorder %s20, 0
    %p204 = por %p202, %p203
    %s205 = ssub.s32 %s14, %s21
    %p206 = scmp.eq.s32.totalorder %s205, 0
    %s208 = sadd.s32 %s207, 1
    %s209 = scalar_select %p206, %s207, %s208
    %p212 = pneg %p206
    %p213 = scmp.eq.s32.totalorder %s14, 1
    %p214 = por %p212, %p213
    %p215 = scmp.ne.s32.totalorder %s207, %s210
    %p216 = scmp.eq.s32.totalorder %s14, 0
    %p217 = por %p215, %p216
    %p218 = scmp.ne.s32.totalorder %s207, %s210
    %p219 = scmp.eq.s32.totalorder %s19, 1
    %p220 = por %p218, %p219
    %p221 = scmp.ne.s32.totalorder %s210, %s211
    %p222 = scmp.eq.s32.totalorder %s19, 0
    %p223 = por %p221, %p222
    %p224 = scmp.ne.s32.totalorder %s210, %s211
    %p225 = scmp.eq.s32.totalorder %s20, 1
    %p226 = por %p224, %p225
    %p228 = scmp.ne.s32.totalorder %s211, %s227
    %p229 = scmp.eq.s32.totalorder %s20, 0
    %p230 = por %p228, %p229
    %p231 = scmp.le.s32.totalorder 1, %s14
    %p232 = scmp.lt.s32.totalorder %s14, 3
    %p233 = pnand %p231, %p232
    %p234 = pneg %p233
    // Predicated region
    $region9: #{_lambda_.3} parent=5 // pred_check
      _
    $region10: #{_lambda_.3} parent=5 // pred_check_branch
      %236 = sbr.rel (%p233) target = $region12
    $region11: #{_lambda_.3} parent=5 // pred_region
      %s237 = ssub.s32 %s14, 1
      // Predicated region
      $region13: #{_lambda_.3} parent=11 // pred_check
        %p238 = pneg %p113
      $region14: #{_lambda_.3} parent=11 // pred_check_branch
        %240 = sbr.rel (%p238) target = $region16
      $region15: #{_lambda_.3} parent=11 // pred_region
        _
      $region16: #{_lambda_.3} parent=11 // pred_fallthru
        _
      // Predicated region
      $region17: #{_lambda_.3} parent=11 // pred_check
        %p241 = pneg %p134
      $region18: #{_lambda_.3} parent=11 // pred_check_branch
        %243 = sbr.rel (%p241) target = $region20
      $region19: #{_lambda_.3} parent=11 // pred_region
        _
      $region20: #{_lambda_.3} parent=11 // pred_fallthru
        _
      // Predicated region
      $region21: #{_lambda_.3} parent=11 // pred_check
        %p244 = pneg %p155
      $region22: #{_lambda_.3} parent=11 // pred_check_branch
        %246 = sbr.rel (%p244) target = $region24
      $region23: #{_lambda_.3} parent=11 // pred_region
        _
      $region24: #{_lambda_.3} parent=11 // pred_fallthru
        _
      // Predicated region
      $region25: #{_lambda_.3} parent=11 // pred_check
        %p247 = pneg %p176
      $region26: #{_lambda_.3} parent=11 // pred_check_branch
        %249 = sbr.rel (%p247) target = $region28
      $region27: #{_lambda_.3} parent=11 // pred_region
        _
      $region28: #{_lambda_.3} parent=11 // pred_fallthru
        _
      // Predicated region
      $region29: #{_lambda_.3} parent=11 // pred_check
        %p250 = pneg %p197
      $region30: #{_lambda_.3} parent=11 // pred_check_branch
        %252 = sbr.rel (%p250) target = $region32
      $region31: #{_lambda_.3} parent=11 // pred_region
        _
      $region32: #{_lambda_.3} parent=11 // pred_fallthru
        _
    $region12: #{_lambda_.3} parent=5 // pred_fallthru
      _
    %p253 = scmp.lt.s32.totalorder %s14, 2
    // Predicated region
    $region33: #{_lambda_.3} parent=5 // pred_check
      %p254 = pneg %p253
    $region34: #{_lambda_.3} parent=5 // pred_check_branch
      %256 = sbr.rel (%p254) target = $region36
    $region35: #{_lambda_.3} parent=5 // pred_region
      // Predicated region
      $region37: #{_lambda_.3} parent=35 // pred_check
        %p257 = pneg %p34
      $region38: #{_lambda_.3} parent=35 // pred_check_branch
        %259 = sbr.rel (%p257) target = $region40
      $region39: #{_lambda_.3} parent=35 // pred_region
        %p260 = scmp.lt.s32.totalorder %s14, 1
        %s261 = scalar_select %p260, %s14, 1
        %s262 = smul.addr %s261, 2
        %s263 = smul.addr %s262, 8
        %s264 = scalar_lea.vmem %s0, %s263
      $region40: #{_lambda_.3} parent=35 // pred_fallthru
        _
      // Predicated region
      $region41: #{_lambda_.3} parent=35 // pred_check
        %p265 = pneg %p60
      $region42: #{_lambda_.3} parent=35 // pred_check_branch
        %267 = sbr.rel (%p265) target = $region44
      $region43: #{_lambda_.3} parent=35 // pred_region
        %p268 = scmp.lt.s32.totalorder %s14, 1
        %s269 = scalar_select %p268, %s14, 1
        %s270 = smul.addr %s269, 6
        %s271 = smul.addr %s270, 8
        %s272 = scalar_lea.vmem %s1, %s271
      $region44: #{_lambda_.3} parent=35 // pred_fallthru
        _
      // Predicated region
      $region45: #{_lambda_.3} parent=35 // pred_check
        %p273 = pneg %p86
      $region46: #{_lambda_.3} parent=35 // pred_check_branch
        %275 = sbr.rel (%p273) target = $region48
      $region47: #{_lambda_.3} parent=35 // pred_region
        %p276 = scmp.lt.s32.totalorder %s14, 1
        %s277 = scalar_select %p276, %s14, 1
        %s278 = smul.addr %s277, 2
        %s279 = smul.addr %s278, 8
        %s280 = scalar_lea.vmem %s2, %s279
      $region48: #{_lambda_.3} parent=35 // pred_fallthru
        _
    $region36: #{_lambda_.3} parent=5 // pred_fallthru
      _
    %p281 = scmp.le.s32.totalorder 1, %s14
    %p282 = scmp.lt.s32.totalorder %s14, 3
    %p283 = pnand %p281, %p282
    %p284 = pneg %p283
    // Predicated region
    $region49: #{_lambda_.3} parent=5 // pred_check
      _
    $region50: #{_lambda_.3} parent=5 // pred_check_branch
      %286 = sbr.rel (%p283) target = $region52
    $region51: #{_lambda_.3} parent=5 // pred_region
      %s287 = ssub.s32 %s14, 1
      %p288 = scmp.lt.s32.totalorder %s19, 1
      %s289 = scalar_select %p288, %s19, 1
      %s290 = smul.addr %s289, 2
      %s291 = smul.addr %s290, 8
      %s292 = scalar_lea.vmem %s0, %s291
      %p293 = pneg %p40
      %p294 = pneg %p37
      %p295 = scmp.lt.s32.totalorder %s19, 1
      %s296 = scalar_select %p295, %s19, 1
      %s297 = smul.addr %s296, 6
      %s298 = smul.addr %s297, 8
      %s299 = scalar_lea.vmem %s1, %s298
      %p300 = pneg %p66
      %p301 = pneg %p63
      %p302 = scmp.lt.s32.totalorder %s19, 1
      %s303 = scalar_select %p302, %s19, 1
      %s304 = smul.addr %s303, 2
      %s305 = smul.addr %s304, 8
      %s306 = scalar_lea.vmem %s2, %s305
      %p307 = pneg %p92
      %p308 = pneg %p89
      %p309 = pneg %p113
      %p310 = pneg %p110
      %p311 = pneg %p134
      %p312 = pneg %p131
      %p313 = pneg %p155
      %p314 = pneg %p152
      %p315 = pneg %p176
      %p316 = pneg %p173
      %p317 = pneg %p197
      %p318 = pneg %p194
      %p319 = pneg %p223
      %p320 = pneg %p220
      %p321 = scmp.lt.s32.totalorder %s19, 1
      %s322 = scalar_select %p321, %s19, 1
      %s323 = smul.addr %s322, 2
      %s324 = smul.addr %s323, 8
      %s325 = scalar_lea.vmem %s8, %s324
      %p326 = scmp.lt.s32.totalorder %s19, 1
      %s327 = scalar_select %p326, %s19, 1
      %s328 = smul.addr %s327, 2
      %s329 = smul.addr %s328, 8
      %s330 = scalar_lea.vmem %s0, %s329
      %p331 = scmp.lt.s32.totalorder %s19, 1
      %s332 = scalar_select %p331, %s19, 1
      %s333 = smul.addr %s332, 6
      %s334 = smul.addr %s333, 8
      %s335 = scalar_lea.vmem %s1, %s334
      %p336 = scmp.lt.s32.totalorder %s19, 1
      %s337 = scalar_select %p336, %s19, 1
      %s338 = smul.addr %s337, 2
      %s339 = smul.addr %s338, 8
      %s340 = scalar_lea.vmem %s2, %s339
      %p341 = scmp.lt.s32.totalorder %s19, 1
      %s342 = scalar_select %p341, %s19, 1
      %s343 = smul.addr %s342, 2
      %s344 = smul.addr %s343, 8
      %s345 = scalar_lea.vmem %s8, %s344
      %v346 = vld [vmem:[%s3] sm:$0xff]
      %v347 = vld [vmem:[%s3 + $0x8] sm:$0xff]
      %v348 = vld [vmem:[%s3 + $0x10] sm:$0x1]
      %v349 = vld [vmem:[%s3 + $0x18] sm:$0x1]
      %v350 = vld [vmem:[%s335] sm:$0xff]
      %v351 = vld [vmem:[%s335 + $0x8] sm:$0xff]
      %v352 = vld [vmem:[%s335 + $0x10] sm:$0xff]
      %v353 = vld [vmem:[%s335 + $0x18] sm:$0xff]
      %v354 = vld [vmem:[%s335 + $0x20] sm:$0xff]
      %v355 = vld [vmem:[%s335 + $0x28] sm:$0xff]
      %v356 = vld [vmem:[%s4] sm:$0xff]
      %v357 = vld [vmem:[%s4 + $0x8] sm:$0xff]
      %v358 = vld [vmem:[%s4 + $0x10] sm:$0xff]
      %v359 = vld [vmem:[%s4 + $0x18] sm:$0xff]
      %v360 = vld [vmem:[%s4 + $0x20] sm:$0xff]
      %v361 = vld [vmem:[%s4 + $0x28] sm:$0xff]
      %v362 = vld [vmem:[%s4 + $0x30] sm:$0xff]
      %v363 = vld [vmem:[%s4 + $0x38] sm:$0xff]
      %v364 = vld [vmem:[%s4 + $0x40] sm:$0xff]
      %vm365 = vcmask 195584
      %v367 = vsel %vm365, %v356, 0
      %v370 = vsel %vm365, %v357, 0
      %v373 = vsel %vm365, %v358, 0
      %v376 = vsel %vm365, %v359, 0
      %v379 = vsel %vm365, %v360, 0
      %v382 = vsel %vm365, %v361, 0
      %v385 = vsel %vm365, %v362, 0
      %v388 = vsel %vm365, %v363, 0
      %v391 = vsel %vm365, %v364, 0
      %393 = vmatpush.msra.mxu0 0.0
      %394 = vmatpush.msra.mxu0 0.0
      %395 = vmatpush.msra.mxu0 0.0
      %396 = vmatpush.msra.mxu0 0.0
      %397 = vmatpush.msra.mxu0 0.0
      %398 = vmatpush.msra.mxu0 0.0
      %399 = vmatpush.msra.mxu0 0.0
      %400 = vmatpush.msra.mxu0 0.0
      %401 = vmatpush.msra.mxu0 0.0
      %402 = vmatpush.msra.mxu0 0.0
      %403 = vmatpush.msra.mxu0 0.0
      %404 = vmatpush.msra.mxu0 0.0
      %405 = vmatpush.msra.mxu0 0.0
      %v406 = vand.u32 %v354, 4294901760
      %407 = vmatpush.msra.mxu0 %v406
      %v408 = vand.u32 %v352, 4294901760
      %409 = vmatpush.msra.mxu0 %v408
      %v410 = vand.u32 %v350, 4294901760
      %411 = vmatpush.msra.mxu0 %v410
      %v412 = vand.u32 %v367, 4294901760
      %v413 = vsub.f32 %v367, %v412
      %v414 = vand.u32 %v413, 4294901760
      %v415 = vsub.f32 %v413, %v414
      %v416 = vand.u32 %v415, 4294901760
      %417 = vmatmul.f32.gmra.mxu0 %v416
      %v418 = vpop.f32.mrf.mxu0
      %v419 = vadd.f32 0.0, %v418
      %v420 = vand.u32 %v370, 4294901760
      %v421 = vsub.f32 %v370, %v420
      %v422 = vand.u32 %v421, 4294901760
      %v423 = vsub.f32 %v421, %v422
      %v424 = vand.u32 %v423, 4294901760
      %425 = vmatmul.f32.gmra.mxu0 %v424
      %v426 = vpop.f32.mrf.mxu0
      %v427 = vadd.f32 0.0, %v426
      %v428 = vand.u32 %v373, 4294901760
      %v429 = vsub.f32 %v373, %v428
      %v430 = vand.u32 %v429, 4294901760
      %v431 = vsub.f32 %v429, %v430
      %v432 = vand.u32 %v431, 4294901760
      %433 = vmatmul.f32.gmra.mxu0 %v432
      %v434 = vpop.f32.mrf.mxu0
      %v435 = vadd.f32 0.0, %v434
      %v436 = vand.u32 %v376, 4294901760
      %v437 = vsub.f32 %v376, %v436
      %v438 = vand.u32 %v437, 4294901760
      %v439 = vsub.f32 %v437, %v438
      %v440 = vand.u32 %v439, 4294901760
      %441 = vmatmul.f32.gmra.mxu0 %v440
      %v442 = vpop.f32.mrf.mxu0
      %v443 = vadd.f32 0.0, %v442
      %v444 = vand.u32 %v379, 4294901760
      %v445 = vsub.f32 %v379, %v444
      %v446 = vand.u32 %v445, 4294901760
      %v447 = vsub.f32 %v445, %v446
      %v448 = vand.u32 %v447, 4294901760
      %449 = vmatmul.f32.gmra.mxu0 %v448
      %v450 = vpop.f32.mrf.mxu0
      %v451 = vadd.f32 0.0, %v450
      %v452 = vand.u32 %v382, 4294901760
      %v453 = vsub.f32 %v382, %v452
      %v454 = vand.u32 %v453, 4294901760
      %v455 = vsub.f32 %v453, %v454
      %v456 = vand.u32 %v455, 4294901760
      %457 = vmatmul.f32.gmra.mxu0 %v456
      %v458 = vpop.f32.mrf.mxu0
      %v459 = vadd.f32 0.0, %v458
      %v460 = vand.u32 %v385, 4294901760
      %v461 = vsub.f32 %v385, %v460
      %v462 = vand.u32 %v461, 4294901760
      %v463 = vsub.f32 %v461, %v462
      %v464 = vand.u32 %v463, 4294901760
      %465 = vmatmul.f32.gmra.mxu0 %v464
      %v466 = vpop.f32.mrf.mxu0
      %v467 = vadd.f32 0.0, %v466
      %v468 = vand.u32 %v388, 4294901760
      %v469 = vsub.f32 %v388, %v468
      %v470 = vand.u32 %v469, 4294901760
      %v471 = vsub.f32 %v469, %v470
      %v472 = vand.u32 %v471, 4294901760
      %473 = vmatmul.f32.gmra.mxu0 %v472
      %v474 = vpop.f32.mrf.mxu0
      %v475 = vadd.f32 0.0, %v474
      %v476 = vand.u32 %v391, 4294901760
      %v477 = vsub.f32 %v391, %v476
      %v478 = vand.u32 %v477, 4294901760
      %v479 = vsub.f32 %v477, %v478
      %v480 = vand.u32 %v479, 4294901760
      %481 = vmatmul.f32.gmra.mxu0 %v480
      %v482 = vpop.f32.mrf.mxu0
      %v483 = vadd.f32 0.0, %v482
      %484 = vdwg.mxu0
      %485 = vmatpush.msra.mxu0 0.0
      %486 = vmatpush.msra.mxu0 0.0
      %487 = vmatpush.msra.mxu0 0.0
      %488 = vmatpush.msra.mxu0 0.0
      %489 = vmatpush.msra.mxu0 0.0
      %490 = vmatpush.msra.mxu0 0.0
      %491 = vmatpush.msra.mxu0 0.0
      %492 = vmatpush.msra.mxu0 0.0
      %493 = vmatpush.msra.mxu0 0.0
      %494 = vmatpush.msra.mxu0 0.0
      %495 = vmatpush.msra.mxu0 0.0
      %496 = vmatpush.msra.mxu0 0.0
      %497 = vmatpush.msra.mxu0 0.0
      %v498 = vand.u32 %v354, 4294901760
      %v499 = vsub.f32 %v354, %v498
      %v500 = vand.u32 %v499, 4294901760
      %v501 = vsub.f32 %v499, %v500
      %v502 = vand.u32 %v501, 4294901760
      %503 = vmatpush.msra.mxu0 %v502
      %v504 = vand.u32 %v352, 4294901760
      %v505 = vsub.f32 %v352, %v504
      %v506 = vand.u32 %v505, 4294901760
      %v507 = vsub.f32 %v505, %v506
      %v508 = vand.u32 %v507, 4294901760
      %509 = vmatpush.msra.mxu0 %v508
      %v510 = vand.u32 %v350, 4294901760
      %v511 = vsub.f32 %v350, %v510
      %v512 = vand.u32 %v511, 4294901760
      %v513 = vsub.f32 %v511, %v512
      %v514 = vand.u32 %v513, 4294901760
      %515 = vmatpush.msra.mxu0 %v514
      %v516 = vand.u32 %v367, 4294901760
      %517 = vmatmul.f32.gmra.mxu0 %v516
      %v518 = vpop.f32.mrf.mxu0
      %v519 = vadd.f32 %v419, %v518
      %v520 = vand.u32 %v370, 4294901760
      %521 = vmatmul.f32.gmra.mxu0 %v520
      %v522 = vpop.f32.mrf.mxu0
      %v523 = vadd.f32 %v427, %v522
      %v524 = vand.u32 %v373, 4294901760
      %525 = vmatmul.f32.gmra.mxu0 %v524
      %v526 = vpop.f32.mrf.mxu0
      %v527 = vadd.f32 %v435, %v526
      %v528 = vand.u32 %v376, 4294901760
      %529 = vmatmul.f32.gmra.mxu0 %v528
      %v530 = vpop.f32.mrf.mxu0
      %v531 = vadd.f32 %v443, %v530
      %v532 = vand.u32 %v379, 4294901760
      %533 = vmatmul.f32.gmra.mxu0 %v532
      %v534 = vpop.f32.mrf.mxu0
      %v535 = vadd.f32 %v451, %v534
      %v536 = vand.u32 %v382, 4294901760
      %537 = vmatmul.f32.gmra.mxu0 %v536
      %v538 = vpop.f32.mrf.mxu0
      %v539 = vadd.f32 %v459, %v538
      %v540 = vand.u32 %v385, 4294901760
      %541 = vmatmul.f32.gmra.mxu0 %v540
      %v542 = vpop.f32.mrf.mxu0
      %v543 = vadd.f32 %v467, %v542
      %v544 = vand.u32 %v388, 4294901760
      %545 = vmatmul.f32.gmra.mxu0 %v544
      %v546 = vpop.f32.mrf.mxu0
      %v547 = vadd.f32 %v475, %v546
      %v548 = vand.u32 %v391, 4294901760
      %549 = vmatmul.f32.gmra.mxu0 %v548
      %v550 = vpop.f32.mrf.mxu0
      %v551 = vadd.f32 %v483, %v550
      %552 = vdwg.mxu0
      %553 = vmatpush.msra.mxu0 0.0
      %554 = vmatpush.msra.mxu0 0.0
      %555 = vmatpush.msra.mxu0 0.0
      %556 = vmatpush.msra.mxu0 0.0
      %557 = vmatpush.msra.mxu0 0.0
      %558 = vmatpush.msra.mxu0 0.0
      %559 = vmatpush.msra.mxu0 0.0
      %560 = vmatpush.msra.mxu0 0.0
      %561 = vmatpush.msra.mxu0 0.0
      %562 = vmatpush.msra.mxu0 0.0
      %563 = vmatpush.msra.mxu0 0.0
      %564 = vmatpush.msra.mxu0 0.0
      %565 = vmatpush.msra.mxu0 0.0
      %v566 = vand.u32 %v354, 4294901760
      %v567 = vsub.f32 %v354, %v566
      %568 = vmatpush.msra.mxu0 %v567
      %v569 = vand.u32 %v352, 4294901760
      %v570 = vsub.f32 %v352, %v569
      %571 = vmatpush.msra.mxu0 %v570
      %v572 = vand.u32 %v350, 4294901760
      %v573 = vsub.f32 %v350, %v572
      %574 = vmatpush.msra.mxu0 %v573
      %v575 = vand.u32 %v367, 4294901760
      %v576 = vsub.f32 %v367, %v575
      %577 = vmatmul.f32.gmra.mxu0 %v576
      %v578 = vpop.f32.mrf.mxu0
      %v579 = vadd.f32 %v519, %v578
      %v580 = vand.u32 %v370, 4294901760
      %v581 = vsub.f32 %v370, %v580
      %582 = vmatmul.f32.gmra.mxu0 %v581
      %v583 = vpop.f32.mrf.mxu0
      %v584 = vadd.f32 %v523, %v583
      %v585 = vand.u32 %v373, 4294901760
      %v586 = vsub.f32 %v373, %v585
      %587 = vmatmul.f32.gmra.mxu0 %v586
      %v588 = vpop.f32.mrf.mxu0
      %v589 = vadd.f32 %v527, %v588
      %v590 = vand.u32 %v376, 4294901760
      %v591 = vsub.f32 %v376, %v590
      %592 = vmatmul.f32.gmra.mxu0 %v591
      %v593 = vpop.f32.mrf.mxu0
      %v594 = vadd.f32 %v531, %v593
      %v595 = vand.u32 %v379, 4294901760
      %v596 = vsub.f32 %v379, %v595
      %597 = vmatmul.f32.gmra.mxu0 %v596
      %v598 = vpop.f32.mrf.mxu0
      %v599 = vadd.f32 %v535, %v598
      %v600 = vand.u32 %v382, 4294901760
      %v601 = vsub.f32 %v382, %v600
      %602 = vmatmul.f32.gmra.mxu0 %v601
      %v603 = vpop.f32.mrf.mxu0
      %v604 = vadd.f32 %v539, %v603
      %v605 = vand.u32 %v385, 4294901760
      %v606 = vsub.f32 %v385, %v605
      %607 = vmatmul.f32.gmra.mxu0 %v606
      %v608 = vpop.f32.mrf.mxu0
      %v609 = vadd.f32 %v543, %v608
      %v610 = vand.u32 %v388, 4294901760
      %v611 = vsub.f32 %v388, %v610
      %612 = vmatmul.f32.gmra.mxu0 %v611
      %v613 = vpop.f32.mrf.mxu0
      %v614 = vadd.f32 %v547, %v613
      %v615 = vand.u32 %v391, 4294901760
      %v616 = vsub.f32 %v391, %v615
      %617 = vmatmul.f32.gmra.mxu0 %v616
      %v618 = vpop.f32.mrf.mxu0
      %v619 = vadd.f32 %v551, %v618
      %620 = vdwg.mxu0
      %621 = vmatpush.msra.mxu0 0.0
      %622 = vmatpush.msra.mxu0 0.0
      %623 = vmatpush.msra.mxu0 0.0
      %624 = vmatpush.msra.mxu0 0.0
      %625 = vmatpush.msra.mxu0 0.0
      %626 = vmatpush.msra.mxu0 0.0
      %627 = vmatpush.msra.mxu0 0.0
      %628 = vmatpush.msra.mxu0 0.0
      %629 = vmatpush.msra.mxu0 0.0
      %630 = vmatpush.msra.mxu0 0.0
      %631 = vmatpush.msra.mxu0 0.0
      %632 = vmatpush.msra.mxu0 0.0
      %633 = vmatpush.msra.mxu0 0.0
      %v634 = vand.u32 %v354, 4294901760
      %635 = vmatpush.msra.mxu0 %v634
      %v636 = vand.u32 %v352, 4294901760
      %637 = vmatpush.msra.mxu0 %v636
      %v638 = vand.u32 %v350, 4294901760
      %639 = vmatpush.msra.mxu0 %v638
      %v640 = vand.u32 %v367, 4294901760
      %v641 = vsub.f32 %v367, %v640
      %v642 = vand.u32 %v641, 4294901760
      %643 = vmatmul.f32.gmra.mxu0 %v642
      %v644 = vpop.f32.mrf.mxu0
      %v645 = vadd.f32 %v579, %v644
      %v646 = vand.u32 %v370, 4294901760
      %v647 = vsub.f32 %v370, %v646
      %v648 = vand.u32 %v647, 4294901760
      %649 = vmatmul.f32.gmra.mxu0 %v648
      %v650 = vpop.f32.mrf.mxu0
      %v651 = vadd.f32 %v584, %v650
      %v652 = vand.u32 %v373, 4294901760
      %v653 = vsub.f32 %v373, %v652
      %v654 = vand.u32 %v653, 4294901760
      %655 = vmatmul.f32.gmra.mxu0 %v654
      %v656 = vpop.f32.mrf.mxu0
      %v657 = vadd.f32 %v589, %v656
      %v658 = vand.u32 %v376, 4294901760
      %v659 = vsub.f32 %v376, %v658
      %v660 = vand.u32 %v659, 4294901760
      %661 = vmatmul.f32.gmra.mxu0 %v660
      %v662 = vpop.f32.mrf.mxu0
      %v663 = vadd.f32 %v594, %v662
      %v664 = vand.u32 %v379, 4294901760
      %v665 = vsub.f32 %v379, %v664
      %v666 = vand.u32 %v665, 4294901760
      %667 = vmatmul.f32.gmra.mxu0 %v666
      %v668 = vpop.f32.mrf.mxu0
      %v669 = vadd.f32 %v599, %v668
      %v670 = vand.u32 %v382, 4294901760
      %v671 = vsub.f32 %v382, %v670
      %v672 = vand.u32 %v671, 4294901760
      %673 = vmatmul.f32.gmra.mxu0 %v672
      %v674 = vpop.f32.mrf.mxu0
      %v675 = vadd.f32 %v604, %v674
      %v676 = vand.u32 %v385, 4294901760
      %v677 = vsub.f32 %v385, %v676
      %v678 = vand.u32 %v677, 4294901760
      %679 = vmatmul.f32.gmra.mxu0 %v678
      %v680 = vpop.f32.mrf.mxu0
      %v681 = vadd.f32 %v609, %v680
      %v682 = vand.u32 %v388, 4294901760
      %v683 = vsub.f32 %v388, %v682
      %v684 = vand.u32 %v683, 4294901760
      %685 = vmatmul.f32.gmra.mxu0 %v684
      %v686 = vpop.f32.mrf.mxu0
      %v687 = vadd.f32 %v614, %v686
      %v688 = vand.u32 %v391, 4294901760
      %v689 = vsub.f32 %v391, %v688
      %v690 = vand.u32 %v689, 4294901760
      %691 = vmatmul.f32.gmra.mxu0 %v690
      %v692 = vpop.f32.mrf.mxu0
      %v693 = vadd.f32 %v619, %v692
      %694 = vdwg.mxu0
      %695 = vmatpush.msra.mxu0 0.0
      %696 = vmatpush.msra.mxu0 0.0
      %697 = vmatpush.msra.mxu0 0.0
      %698 = vmatpush.msra.mxu0 0.0
      %699 = vmatpush.msra.mxu0 0.0
      %700 = vmatpush.msra.mxu0 0.0
      %701 = vmatpush.msra.mxu0 0.0
      %702 = vmatpush.msra.mxu0 0.0
      %703 = vmatpush.msra.mxu0 0.0
      %704 = vmatpush.msra.mxu0 0.0
      %705 = vmatpush.msra.mxu0 0.0
      %706 = vmatpush.msra.mxu0 0.0
      %707 = vmatpush.msra.mxu0 0.0
      %v708 = vand.u32 %v354, 4294901760
      %v709 = vsub.f32 %v354, %v708
      %v710 = vand.u32 %v709, 4294901760
      %711 = vmatpush.msra.mxu0 %v710
      %v712 = vand.u32 %v352, 4294901760
      %v713 = vsub.f32 %v352, %v712
      %v714 = vand.u32 %v713, 4294901760
      %715 = vmatpush.msra.mxu0 %v714
      %v716 = vand.u32 %v350, 4294901760
      %v717 = vsub.f32 %v350, %v716
      %v718 = vand.u32 %v717, 4294901760
      %719 = vmatpush.msra.mxu0 %v718
      %v720 = vand.u32 %v367, 4294901760
      %721 = vmatmul.f32.gmra.mxu0 %v720
      %v722 = vpop.f32.mrf.mxu0
      %v723 = vadd.f32 %v645, %v722
      %v724 = vand.u32 %v370, 4294901760
      %725 = vmatmul.f32.gmra.mxu0 %v724
      %v726 = vpop.f32.mrf.mxu0
      %v727 = vadd.f32 %v651, %v726
      %v728 = vand.u32 %v373, 4294901760
      %729 = vmatmul.f32.gmra.mxu0 %v728
      %v730 = vpop.f32.mrf.mxu0
      %v731 = vadd.f32 %v657, %v730
      %v732 = vand.u32 %v376, 4294901760
      %733 = vmatmul.f32.gmra.mxu0 %v732
      %v734 = vpop.f32.mrf.mxu0
      %v735 = vadd.f32 %v663, %v734
      %v736 = vand.u32 %v379, 4294901760
      %737 = vmatmul.f32.gmra.mxu0 %v736
      %v738 = vpop.f32.mrf.mxu0
      %v739 = vadd.f32 %v669, %v738
      %v740 = vand.u32 %v382, 4294901760
      %741 = vmatmul.f32.gmra.mxu0 %v740
      %v742 = vpop.f32.mrf.mxu0
      %v743 = vadd.f32 %v675, %v742
      %v744 = vand.u32 %v385, 4294901760
      %745 = vmatmul.f32.gmra.mxu0 %v744
      %v746 = vpop.f32.mrf.mxu0
      %v747 = vadd.f32 %v681, %v746
      %v748 = vand.u32 %v388, 4294901760
      %749 = vmatmul.f32.gmra.mxu0 %v748
      %v750 = vpop.f32.mrf.mxu0
      %v751 = vadd.f32 %v687, %v750
      %v752 = vand.u32 %v391, 4294901760
      %753 = vmatmul.f32.gmra.mxu0 %v752
      %v754 = vpop.f32.mrf.mxu0
      %v755 = vadd.f32 %v693, %v754
      %756 = vdwg.mxu0
      %757 = vmatpush.msra.mxu0 0.0
      %758 = vmatpush.msra.mxu0 0.0
      %759 = vmatpush.msra.mxu0 0.0
      %760 = vmatpush.msra.mxu0 0.0
      %761 = vmatpush.msra.mxu0 0.0
      %762 = vmatpush.msra.mxu0 0.0
      %763 = vmatpush.msra.mxu0 0.0
      %764 = vmatpush.msra.mxu0 0.0
      %765 = vmatpush.msra.mxu0 0.0
      %766 = vmatpush.msra.mxu0 0.0
      %767 = vmatpush.msra.mxu0 0.0
      %768 = vmatpush.msra.mxu0 0.0
      %769 = vmatpush.msra.mxu0 0.0
      %v770 = vand.u32 %v354, 4294901760
      %771 = vmatpush.msra.mxu0 %v770
      %v772 = vand.u32 %v352, 4294901760
      %773 = vmatpush.msra.mxu0 %v772
      %v774 = vand.u32 %v350, 4294901760
      %775 = vmatpush.msra.mxu0 %v774
      %v776 = vand.u32 %v367, 4294901760
      %777 = vmatmul.f32.gmra.mxu0 %v776
      %v778 = vpop.f32.mrf.mxu0
      %v779 = vadd.f32 %v723, %v778
      %v780 = vand.u32 %v370, 4294901760
      %781 = vmatmul.f32.gmra.mxu0 %v780
      %v782 = vpop.f32.mrf.mxu0
      %v783 = vadd.f32 %v727, %v782
      %v784 = vand.u32 %v373, 4294901760
      %785 = vmatmul.f32.gmra.mxu0 %v784
      %v786 = vpop.f32.mrf.mxu0
      %v787 = vadd.f32 %v731, %v786
      %v788 = vand.u32 %v376, 4294901760
      %789 = vmatmul.f32.gmra.mxu0 %v788
      %v790 = vpop.f32.mrf.mxu0
      %v791 = vadd.f32 %v735, %v790
      %v792 = vand.u32 %v379, 4294901760
      %793 = vmatmul.f32.gmra.mxu0 %v792
      %v794 = vpop.f32.mrf.mxu0
      %v795 = vadd.f32 %v739, %v794
      %v796 = vand.u32 %v382, 4294901760
      %797 = vmatmul.f32.gmra.mxu0 %v796
      %v798 = vpop.f32.mrf.mxu0
      %v799 = vadd.f32 %v743, %v798
      %v800 = vand.u32 %v385, 4294901760
      %801 = vmatmul.f32.gmra.mxu0 %v800
      %v802 = vpop.f32.mrf.mxu0
      %v803 = vadd.f32 %v747, %v802
      %v804 = vand.u32 %v388, 4294901760
      %805 = vmatmul.f32.gmra.mxu0 %v804
      %v806 = vpop.f32.mrf.mxu0
      %v807 = vadd.f32 %v751, %v806
      %v808 = vand.u32 %v391, 4294901760
      %809 = vmatmul.f32.gmra.mxu0 %v808
      %v810 = vpop.f32.mrf.mxu0
      %v811 = vadd.f32 %v755, %v810
      %812 = vdwg.mxu0
      %813 = vmatpush.msra.mxu0 0.0
      %814 = vmatpush.msra.mxu0 0.0
      %815 = vmatpush.msra.mxu0 0.0
      %816 = vmatpush.msra.mxu0 0.0
      %817 = vmatpush.msra.mxu0 0.0
      %818 = vmatpush.msra.mxu0 0.0
      %819 = vmatpush.msra.mxu0 0.0
      %820 = vmatpush.msra.mxu0 0.0
      %821 = vmatpush.msra.mxu0 0.0
      %822 = vmatpush.msra.mxu0 0.0
      %823 = vmatpush.msra.mxu0 0.0
      %824 = vmatpush.msra.mxu0 0.0
      %825 = vmatpush.msra.mxu0 0.0
      %v826 = vand.u32 %v355, 4294901760
      %827 = vmatpush.msra.mxu0 %v826
      %v828 = vand.u32 %v353, 4294901760
      %829 = vmatpush.msra.mxu0 %v828
      %v830 = vand.u32 %v351, 4294901760
      %831 = vmatpush.msra.mxu0 %v830
      %v832 = vand.u32 %v367, 4294901760
      %v833 = vsub.f32 %v367, %v832
      %v834 = vand.u32 %v833, 4294901760
      %v835 = vsub.f32 %v833, %v834
      %v836 = vand.u32 %v835, 4294901760
      %837 = vmatmul.f32.gmra.mxu0 %v836
      %v838 = vpop.f32.mrf.mxu0
      %v839 = vadd.f32 0.0, %v838
      %v840 = vand.u32 %v370, 4294901760
      %v841 = vsub.f32 %v370, %v840
      %v842 = vand.u32 %v841, 4294901760
      %v843 = vsub.f32 %v841, %v842
      %v844 = vand.u32 %v843, 4294901760
      %845 = vmatmul.f32.gmra.mxu0 %v844
      %v846 = vpop.f32.mrf.mxu0
      %v847 = vadd.f32 0.0, %v846
      %v848 = vand.u32 %v373, 4294901760
      %v849 = vsub.f32 %v373, %v848
      %v850 = vand.u32 %v849, 4294901760
      %v851 = vsub.f32 %v849, %v850
      %v852 = vand.u32 %v851, 4294901760
      %853 = vmatmul.f32.gmra.mxu0 %v852
      %v854 = vpop.f32.mrf.mxu0
      %v855 = vadd.f32 0.0, %v854
      %v856 = vand.u32 %v376, 4294901760
      %v857 = vsub.f32 %v376, %v856
      %v858 = vand.u32 %v857, 4294901760
      %v859 = vsub.f32 %v857, %v858
      %v860 = vand.u32 %v859, 4294901760
      %861 = vmatmul.f32.gmra.mxu0 %v860
      %v862 = vpop.f32.mrf.mxu0
      %v863 = vadd.f32 0.0, %v862
      %v864 = vand.u32 %v379, 4294901760
      %v865 = vsub.f32 %v379, %v864
      %v866 = vand.u32 %v865, 4294901760
      %v867 = vsub.f32 %v865, %v866
      %v868 = vand.u32 %v867, 4294901760
      %869 = vmatmul.f32.gmra.mxu0 %v868
      %v870 = vpop.f32.mrf.mxu0
      %v871 = vadd.f32 0.0, %v870
      %v872 = vand.u32 %v382, 4294901760
      %v873 = vsub.f32 %v382, %v872
      %v874 = vand.u32 %v873, 4294901760
      %v875 = vsub.f32 %v873, %v874
      %v876 = vand.u32 %v875, 4294901760
      %877 = vmatmul.f32.gmra.mxu0 %v876
      %v878 = vpop.f32.mrf.mxu0
      %v879 = vadd.f32 0.0, %v878
      %v880 = vand.u32 %v385, 4294901760
      %v881 = vsub.f32 %v385, %v880
      %v882 = vand.u32 %v881, 4294901760
      %v883 = vsub.f32 %v881, %v882
      %v884 = vand.u32 %v883, 4294901760
      %885 = vmatmul.f32.gmra.mxu0 %v884
      %v886 = vpop.f32.mrf.mxu0
      %v887 = vadd.f32 0.0, %v886
      %v888 = vand.u32 %v388, 4294901760
      %v889 = vsub.f32 %v388, %v888
      %v890 = vand.u32 %v889, 4294901760
      %v891 = vsub.f32 %v889, %v890
      %v892 = vand.u32 %v891, 4294901760
      %893 = vmatmul.f32.gmra.mxu0 %v892
      %v894 = vpop.f32.mrf.mxu0
      %v895 = vadd.f32 0.0, %v894
      %v896 = vand.u32 %v391, 4294901760
      %v897 = vsub.f32 %v391, %v896
      %v898 = vand.u32 %v897, 4294901760
      %v899 = vsub.f32 %v897, %v898
      %v900 = vand.u32 %v899, 4294901760
      %901 = vmatmul.f32.gmra.mxu0 %v900
      %v902 = vpop.f32.mrf.mxu0
      %v903 = vadd.f32 0.0, %v902
      %904 = vdwg.mxu0
      %905 = vmatpush.msra.mxu0 0.0
      %906 = vmatpush.msra.mxu0 0.0
      %907 = vmatpush.msra.mxu0 0.0
      %908 = vmatpush.msra.mxu0 0.0
      %909 = vmatpush.msra.mxu0 0.0
      %910 = vmatpush.msra.mxu0 0.0
      %911 = vmatpush.msra.mxu0 0.0
      %912 = vmatpush.msra.mxu0 0.0
      %913 = vmatpush.msra.mxu0 0.0
      %914 = vmatpush.msra.mxu0 0.0
      %915 = vmatpush.msra.mxu0 0.0
      %916 = vmatpush.msra.mxu0 0.0
      %917 = vmatpush.msra.mxu0 0.0
      %v918 = vand.u32 %v355, 4294901760
      %v919 = vsub.f32 %v355, %v918
      %v920 = vand.u32 %v919, 4294901760
      %v921 = vsub.f32 %v919, %v920
      %v922 = vand.u32 %v921, 4294901760
      %923 = vmatpush.msra.mxu0 %v922
      %v924 = vand.u32 %v353, 4294901760
      %v925 = vsub.f32 %v353, %v924
      %v926 = vand.u32 %v925, 4294901760
      %v927 = vsub.f32 %v925, %v926
      %v928 = vand.u32 %v927, 4294901760
      %929 = vmatpush.msra.mxu0 %v928
      %v930 = vand.u32 %v351, 4294901760
      %v931 = vsub.f32 %v351, %v930
      %v932 = vand.u32 %v931, 4294901760
      %v933 = vsub.f32 %v931, %v932
      %v934 = vand.u32 %v933, 4294901760
      %935 = vmatpush.msra.mxu0 %v934
      %v936 = vand.u32 %v367, 4294901760
      %937 = vmatmul.f32.gmra.mxu0 %v936
      %v938 = vpop.f32.mrf.mxu0
      %v939 = vadd.f32 %v839, %v938
      %v940 = vand.u32 %v370, 4294901760
      %941 = vmatmul.f32.gmra.mxu0 %v940
      %v942 = vpop.f32.mrf.mxu0
      %v943 = vadd.f32 %v847, %v942
      %v944 = vand.u32 %v373, 4294901760
      %945 = vmatmul.f32.gmra.mxu0 %v944
      %v946 = vpop.f32.mrf.mxu0
      %v947 = vadd.f32 %v855, %v946
      %v948 = vand.u32 %v376, 4294901760
      %949 = vmatmul.f32.gmra.mxu0 %v948
      %v950 = vpop.f32.mrf.mxu0
      %v951 = vadd.f32 %v863, %v950
      %v952 = vand.u32 %v379, 4294901760
      %953 = vmatmul.f32.gmra.mxu0 %v952
      %v954 = vpop.f32.mrf.mxu0
      %v955 = vadd.f32 %v871, %v954
      %v956 = vand.u32 %v382, 4294901760
      %957 = vmatmul.f32.gmra.mxu0 %v956
      %v958 = vpop.f32.mrf.mxu0
      %v959 = vadd.f32 %v879, %v958
      %v960 = vand.u32 %v385, 4294901760
      %961 = vmatmul.f32.gmra.mxu0 %v960
      %v962 = vpop.f32.mrf.mxu0
      %v963 = vadd.f32 %v887, %v962
      %v964 = vand.u32 %v388, 4294901760
      %965 = vmatmul.f32.gmra.mxu0 %v964
      %v966 = vpop.f32.mrf.mxu0
      %v967 = vadd.f32 %v895, %v966
      %v968 = vand.u32 %v391, 4294901760
      %969 = vmatmul.f32.gmra.mxu0 %v968
      %v970 = vpop.f32.mrf.mxu0
      %v971 = vadd.f32 %v903, %v970
      %972 = vdwg.mxu0
      %973 = vmatpush.msra.mxu0 0.0
      %974 = vmatpush.msra.mxu0 0.0
      %975 = vmatpush.msra.mxu0 0.0
      %976 = vmatpush.msra.mxu0 0.0
      %977 = vmatpush.msra.mxu0 0.0
      %978 = vmatpush.msra.mxu0 0.0
      %979 = vmatpush.msra.mxu0 0.0
      %980 = vmatpush.msra.mxu0 0.0
      %981 = vmatpush.msra.mxu0 0.0
      %982 = vmatpush.msra.mxu0 0.0
      %983 = vmatpush.msra.mxu0 0.0
      %984 = vmatpush.msra.mxu0 0.0
      %985 = vmatpush.msra.mxu0 0.0
      %v986 = vand.u32 %v355, 4294901760
      %v987 = vsub.f32 %v355, %v986
      %988 = vmatpush.msra.mxu0 %v987
      %v989 = vand.u32 %v353, 4294901760
      %v990 = vsub.f32 %v353, %v989
      %991 = vmatpush.msra.mxu0 %v990
      %v992 = vand.u32 %v351, 4294901760
      %v993 = vsub.f32 %v351, %v992
      %994 = vmatpush.msra.mxu0 %v993
      %v995 = vand.u32 %v367, 4294901760
      %v996 = vsub.f32 %v367, %v995
      %997 = vmatmul.f32.gmra.mxu0 %v996
      %v998 = vpop.f32.mrf.mxu0
      %v999 = vadd.f32 %v939, %v998
      %v1000 = vand.u32 %v370, 4294901760
      %v1001 = vsub.f32 %v370, %v1000
      %1002 = vmatmul.f32.gmra.mxu0 %v1001
      %v1003 = vpop.f32.mrf.mxu0
      %v1004 = vadd.f32 %v943, %v1003
      %v1005 = vand.u32 %v373, 4294901760
      %v1006 = vsub.f32 %v373, %v1005
      %1007 = vmatmul.f32.gmra.mxu0 %v1006
      %v1008 = vpop.f32.mrf.mxu0
      %v1009 = vadd.f32 %v947, %v1008
      %v1010 = vand.u32 %v376, 4294901760
      %v1011 = vsub.f32 %v376, %v1010
      %1012 = vmatmul.f32.gmra.mxu0 %v1011
      %v1013 = vpop.f32.mrf.mxu0
      %v1014 = vadd.f32 %v951, %v1013
      %v1015 = vand.u32 %v379, 4294901760
      %v1016 = vsub.f32 %v379, %v1015
      %1017 = vmatmul.f32.gmra.mxu0 %v1016
      %v1018 = vpop.f32.mrf.mxu0
      %v1019 = vadd.f32 %v955, %v1018
      %v1020 = vand.u32 %v382, 4294901760
      %v1021 = vsub.f32 %v382, %v1020
      %1022 = vmatmul.f32.gmra.mxu0 %v1021
      %v1023 = vpop.f32.mrf.mxu0
      %v1024 = vadd.f32 %v959, %v1023
      %v1025 = vand.u32 %v385, 4294901760
      %v1026 = vsub.f32 %v385, %v1025
      %1027 = vmatmul.f32.gmra.mxu0 %v1026
      %v1028 = vpop.f32.mrf.mxu0
      %v1029 = vadd.f32 %v963, %v1028
      %v1030 = vand.u32 %v388, 4294901760
      %v1031 = vsub.f32 %v388, %v1030
      %1032 = vmatmul.f32.gmra.mxu0 %v1031
      %v1033 = vpop.f32.mrf.mxu0
      %v1034 = vadd.f32 %v967, %v1033
      %v1035 = vand.u32 %v391, 4294901760
      %v1036 = vsub.f32 %v391, %v1035
      %1037 = vmatmul.f32.gmra.mxu0 %v1036
      %v1038 = vpop.f32.mrf.mxu0
      %v1039 = vadd.f32 %v971, %v1038
      %1040 = vdwg.mxu0
      %1041 = vmatpush.msra.mxu0 0.0
      %1042 = vmatpush.msra.mxu0 0.0
      %1043 = vmatpush.msra.mxu0 0.0
      %1044 = vmatpush.msra.mxu0 0.0
      %1045 = vmatpush.msra.mxu0 0.0
      %1046 = vmatpush.msra.mxu0 0.0
      %1047 = vmatpush.msra.mxu0 0.0
      %1048 = vmatpush.msra.mxu0 0.0
      %1049 = vmatpush.msra.mxu0 0.0
      %1050 = vmatpush.msra.mxu0 0.0
      %1051 = vmatpush.msra.mxu0 0.0
      %1052 = vmatpush.msra.mxu0 0.0
      %1053 = vmatpush.msra.mxu0 0.0
      %v1054 = vand.u32 %v355, 4294901760
      %1055 = vmatpush.msra.mxu0 %v1054
      %v1056 = vand.u32 %v353, 4294901760
      %1057 = vmatpush.msra.mxu0 %v1056
      %v1058 = vand.u32 %v351, 4294901760
      %1059 = vmatpush.msra.mxu0 %v1058
      %v1060 = vand.u32 %v367, 4294901760
      %v1061 = vsub.f32 %v367, %v1060
      %v1062 = vand.u32 %v1061, 4294901760
      %1063 = vmatmul.f32.gmra.mxu0 %v1062
      %v1064 = vpop.f32.mrf.mxu0
      %v1065 = vadd.f32 %v999, %v1064
      %v1066 = vand.u32 %v370, 4294901760
      %v1067 = vsub.f32 %v370, %v1066
      %v1068 = vand.u32 %v1067, 4294901760
      %1069 = vmatmul.f32.gmra.mxu0 %v1068
      %v1070 = vpop.f32.mrf.mxu0
      %v1071 = vadd.f32 %v1004, %v1070
      %v1072 = vand.u32 %v373, 4294901760
      %v1073 = vsub.f32 %v373, %v1072
      %v1074 = vand.u32 %v1073, 4294901760
      %1075 = vmatmul.f32.gmra.mxu0 %v1074
      %v1076 = vpop.f32.mrf.mxu0
      %v1077 = vadd.f32 %v1009, %v1076
      %v1078 = vand.u32 %v376, 4294901760
      %v1079 = vsub.f32 %v376, %v1078
      %v1080 = vand.u32 %v1079, 4294901760
      %1081 = vmatmul.f32.gmra.mxu0 %v1080
      %v1082 = vpop.f32.mrf.mxu0
      %v1083 = vadd.f32 %v1014, %v1082
      %v1084 = vand.u32 %v379, 4294901760
      %v1085 = vsub.f32 %v379, %v1084
      %v1086 = vand.u32 %v1085, 4294901760
      %1087 = vmatmul.f32.gmra.mxu0 %v1086
      %v1088 = vpop.f32.mrf.mxu0
      %v1089 = vadd.f32 %v1019, %v1088
      %v1090 = vand.u32 %v382, 4294901760
      %v1091 = vsub.f32 %v382, %v1090
      %v1092 = vand.u32 %v1091, 4294901760
      %1093 = vmatmul.f32.gmra.mxu0 %v1092
      %v1094 = vpop.f32.mrf.mxu0
      %v1095 = vadd.f32 %v1024, %v1094
      %v1096 = vand.u32 %v385, 4294901760
      %v1097 = vsub.f32 %v385, %v1096
      %v1098 = vand.u32 %v1097, 4294901760
      %1099 = vmatmul.f32.gmra.mxu0 %v1098
      %v1100 = vpop.f32.mrf.mxu0
      %v1101 = vadd.f32 %v1029, %v1100
      %v1102 = vand.u32 %v388, 4294901760
      %v1103 = vsub.f32 %v388, %v1102
      %v1104 = vand.u32 %v1103, 4294901760
      %1105 = vmatmul.f32.gmra.mxu0 %v1104
      %v1106 = vpop.f32.mrf.mxu0
      %v1107 = vadd.f32 %v1034, %v1106
      %v1108 = vand.u32 %v391, 4294901760
      %v1109 = vsub.f32 %v391, %v1108
      %v1110 = vand.u32 %v1109, 4294901760
      %1111 = vmatmul.f32.gmra.mxu0 %v1110
      %v1112 = vpop.f32.mrf.mxu0
      %v1113 = vadd.f32 %v1039, %v1112
      %1114 = vdwg.mxu0
      %1115 = vmatpush.msra.mxu0 0.0
      %1116 = vmatpush.msra.mxu0 0.0
      %1117 = vmatpush.msra.mxu0 0.0
      %1118 = vmatpush.msra.mxu0 0.0
      %1119 = vmatpush.msra.mxu0 0.0
      %1120 = vmatpush.msra.mxu0 0.0
      %1121 = vmatpush.msra.mxu0 0.0
      %1122 = vmatpush.msra.mxu0 0.0
      %1123 = vmatpush.msra.mxu0 0.0
      %1124 = vmatpush.msra.mxu0 0.0
      %1125 = vmatpush.msra.mxu0 0.0
      %1126 = vmatpush.msra.mxu0 0.0
      %1127 = vmatpush.msra.mxu0 0.0
      %v1128 = vand.u32 %v355, 4294901760
      %v1129 = vsub.f32 %v355, %v1128
      %v1130 = vand.u32 %v1129, 4294901760
      %1131 = vmatpush.msra.mxu0 %v1130
      %v1132 = vand.u32 %v353, 4294901760
      %v1133 = vsub.f32 %v353, %v1132
      %v1134 = vand.u32 %v1133, 4294901760
      %1135 = vmatpush.msra.mxu0 %v1134
      %v1136 = vand.u32 %v351, 4294901760
      %v1137 = vsub.f32 %v351, %v1136
      %v1138 = vand.u32 %v1137, 4294901760
      %1139 = vmatpush.msra.mxu0 %v1138
      %v1140 = vand.u32 %v367, 4294901760
      %1141 = vmatmul.f32.gmra.mxu0 %v1140
      %v1142 = vpop.f32.mrf.mxu0
      %v1143 = vadd.f32 %v1065, %v1142
      %v1144 = vand.u32 %v370, 4294901760
      %1145 = vmatmul.f32.gmra.mxu0 %v1144
      %v1146 = vpop.f32.mrf.mxu0
      %v1147 = vadd.f32 %v1071, %v1146
      %v1148 = vand.u32 %v373, 4294901760
      %1149 = vmatmul.f32.gmra.mxu0 %v1148
      %v1150 = vpop.f32.mrf.mxu0
      %v1151 = vadd.f32 %v1077, %v1150
      %v1152 = vand.u32 %v376, 4294901760
      %1153 = vmatmul.f32.gmra.mxu0 %v1152
      %v1154 = vpop.f32.mrf.mxu0
      %v1155 = vadd.f32 %v1083, %v1154
      %v1156 = vand.u32 %v379, 4294901760
      %1157 = vmatmul.f32.gmra.mxu0 %v1156
      %v1158 = vpop.f32.mrf.mxu0
      %v1159 = vadd.f32 %v1089, %v1158
      %v1160 = vand.u32 %v382, 4294901760
      %1161 = vmatmul.f32.gmra.mxu0 %v1160
      %v1162 = vpop.f32.mrf.mxu0
      %v1163 = vadd.f32 %v1095, %v1162
      %v1164 = vand.u32 %v385, 4294901760
      %1165 = vmatmul.f32.gmra.mxu0 %v1164
      %v1166 = vpop.f32.mrf.mxu0
      %v1167 = vadd.f32 %v1101, %v1166
      %v1168 = vand.u32 %v388, 4294901760
      %1169 = vmatmul.f32.gmra.mxu0 %v1168
      %v1170 = vpop.f32.mrf.mxu0
      %v1171 = vadd.f32 %v1107, %v1170
      %v1172 = vand.u32 %v391, 4294901760
      %1173 = vmatmul.f32.gmra.mxu0 %v1172
      %v1174 = vpop.f32.mrf.mxu0
      %v1175 = vadd.f32 %v1113, %v1174
      %1176 = vdwg.mxu0
      %1177 = vmatpush.msra.mxu0 0.0
      %1178 = vmatpush.msra.mxu0 0.0
      %1179 = vmatpush.msra.mxu0 0.0
      %1180 = vmatpush.msra.mxu0 0.0
      %1181 = vmatpush.msra.mxu0 0.0
      %1182 = vmatpush.msra.mxu0 0.0
      %1183 = vmatpush.msra.mxu0 0.0
      %1184 = vmatpush.msra.mxu0 0.0
      %1185 = vmatpush.msra.mxu0 0.0
      %1186 = vmatpush.msra.mxu0 0.0
      %1187 = vmatpush.msra.mxu0 0.0
      %1188 = vmatpush.msra.mxu0 0.0
      %1189 = vmatpush.msra.mxu0 0.0
      %v1190 = vand.u32 %v355, 4294901760
      %1191 = vmatpush.msra.mxu0 %v1190
      %v1192 = vand.u32 %v353, 4294901760
      %1193 = vmatpush.msra.mxu0 %v1192
      %v1194 = vand.u32 %v351, 4294901760
      %1195 = vmatpush.msra.mxu0 %v1194
      %v1196 = vand.u32 %v367, 4294901760
      %1197 = vmatmul.f32.gmra.mxu0 %v1196
      %v1198 = vpop.f32.mrf.mxu0
      %v1199 = vadd.f32 %v1143, %v1198
      %v1200 = vand.u32 %v370, 4294901760
      %1201 = vmatmul.f32.gmra.mxu0 %v1200
      %v1202 = vpop.f32.mrf.mxu0
      %v1203 = vadd.f32 %v1147, %v1202
      %v1204 = vand.u32 %v373, 4294901760
      %1205 = vmatmul.f32.gmra.mxu0 %v1204
      %v1206 = vpop.f32.mrf.mxu0
      %v1207 = vadd.f32 %v1151, %v1206
      %v1208 = vand.u32 %v376, 4294901760
      %1209 = vmatmul.f32.gmra.mxu0 %v1208
      %v1210 = vpop.f32.mrf.mxu0
      %v1211 = vadd.f32 %v1155, %v1210
      %v1212 = vand.u32 %v379, 4294901760
      %1213 = vmatmul.f32.gmra.mxu0 %v1212
      %v1214 = vpop.f32.mrf.mxu0
      %v1215 = vadd.f32 %v1159, %v1214
      %v1216 = vand.u32 %v382, 4294901760
      %1217 = vmatmul.f32.gmra.mxu0 %v1216
      %v1218 = vpop.f32.mrf.mxu0
      %v1219 = vadd.f32 %v1163, %v1218
      %v1220 = vand.u32 %v385, 4294901760
      %1221 = vmatmul.f32.gmra.mxu0 %v1220
      %v1222 = vpop.f32.mrf.mxu0
      %v1223 = vadd.f32 %v1167, %v1222
      %v1224 = vand.u32 %v388, 4294901760
      %1225 = vmatmul.f32.gmra.mxu0 %v1224
      %v1226 = vpop.f32.mrf.mxu0
      %v1227 = vadd.f32 %v1171, %v1226
      %v1228 = vand.u32 %v391, 4294901760
      %1229 = vmatmul.f32.gmra.mxu0 %v1228
      %v1230 = vpop.f32.mrf.mxu0
      %v1231 = vadd.f32 %v1175, %v1230
      %1232 = vdwg.mxu0
      %v1233 = vld [vmem:[%s5] sm:$0xff]
      %v1234 = vld [vmem:[%s5 + $0x8] sm:$0xff]
      %v1235 = vadd.f32 %v1233, %v795
      %v1236 = vadd.f32 %v1234, %v1215
      %1237 = vrot.lane.b32.xlu0 %v779, 17
      %v1238 = vpop.permute.xlu0 %1237
      %1239 = vrot.lane.b32.xlu0 %v1199, 17
      %v1240 = vpop.permute.xlu0 %1239
      %v1241 = vlaneseq
      %v1242 = vand.u32 %v1241, 127
      %vm1243 = vcmp.lt.s32.totalorder %v1242, 17
      %v1244 = vsel %vm1243, %v1238, %v1240
      %v1245 = vsel %vm1243, %v1240, %v1238
      %v1246 = vperm.slane %v346, 0
      %v1247 = vperm.slane %v347, 0
      %v1248 = vmul.f32 %v1245, %v1246
      %v1249 = vmul.f32 %v1244, %v1247
      %v1250 = vadd.f32 %v1235, %v1248
      %v1251 = vadd.f32 %v1236, %v1249
      %1252 = vrot.lane.b32.xlu0 %v783, 16
      %v1253 = vpop.permute.xlu0 %1252
      %1254 = vrot.lane.b32.xlu0 %v1203, 16
      %v1255 = vpop.permute.xlu0 %1254
      %vm1256 = vcmp.lt.s32.totalorder %v1242, 16
      %v1257 = vsel %vm1256, %v1253, %v1255
      %v1258 = vsel %vm1256, %v1255, %v1253
      %v1259 = vperm.slane %v346, 1
      %v1260 = vperm.slane %v347, 1
      %v1261 = vmul.f32 %v1258, %v1259
      %v1262 = vmul.f32 %v1257, %v1260
      %v1263 = vadd.f32 %v1250, %v1261
      %v1264 = vadd.f32 %v1251, %v1262
      %1265 = vrot.lane.b32.xlu0 %v787, 15
      %v1266 = vpop.permute.xlu0 %1265
      %1267 = vrot.lane.b32.xlu0 %v1207, 15
      %v1268 = vpop.permute.xlu0 %1267
      %vm1269 = vcmp.lt.s32.totalorder %v1242, 15
      %v1270 = vsel %vm1269, %v1266, %v1268
      %v1271 = vsel %vm1269, %v1268, %v1266
      %v1272 = vperm.slane %v346, 2
      %v1273 = vperm.slane %v347, 2
      %v1274 = vmul.f32 %v1271, %v1272
      %v1275 = vmul.f32 %v1270, %v1273
      %v1276 = vadd.f32 %v1263, %v1274
      %v1277 = vadd.f32 %v1264, %v1275
      %1278 = vrot.lane.b32.xlu0 %v791, 1
      %v1279 = vpop.permute.xlu0 %1278
      %1280 = vrot.lane.b32.xlu0 %v1211, 1
      %v1281 = vpop.permute.xlu0 %1280
      %vm1282 = vcmp.lt.s32.totalorder %v1242, 1
      %v1283 = vsel %vm1282, %v1279, %v1281
      %v1284 = vsel %vm1282, %v1281, %v1279
      %v1285 = vperm.slane %v346, 3
      %v1286 = vperm.slane %v347, 3
      %v1287 = vmul.f32 %v1284, %v1285
      %v1288 = vmul.f32 %v1283, %v1286
      %v1289 = vadd.f32 %v1276, %v1287
      %v1290 = vadd.f32 %v1277, %v1288
      %1291 = vrot.lane.b32.xlu0 %v799, 127
      %v1292 = vpop.permute.xlu0 %1291
      %1293 = vrot.lane.b32.xlu0 %v1219, 127
      %v1294 = vpop.permute.xlu0 %1293
      %vm1295 = vcmp.lt.s32.totalorder %v1242, 127
      %v1296 = vsel %vm1295, %v1292, %v1294
      %v1297 = vsel %vm1295, %v1294, %v1292
      %v1298 = vperm.slane %v346, 5
      %v1299 = vperm.slane %v347, 5
      %v1300 = vmul.f32 %v1296, %v1298
      %v1301 = vmul.f32 %v1297, %v1299
      %v1302 = vadd.f32 %v1289, %v1300
      %v1303 = vadd.f32 %v1290, %v1301
      %1304 = vrot.lane.b32.xlu0 %v803, 113
      %v1305 = vpop.permute.xlu0 %1304
      %1306 = vrot.lane.b32.xlu0 %v1223, 113
      %v1307 = vpop.permute.xlu0 %1306
      %vm1308 = vcmp.lt.s32.totalorder %v1242, 113
      %v1309 = vsel %vm1308, %v1305, %v1307
      %v1310 = vsel %vm1308, %v1307, %v1305
      %v1311 = vperm.slane %v346, 6
      %v1312 = vperm.slane %v347, 6
      %v1313 = vmul.f32 %v1309, %v1311
      %v1314 = vmul.f32 %v1310, %v1312
      %v1315 = vadd.f32 %v1302, %v1313
      %v1316 = vadd.f32 %v1303, %v1314
      %1317 = vrot.lane.b32.xlu0 %v807, 112
      %v1318 = vpop.permute.xlu0 %1317
      %1319 = vrot.lane.b32.xlu0 %v1227, 112
      %v1320 = vpop.permute.xlu0 %1319
      %vm1321 = vcmp.lt.s32.totalorder %v1242, 112
      %v1322 = vsel %vm1321, %v1318, %v1320
      %v1323 = vsel %vm1321, %v1320, %v1318
      %v1324 = vperm.slane %v346, 7
      %v1325 = vperm.slane %v347, 7
      %v1326 = vmul.f32 %v1322, %v1324
      %v1327 = vmul.f32 %v1323, %v1325
      %v1328 = vadd.f32 %v1315, %v1326
      %v1329 = vadd.f32 %v1316, %v1327
      %1330 = vrot.lane.b32.xlu0 %v811, 111
      %v1331 = vpop.permute.xlu0 %1330
      %1332 = vrot.lane.b32.xlu0 %v1231, 111
      %v1333 = vpop.permute.xlu0 %1332
      %vm1334 = vcmp.lt.s32.totalorder %v1242, 111
      %v1335 = vsel %vm1334, %v1331, %v1333
      %v1336 = vsel %vm1334, %v1333, %v1331
      %v1337 = vperm.slane %v348, 0
      %v1338 = vperm.slane %v349, 0
      %v1339 = vmul.f32 %v1335, %v1337
      %v1340 = vmul.f32 %v1336, %v1338
      %v1341 = vadd.f32 %v1328, %v1339
      %v1342 = vadd.f32 %v1329, %v1340
      %v1343 = vld [vmem:[%s340] sm:$0xff]
      %v1344 = vld [vmem:[%s340 + $0x8] sm:$0xff]
      %v1345 = vadd.f32 %v1343, %v1341
      %v1346 = vadd.f32 %v1344, %v1342
      %v1347 = vld [vmem:[%s6] sm:$0xff]
      %v1348 = vld [vmem:[%s6 + $0x8] sm:$0xff]
      %v1349 = vld [vmem:[%s6 + $0x10] sm:$0xff]
      %v1350 = vld [vmem:[%s6 + $0x18] sm:$0xff]
      %v1351 = vld [vmem:[%s6 + $0x20] sm:$0xff]
      %v1352 = vld [vmem:[%s6 + $0x28] sm:$0xff]
      %v1353 = vld [vmem:[%s6 + $0x30] sm:$0xff]
      %v1354 = vld [vmem:[%s6 + $0x38] sm:$0xff]
      %v1355 = vld [vmem:[%s6 + $0x40] sm:$0xff]
      %vm1356 = vcmask 64512
      %v1358 = vsel %vm1356, %v1347, 0
      %v1361 = vsel %vm1356, %v1348, 0
      %v1364 = vsel %vm1356, %v1349, 0
      %v1367 = vsel %vm1356, %v1350, 0
      %v1370 = vsel %vm1356, %v1351, 0
      %v1373 = vsel %vm1356, %v1352, 0
      %v1376 = vsel %vm1356, %v1353, 0
      %v1379 = vsel %vm1356, %v1354, 0
      %v1382 = vsel %vm1356, %v1355, 0
      %1384 = vmatpush.msra.mxu0 0.0
      %1385 = vmatpush.msra.mxu0 0.0
      %1386 = vmatpush.msra.mxu0 0.0
      %1387 = vmatpush.msra.mxu0 0.0
      %1388 = vmatpush.msra.mxu0 0.0
      %1389 = vmatpush.msra.mxu0 0.0
      %1390 = vmatpush.msra.mxu0 0.0
      %1391 = vmatpush.msra.mxu0 0.0
      %1392 = vmatpush.msra.mxu0 0.0
      %1393 = vmatpush.msra.mxu0 0.0
      %1394 = vmatpush.msra.mxu0 0.0
      %1395 = vmatpush.msra.mxu0 0.0
      %1396 = vmatpush.msra.mxu0 0.0
      %1397 = vmatpush.msra.mxu0 0.0
      %1398 = vmatpush.msra.mxu0 0.0
      %v1399 = vand.u32 %v1345, 4294901760
      %1400 = vmatpush.msra.mxu0 %v1399
      %v1401 = vand.u32 %v1358, 4294901760
      %v1402 = vsub.f32 %v1358, %v1401
      %v1403 = vand.u32 %v1402, 4294901760
      %v1404 = vsub.f32 %v1402, %v1403
      %v1405 = vand.u32 %v1404, 4294901760
      %1406 = vmatmul.f32.gmra.mxu0 %v1405
      %v1407 = vpop.f32.mrf.mxu0
      %v1408 = vadd.f32 0.0, %v1407
      %v1409 = vand.u32 %v1361, 4294901760
      %v1410 = vsub.f32 %v1361, %v1409
      %v1411 = vand.u32 %v1410, 4294901760
      %v1412 = vsub.f32 %v1410, %v1411
      %v1413 = vand.u32 %v1412, 4294901760
      %1414 = vmatmul.f32.gmra.mxu0 %v1413
      %v1415 = vpop.f32.mrf.mxu0
      %v1416 = vadd.f32 0.0, %v1415
      %v1417 = vand.u32 %v1364, 4294901760
      %v1418 = vsub.f32 %v1364, %v1417
      %v1419 = vand.u32 %v1418, 4294901760
      %v1420 = vsub.f32 %v1418, %v1419
      %v1421 = vand.u32 %v1420, 4294901760
      %1422 = vmatmul.f32.gmra.mxu0 %v1421
      %v1423 = vpop.f32.mrf.mxu0
      %v1424 = vadd.f32 0.0, %v1423
      %v1425 = vand.u32 %v1367, 4294901760
      %v1426 = vsub.f32 %v1367, %v1425
      %v1427 = vand.u32 %v1426, 4294901760
      %v1428 = vsub.f32 %v1426, %v1427
      %v1429 = vand.u32 %v1428, 4294901760
      %1430 = vmatmul.f32.gmra.mxu0 %v1429
      %v1431 = vpop.f32.mrf.mxu0
      %v1432 = vadd.f32 0.0, %v1431
      %v1433 = vand.u32 %v1370, 4294901760
      %v1434 = vsub.f32 %v1370, %v1433
      %v1435 = vand.u32 %v1434, 4294901760
      %v1436 = vsub.f32 %v1434, %v1435
      %v1437 = vand.u32 %v1436, 4294901760
      %1438 = vmatmul.f32.gmra.mxu0 %v1437
      %v1439 = vpop.f32.mrf.mxu0
      %v1440 = vadd.f32 0.0, %v1439
      %v1441 = vand.u32 %v1373, 4294901760
      %v1442 = vsub.f32 %v1373, %v1441
      %v1443 = vand.u32 %v1442, 4294901760
      %v1444 = vsub.f32 %v1442, %v1443
      %v1445 = vand.u32 %v1444, 4294901760
      %1446 = vmatmul.f32.gmra.mxu0 %v1445
      %v1447 = vpop.f32.mrf.mxu0
      %v1448 = vadd.f32 0.0, %v1447
      %v1449 = vand.u32 %v1376, 4294901760
      %v1450 = vsub.f32 %v1376, %v1449
      %v1451 = vand.u32 %v1450, 4294901760
      %v1452 = vsub.f32 %v1450, %v1451
      %v1453 = vand.u32 %v1452, 4294901760
      %1454 = vmatmul.f32.gmra.mxu0 %v1453
      %v1455 = vpop.f32.mrf.mxu0
      %v1456 = vadd.f32 0.0, %v1455
      %v1457 = vand.u32 %v1379, 4294901760
      %v1458 = vsub.f32 %v1379, %v1457
      %v1459 = vand.u32 %v1458, 4294901760
      %v1460 = vsub.f32 %v1458, %v1459
      %v1461 = vand.u32 %v1460, 4294901760
      %1462 = vmatmul.f32.gmra.mxu0 %v1461
      %v1463 = vpop.f32.mrf.mxu0
      %v1464 = vadd.f32 0.0, %v1463
      %v1465 = vand.u32 %v1382, 4294901760
      %v1466 = vsub.f32 %v1382, %v1465
      %v1467 = vand.u32 %v1466, 4294901760
      %v1468 = vsub.f32 %v1466, %v1467
      %v1469 = vand.u32 %v1468, 4294901760
      %1470 = vmatmul.f32.gmra.mxu0 %v1469
      %v1471 = vpop.f32.mrf.mxu0
      %v1472 = vadd.f32 0.0, %v1471
      %1473 = vdwg.mxu0
      %1474 = vmatpush.msra.mxu0 0.0
      %1475 = vmatpush.msra.mxu0 0.0
      %1476 = vmatpush.msra.mxu0 0.0
      %1477 = vmatpush.msra.mxu0 0.0
      %1478 = vmatpush.msra.mxu0 0.0
      %1479 = vmatpush.msra.mxu0 0.0
      %1480 = vmatpush.msra.mxu0 0.0
      %1481 = vmatpush.msra.mxu0 0.0
      %1482 = vmatpush.msra.mxu0 0.0
      %1483 = vmatpush.msra.mxu0 0.0
      %1484 = vmatpush.msra.mxu0 0.0
      %1485 = vmatpush.msra.mxu0 0.0
      %1486 = vmatpush.msra.mxu0 0.0
      %1487 = vmatpush.msra.mxu0 0.0
      %1488 = vmatpush.msra.mxu0 0.0
      %v1489 = vand.u32 %v1345, 4294901760
      %v1490 = vsub.f32 %v1345, %v1489
      %v1491 = vand.u32 %v1490, 4294901760
      %v1492 = vsub.f32 %v1490, %v1491
      %v1493 = vand.u32 %v1492, 4294901760
      %1494 = vmatpush.msra.mxu0 %v1493
      %v1495 = vand.u32 %v1358, 4294901760
      %1496 = vmatmul.f32.gmra.mxu0 %v1495
      %v1497 = vpop.f32.mrf.mxu0
      %v1498 = vadd.f32 %v1408, %v1497
      %v1499 = vand.u32 %v1361, 4294901760
      %1500 = vmatmul.f32.gmra.mxu0 %v1499
      %v1501 = vpop.f32.mrf.mxu0
      %v1502 = vadd.f32 %v1416, %v1501
      %v1503 = vand.u32 %v1364, 4294901760
      %1504 = vmatmul.f32.gmra.mxu0 %v1503
      %v1505 = vpop.f32.mrf.mxu0
      %v1506 = vadd.f32 %v1424, %v1505
      %v1507 = vand.u32 %v1367, 4294901760
      %1508 = vmatmul.f32.gmra.mxu0 %v1507
      %v1509 = vpop.f32.mrf.mxu0
      %v1510 = vadd.f32 %v1432, %v1509
      %v1511 = vand.u32 %v1370, 4294901760
      %1512 = vmatmul.f32.gmra.mxu0 %v1511
      %v1513 = vpop.f32.mrf.mxu0
      %v1514 = vadd.f32 %v1440, %v1513
      %v1515 = vand.u32 %v1373, 4294901760
      %1516 = vmatmul.f32.gmra.mxu0 %v1515
      %v1517 = vpop.f32.mrf.mxu0
      %v1518 = vadd.f32 %v1448, %v1517
      %v1519 = vand.u32 %v1376, 4294901760
      %1520 = vmatmul.f32.gmra.mxu0 %v1519
      %v1521 = vpop.f32.mrf.mxu0
      %v1522 = vadd.f32 %v1456, %v1521
      %v1523 = vand.u32 %v1379, 4294901760
      %1524 = vmatmul.f32.gmra.mxu0 %v1523
      %v1525 = vpop.f32.mrf.mxu0
      %v1526 = vadd.f32 %v1464, %v1525
      %v1527 = vand.u32 %v1382, 4294901760
      %1528 = vmatmul.f32.gmra.mxu0 %v1527
      %v1529 = vpop.f32.mrf.mxu0
      %v1530 = vadd.f32 %v1472, %v1529
      %1531 = vdwg.mxu0
      %1532 = vmatpush.msra.mxu0 0.0
      %1533 = vmatpush.msra.mxu0 0.0
      %1534 = vmatpush.msra.mxu0 0.0
      %1535 = vmatpush.msra.mxu0 0.0
      %1536 = vmatpush.msra.mxu0 0.0
      %1537 = vmatpush.msra.mxu0 0.0
      %1538 = vmatpush.msra.mxu0 0.0
      %1539 = vmatpush.msra.mxu0 0.0
      %1540 = vmatpush.msra.mxu0 0.0
      %1541 = vmatpush.msra.mxu0 0.0
      %1542 = vmatpush.msra.mxu0 0.0
      %1543 = vmatpush.msra.mxu0 0.0
      %1544 = vmatpush.msra.mxu0 0.0
      %1545 = vmatpush.msra.mxu0 0.0
      %1546 = vmatpush.msra.mxu0 0.0
      %v1547 = vand.u32 %v1345, 4294901760
      %v1548 = vsub.f32 %v1345, %v1547
      %1549 = vmatpush.msra.mxu0 %v1548
      %v1550 = vand.u32 %v1358, 4294901760
      %v1551 = vsub.f32 %v1358, %v1550
      %1552 = vmatmul.f32.gmra.mxu0 %v1551
      %v1553 = vpop.f32.mrf.mxu0
      %v1554 = vadd.f32 %v1498, %v1553
      %v1555 = vand.u32 %v1361, 4294901760
      %v1556 = vsub.f32 %v1361, %v1555
      %1557 = vmatmul.f32.gmra.mxu0 %v1556
      %v1558 = vpop.f32.mrf.mxu0
      %v1559 = vadd.f32 %v1502, %v1558
      %v1560 = vand.u32 %v1364, 4294901760
      %v1561 = vsub.f32 %v1364, %v1560
      %1562 = vmatmul.f32.gmra.mxu0 %v1561
      %v1563 = vpop.f32.mrf.mxu0
      %v1564 = vadd.f32 %v1506, %v1563
      %v1565 = vand.u32 %v1367, 4294901760
      %v1566 = vsub.f32 %v1367, %v1565
      %1567 = vmatmul.f32.gmra.mxu0 %v1566
      %v1568 = vpop.f32.mrf.mxu0
      %v1569 = vadd.f32 %v1510, %v1568
      %v1570 = vand.u32 %v1370, 4294901760
      %v1571 = vsub.f32 %v1370, %v1570
      %1572 = vmatmul.f32.gmra.mxu0 %v1571
      %v1573 = vpop.f32.mrf.mxu0
      %v1574 = vadd.f32 %v1514, %v1573
      %v1575 = vand.u32 %v1373, 4294901760
      %v1576 = vsub.f32 %v1373, %v1575
      %1577 = vmatmul.f32.gmra.mxu0 %v1576
      %v1578 = vpop.f32.mrf.mxu0
      %v1579 = vadd.f32 %v1518, %v1578
      %v1580 = vand.u32 %v1376, 4294901760
      %v1581 = vsub.f32 %v1376, %v1580
      %1582 = vmatmul.f32.gmra.mxu0 %v1581
      %v1583 = vpop.f32.mrf.mxu0
      %v1584 = vadd.f32 %v1522, %v1583
      %v1585 = vand.u32 %v1379, 4294901760
      %v1586 = vsub.f32 %v1379, %v1585
      %1587 = vmatmul.f32.gmra.mxu0 %v1586
      %v1588 = vpop.f32.mrf.mxu0
      %v1589 = vadd.f32 %v1526, %v1588
      %v1590 = vand.u32 %v1382, 4294901760
      %v1591 = vsub.f32 %v1382, %v1590
      %1592 = vmatmul.f32.gmra.mxu0 %v1591
      %v1593 = vpop.f32.mrf.mxu0
      %v1594 = vadd.f32 %v1530, %v1593
      %1595 = vdwg.mxu0
      %1596 = vmatpush.msra.mxu0 0.0
      %1597 = vmatpush.msra.mxu0 0.0
      %1598 = vmatpush.msra.mxu0 0.0
      %1599 = vmatpush.msra.mxu0 0.0
      %1600 = vmatpush.msra.mxu0 0.0
      %1601 = vmatpush.msra.mxu0 0.0
      %1602 = vmatpush.msra.mxu0 0.0
      %1603 = vmatpush.msra.mxu0 0.0
      %1604 = vmatpush.msra.mxu0 0.0
      %1605 = vmatpush.msra.mxu0 0.0
      %1606 = vmatpush.msra.mxu0 0.0
      %1607 = vmatpush.msra.mxu0 0.0
      %1608 = vmatpush.msra.mxu0 0.0
      %1609 = vmatpush.msra.mxu0 0.0
      %1610 = vmatpush.msra.mxu0 0.0
      %v1611 = vand.u32 %v1345, 4294901760
      %1612 = vmatpush.msra.mxu0 %v1611
      %v1613 = vand.u32 %v1358, 4294901760
      %v1614 = vsub.f32 %v1358, %v1613
      %v1615 = vand.u32 %v1614, 4294901760
      %1616 = vmatmul.f32.gmra.mxu0 %v1615
      %v1617 = vpop.f32.mrf.mxu0
      %v1618 = vadd.f32 %v1554, %v1617
      %v1619 = vand.u32 %v1361, 4294901760
      %v1620 = vsub.f32 %v1361, %v1619
      %v1621 = vand.u32 %v1620, 4294901760
      %1622 = vmatmul.f32.gmra.mxu0 %v1621
      %v1623 = vpop.f32.mrf.mxu0
      %v1624 = vadd.f32 %v1559, %v1623
      %v1625 = vand.u32 %v1364, 4294901760
      %v1626 = vsub.f32 %v1364, %v1625
      %v1627 = vand.u32 %v1626, 4294901760
      %1628 = vmatmul.f32.gmra.mxu0 %v1627
      %v1629 = vpop.f32.mrf.mxu0
      %v1630 = vadd.f32 %v1564, %v1629
      %v1631 = vand.u32 %v1367, 4294901760
      %v1632 = vsub.f32 %v1367, %v1631
      %v1633 = vand.u32 %v1632, 4294901760
      %1634 = vmatmul.f32.gmra.mxu0 %v1633
      %v1635 = vpop.f32.mrf.mxu0
      %v1636 = vadd.f32 %v1569, %v1635
      %v1637 = vand.u32 %v1370, 4294901760
      %v1638 = vsub.f32 %v1370, %v1637
      %v1639 = vand.u32 %v1638, 4294901760
      %1640 = vmatmul.f32.gmra.mxu0 %v1639
      %v1641 = vpop.f32.mrf.mxu0
      %v1642 = vadd.f32 %v1574, %v1641
      %v1643 = vand.u32 %v1373, 4294901760
      %v1644 = vsub.f32 %v1373, %v1643
      %v1645 = vand.u32 %v1644, 4294901760
      %1646 = vmatmul.f32.gmra.mxu0 %v1645
      %v1647 = vpop.f32.mrf.mxu0
      %v1648 = vadd.f32 %v1579, %v1647
      %v1649 = vand.u32 %v1376, 4294901760
      %v1650 = vsub.f32 %v1376, %v1649
      %v1651 = vand.u32 %v1650, 4294901760
      %1652 = vmatmul.f32.gmra.mxu0 %v1651
      %v1653 = vpop.f32.mrf.mxu0
      %v1654 = vadd.f32 %v1584, %v1653
      %v1655 = vand.u32 %v1379, 4294901760
      %v1656 = vsub.f32 %v1379, %v1655
      %v1657 = vand.u32 %v1656, 4294901760
      %1658 = vmatmul.f32.gmra.mxu0 %v1657
      %v1659 = vpop.f32.mrf.mxu0
      %v1660 = vadd.f32 %v1589, %v1659
      %v1661 = vand.u32 %v1382, 4294901760
      %v1662 = vsub.f32 %v1382, %v1661
      %v1663 = vand.u32 %v1662, 4294901760
      %1664 = vmatmul.f32.gmra.mxu0 %v1663
      %v1665 = vpop.f32.mrf.mxu0
      %v1666 = vadd.f32 %v1594, %v1665
      %1667 = vdwg.mxu0
      %1668 = vmatpush.msra.mxu0 0.0
      %1669 = vmatpush.msra.mxu0 0.0
      %1670 = vmatpush.msra.mxu0 0.0
      %1671 = vmatpush.msra.mxu0 0.0
      %1672 = vmatpush.msra.mxu0 0.0
      %1673 = vmatpush.msra.mxu0 0.0
      %1674 = vmatpush.msra.mxu0 0.0
      %1675 = vmatpush.msra.mxu0 0.0
      %1676 = vmatpush.msra.mxu0 0.0
      %1677 = vmatpush.msra.mxu0 0.0
      %1678 = vmatpush.msra.mxu0 0.0
      %1679 = vmatpush.msra.mxu0 0.0
      %1680 = vmatpush.msra.mxu0 0.0
      %1681 = vmatpush.msra.mxu0 0.0
      %1682 = vmatpush.msra.mxu0 0.0
      %v1683 = vand.u32 %v1345, 4294901760
      %v1684 = vsub.f32 %v1345, %v1683
      %v1685 = vand.u32 %v1684, 4294901760
      %1686 = vmatpush.msra.mxu0 %v1685
      %v1687 = vand.u32 %v1358, 4294901760
      %1688 = vmatmul.f32.gmra.mxu0 %v1687
      %v1689 = vpop.f32.mrf.mxu0
      %v1690 = vadd.f32 %v1618, %v1689
      %v1691 = vand.u32 %v1361, 4294901760
      %1692 = vmatmul.f32.gmra.mxu0 %v1691
      %v1693 = vpop.f32.mrf.mxu0
      %v1694 = vadd.f32 %v1624, %v1693
      %v1695 = vand.u32 %v1364, 4294901760
      %1696 = vmatmul.f32.gmra.mxu0 %v1695
      %v1697 = vpop.f32.mrf.mxu0
      %v1698 = vadd.f32 %v1630, %v1697
      %v1699 = vand.u32 %v1367, 4294901760
      %1700 = vmatmul.f32.gmra.mxu0 %v1699
      %v1701 = vpop.f32.mrf.mxu0
      %v1702 = vadd.f32 %v1636, %v1701
      %v1703 = vand.u32 %v1370, 4294901760
      %1704 = vmatmul.f32.gmra.mxu0 %v1703
      %v1705 = vpop.f32.mrf.mxu0
      %v1706 = vadd.f32 %v1642, %v1705
      %v1707 = vand.u32 %v1373, 4294901760
      %1708 = vmatmul.f32.gmra.mxu0 %v1707
      %v1709 = vpop.f32.mrf.mxu0
      %v1710 = vadd.f32 %v1648, %v1709
      %v1711 = vand.u32 %v1376, 4294901760
      %1712 = vmatmul.f32.gmra.mxu0 %v1711
      %v1713 = vpop.f32.mrf.mxu0
      %v1714 = vadd.f32 %v1654, %v1713
      %v1715 = vand.u32 %v1379, 4294901760
      %1716 = vmatmul.f32.gmra.mxu0 %v1715
      %v1717 = vpop.f32.mrf.mxu0
      %v1718 = vadd.f32 %v1660, %v1717
      %v1719 = vand.u32 %v1382, 4294901760
      %1720 = vmatmul.f32.gmra.mxu0 %v1719
      %v1721 = vpop.f32.mrf.mxu0
      %v1722 = vadd.f32 %v1666, %v1721
      %1723 = vdwg.mxu0
      %1724 = vmatpush.msra.mxu0 0.0
      %1725 = vmatpush.msra.mxu0 0.0
      %1726 = vmatpush.msra.mxu0 0.0
      %1727 = vmatpush.msra.mxu0 0.0
      %1728 = vmatpush.msra.mxu0 0.0
      %1729 = vmatpush.msra.mxu0 0.0
      %1730 = vmatpush.msra.mxu0 0.0
      %1731 = vmatpush.msra.mxu0 0.0
      %1732 = vmatpush.msra.mxu0 0.0
      %1733 = vmatpush.msra.mxu0 0.0
      %1734 = vmatpush.msra.mxu0 0.0
      %1735 = vmatpush.msra.mxu0 0.0
      %1736 = vmatpush.msra.mxu0 0.0
      %1737 = vmatpush.msra.mxu0 0.0
      %1738 = vmatpush.msra.mxu0 0.0
      %v1739 = vand.u32 %v1345, 4294901760
      %1740 = vmatpush.msra.mxu0 %v1739
      %v1741 = vand.u32 %v1358, 4294901760
      %1742 = vmatmul.f32.gmra.mxu0 %v1741
      %v1743 = vpop.f32.mrf.mxu0
      %v1744 = vadd.f32 %v1690, %v1743
      %v1745 = vand.u32 %v1361, 4294901760
      %1746 = vmatmul.f32.gmra.mxu0 %v1745
      %v1747 = vpop.f32.mrf.mxu0
      %v1748 = vadd.f32 %v1694, %v1747
      %v1749 = vand.u32 %v1364, 4294901760
      %1750 = vmatmul.f32.gmra.mxu0 %v1749
      %v1751 = vpop.f32.mrf.mxu0
      %v1752 = vadd.f32 %v1698, %v1751
      %v1753 = vand.u32 %v1367, 4294901760
      %1754 = vmatmul.f32.gmra.mxu0 %v1753
      %v1755 = vpop.f32.mrf.mxu0
      %v1756 = vadd.f32 %v1702, %v1755
      %v1757 = vand.u32 %v1370, 4294901760
      %1758 = vmatmul.f32.gmra.mxu0 %v1757
      %v1759 = vpop.f32.mrf.mxu0
      %v1760 = vadd.f32 %v1706, %v1759
      %v1761 = vand.u32 %v1373, 4294901760
      %1762 = vmatmul.f32.gmra.mxu0 %v1761
      %v1763 = vpop.f32.mrf.mxu0
      %v1764 = vadd.f32 %v1710, %v1763
      %v1765 = vand.u32 %v1376, 4294901760
      %1766 = vmatmul.f32.gmra.mxu0 %v1765
      %v1767 = vpop.f32.mrf.mxu0
      %v1768 = vadd.f32 %v1714, %v1767
      %v1769 = vand.u32 %v1379, 4294901760
      %1770 = vmatmul.f32.gmra.mxu0 %v1769
      %v1771 = vpop.f32.mrf.mxu0
      %v1772 = vadd.f32 %v1718, %v1771
      %v1773 = vand.u32 %v1382, 4294901760
      %1774 = vmatmul.f32.gmra.mxu0 %v1773
      %v1775 = vpop.f32.mrf.mxu0
      %v1776 = vadd.f32 %v1722, %v1775
      %1777 = vdwg.mxu0
      %1778 = vmatpush.msra.mxu0 0.0
      %1779 = vmatpush.msra.mxu0 0.0
      %1780 = vmatpush.msra.mxu0 0.0
      %1781 = vmatpush.msra.mxu0 0.0
      %1782 = vmatpush.msra.mxu0 0.0
      %1783 = vmatpush.msra.mxu0 0.0
      %1784 = vmatpush.msra.mxu0 0.0
      %1785 = vmatpush.msra.mxu0 0.0
      %1786 = vmatpush.msra.mxu0 0.0
      %1787 = vmatpush.msra.mxu0 0.0
      %1788 = vmatpush.msra.mxu0 0.0
      %1789 = vmatpush.msra.mxu0 0.0
      %1790 = vmatpush.msra.mxu0 0.0
      %1791 = vmatpush.msra.mxu0 0.0
      %1792 = vmatpush.msra.mxu0 0.0
      %v1793 = vand.u32 %v1346, 4294901760
      %1794 = vmatpush.msra.mxu0 %v1793
      %v1795 = vand.u32 %v1358, 4294901760
      %v1796 = vsub.f32 %v1358, %v1795
      %v1797 = vand.u32 %v1796, 4294901760
      %v1798 = vsub.f32 %v1796, %v1797
      %v1799 = vand.u32 %v1798, 4294901760
      %1800 = vmatmul.f32.gmra.mxu0 %v1799
      %v1801 = vpop.f32.mrf.mxu0
      %v1802 = vadd.f32 0.0, %v1801
      %v1803 = vand.u32 %v1361, 4294901760
      %v1804 = vsub.f32 %v1361, %v1803
      %v1805 = vand.u32 %v1804, 4294901760
      %v1806 = vsub.f32 %v1804, %v1805
      %v1807 = vand.u32 %v1806, 4294901760
      %1808 = vmatmul.f32.gmra.mxu0 %v1807
      %v1809 = vpop.f32.mrf.mxu0
      %v1810 = vadd.f32 0.0, %v1809
      %v1811 = vand.u32 %v1364, 4294901760
      %v1812 = vsub.f32 %v1364, %v1811
      %v1813 = vand.u32 %v1812, 4294901760
      %v1814 = vsub.f32 %v1812, %v1813
      %v1815 = vand.u32 %v1814, 4294901760
      %1816 = vmatmul.f32.gmra.mxu0 %v1815
      %v1817 = vpop.f32.mrf.mxu0
      %v1818 = vadd.f32 0.0, %v1817
      %v1819 = vand.u32 %v1367, 4294901760
      %v1820 = vsub.f32 %v1367, %v1819
      %v1821 = vand.u32 %v1820, 4294901760
      %v1822 = vsub.f32 %v1820, %v1821
      %v1823 = vand.u32 %v1822, 4294901760
      %1824 = vmatmul.f32.gmra.mxu0 %v1823
      %v1825 = vpop.f32.mrf.mxu0
      %v1826 = vadd.f32 0.0, %v1825
      %v1827 = vand.u32 %v1370, 4294901760
      %v1828 = vsub.f32 %v1370, %v1827
      %v1829 = vand.u32 %v1828, 4294901760
      %v1830 = vsub.f32 %v1828, %v1829
      %v1831 = vand.u32 %v1830, 4294901760
      %1832 = vmatmul.f32.gmra.mxu0 %v1831
      %v1833 = vpop.f32.mrf.mxu0
      %v1834 = vadd.f32 0.0, %v1833
      %v1835 = vand.u32 %v1373, 4294901760
      %v1836 = vsub.f32 %v1373, %v1835
      %v1837 = vand.u32 %v1836, 4294901760
      %v1838 = vsub.f32 %v1836, %v1837
      %v1839 = vand.u32 %v1838, 4294901760
      %1840 = vmatmul.f32.gmra.mxu0 %v1839
      %v1841 = vpop.f32.mrf.mxu0
      %v1842 = vadd.f32 0.0, %v1841
      %v1843 = vand.u32 %v1376, 4294901760
      %v1844 = vsub.f32 %v1376, %v1843
      %v1845 = vand.u32 %v1844, 4294901760
      %v1846 = vsub.f32 %v1844, %v1845
      %v1847 = vand.u32 %v1846, 4294901760
      %1848 = vmatmul.f32.gmra.mxu0 %v1847
      %v1849 = vpop.f32.mrf.mxu0
      %v1850 = vadd.f32 0.0, %v1849
      %v1851 = vand.u32 %v1379, 4294901760
      %v1852 = vsub.f32 %v1379, %v1851
      %v1853 = vand.u32 %v1852, 4294901760
      %v1854 = vsub.f32 %v1852, %v1853
      %v1855 = vand.u32 %v1854, 4294901760
      %1856 = vmatmul.f32.gmra.mxu0 %v1855
      %v1857 = vpop.f32.mrf.mxu0
      %v1858 = vadd.f32 0.0, %v1857
      %v1859 = vand.u32 %v1382, 4294901760
      %v1860 = vsub.f32 %v1382, %v1859
      %v1861 = vand.u32 %v1860, 4294901760
      %v1862 = vsub.f32 %v1860, %v1861
      %v1863 = vand.u32 %v1862, 4294901760
      %1864 = vmatmul.f32.gmra.mxu0 %v1863
      %v1865 = vpop.f32.mrf.mxu0
      %v1866 = vadd.f32 0.0, %v1865
      %1867 = vdwg.mxu0
      %1868 = vmatpush.msra.mxu0 0.0
      %1869 = vmatpush.msra.mxu0 0.0
      %1870 = vmatpush.msra.mxu0 0.0
      %1871 = vmatpush.msra.mxu0 0.0
      %1872 = vmatpush.msra.mxu0 0.0
      %1873 = vmatpush.msra.mxu0 0.0
      %1874 = vmatpush.msra.mxu0 0.0
      %1875 = vmatpush.msra.mxu0 0.0
      %1876 = vmatpush.msra.mxu0 0.0
      %1877 = vmatpush.msra.mxu0 0.0
      %1878 = vmatpush.msra.mxu0 0.0
      %1879 = vmatpush.msra.mxu0 0.0
      %1880 = vmatpush.msra.mxu0 0.0
      %1881 = vmatpush.msra.mxu0 0.0
      %1882 = vmatpush.msra.mxu0 0.0
      %v1883 = vand.u32 %v1346, 4294901760
      %v1884 = vsub.f32 %v1346, %v1883
      %v1885 = vand.u32 %v1884, 4294901760
      %v1886 = vsub.f32 %v1884, %v1885
      %v1887 = vand.u32 %v1886, 4294901760
      %1888 = vmatpush.msra.mxu0 %v1887
      %v1889 = vand.u32 %v1358, 4294901760
      %1890 = vmatmul.f32.gmra.mxu0 %v1889
      %v1891 = vpop.f32.mrf.mxu0
      %v1892 = vadd.f32 %v1802, %v1891
      %v1893 = vand.u32 %v1361, 4294901760
      %1894 = vmatmul.f32.gmra.mxu0 %v1893
      %v1895 = vpop.f32.mrf.mxu0
      %v1896 = vadd.f32 %v1810, %v1895
      %v1897 = vand.u32 %v1364, 4294901760
      %1898 = vmatmul.f32.gmra.mxu0 %v1897
      %v1899 = vpop.f32.mrf.mxu0
      %v1900 = vadd.f32 %v1818, %v1899
      %v1901 = vand.u32 %v1367, 4294901760
      %1902 = vmatmul.f32.gmra.mxu0 %v1901
      %v1903 = vpop.f32.mrf.mxu0
      %v1904 = vadd.f32 %v1826, %v1903
      %v1905 = vand.u32 %v1370, 4294901760
      %1906 = vmatmul.f32.gmra.mxu0 %v1905
      %v1907 = vpop.f32.mrf.mxu0
      %v1908 = vadd.f32 %v1834, %v1907
      %v1909 = vand.u32 %v1373, 4294901760
      %1910 = vmatmul.f32.gmra.mxu0 %v1909
      %v1911 = vpop.f32.mrf.mxu0
      %v1912 = vadd.f32 %v1842, %v1911
      %v1913 = vand.u32 %v1376, 4294901760
      %1914 = vmatmul.f32.gmra.mxu0 %v1913
      %v1915 = vpop.f32.mrf.mxu0
      %v1916 = vadd.f32 %v1850, %v1915
      %v1917 = vand.u32 %v1379, 4294901760
      %1918 = vmatmul.f32.gmra.mxu0 %v1917
      %v1919 = vpop.f32.mrf.mxu0
      %v1920 = vadd.f32 %v1858, %v1919
      %v1921 = vand.u32 %v1382, 4294901760
      %1922 = vmatmul.f32.gmra.mxu0 %v1921
      %v1923 = vpop.f32.mrf.mxu0
      %v1924 = vadd.f32 %v1866, %v1923
      %1925 = vdwg.mxu0
      %1926 = vmatpush.msra.mxu0 0.0
      %1927 = vmatpush.msra.mxu0 0.0
      %1928 = vmatpush.msra.mxu0 0.0
      %1929 = vmatpush.msra.mxu0 0.0
      %1930 = vmatpush.msra.mxu0 0.0
      %1931 = vmatpush.msra.mxu0 0.0
      %1932 = vmatpush.msra.mxu0 0.0
      %1933 = vmatpush.msra.mxu0 0.0
      %1934 = vmatpush.msra.mxu0 0.0
      %1935 = vmatpush.msra.mxu0 0.0
      %1936 = vmatpush.msra.mxu0 0.0
      %1937 = vmatpush.msra.mxu0 0.0
      %1938 = vmatpush.msra.mxu0 0.0
      %1939 = vmatpush.msra.mxu0 0.0
      %1940 = vmatpush.msra.mxu0 0.0
      %v1941 = vand.u32 %v1346, 4294901760
      %v1942 = vsub.f32 %v1346, %v1941
      %1943 = vmatpush.msra.mxu0 %v1942
      %v1944 = vand.u32 %v1358, 4294901760
      %v1945 = vsub.f32 %v1358, %v1944
      %1946 = vmatmul.f32.gmra.mxu0 %v1945
      %v1947 = vpop.f32.mrf.mxu0
      %v1948 = vadd.f32 %v1892, %v1947
      %v1949 = vand.u32 %v1361, 4294901760
      %v1950 = vsub.f32 %v1361, %v1949
      %1951 = vmatmul.f32.gmra.mxu0 %v1950
      %v1952 = vpop.f32.mrf.mxu0
      %v1953 = vadd.f32 %v1896, %v1952
      %v1954 = vand.u32 %v1364, 4294901760
      %v1955 = vsub.f32 %v1364, %v1954
      %1956 = vmatmul.f32.gmra.mxu0 %v1955
      %v1957 = vpop.f32.mrf.mxu0
      %v1958 = vadd.f32 %v1900, %v1957
      %v1959 = vand.u32 %v1367, 4294901760
      %v1960 = vsub.f32 %v1367, %v1959
      %1961 = vmatmul.f32.gmra.mxu0 %v1960
      %v1962 = vpop.f32.mrf.mxu0
      %v1963 = vadd.f32 %v1904, %v1962
      %v1964 = vand.u32 %v1370, 4294901760
      %v1965 = vsub.f32 %v1370, %v1964
      %1966 = vmatmul.f32.gmra.mxu0 %v1965
      %v1967 = vpop.f32.mrf.mxu0
      %v1968 = vadd.f32 %v1908, %v1967
      %v1969 = vand.u32 %v1373, 4294901760
      %v1970 = vsub.f32 %v1373, %v1969
      %1971 = vmatmul.f32.gmra.mxu0 %v1970
      %v1972 = vpop.f32.mrf.mxu0
      %v1973 = vadd.f32 %v1912, %v1972
      %v1974 = vand.u32 %v1376, 4294901760
      %v1975 = vsub.f32 %v1376, %v1974
      %1976 = vmatmul.f32.gmra.mxu0 %v1975
      %v1977 = vpop.f32.mrf.mxu0
      %v1978 = vadd.f32 %v1916, %v1977
      %v1979 = vand.u32 %v1379, 4294901760
      %v1980 = vsub.f32 %v1379, %v1979
      %1981 = vmatmul.f32.gmra.mxu0 %v1980
      %v1982 = vpop.f32.mrf.mxu0
      %v1983 = vadd.f32 %v1920, %v1982
      %v1984 = vand.u32 %v1382, 4294901760
      %v1985 = vsub.f32 %v1382, %v1984
      %1986 = vmatmul.f32.gmra.mxu0 %v1985
      %v1987 = vpop.f32.mrf.mxu0
      %v1988 = vadd.f32 %v1924, %v1987
      %1989 = vdwg.mxu0
      %1990 = vmatpush.msra.mxu0 0.0
      %1991 = vmatpush.msra.mxu0 0.0
      %1992 = vmatpush.msra.mxu0 0.0
      %1993 = vmatpush.msra.mxu0 0.0
      %1994 = vmatpush.msra.mxu0 0.0
      %1995 = vmatpush.msra.mxu0 0.0
      %1996 = vmatpush.msra.mxu0 0.0
      %1997 = vmatpush.msra.mxu0 0.0
      %1998 = vmatpush.msra.mxu0 0.0
      %1999 = vmatpush.msra.mxu0 0.0
      %2000 = vmatpush.msra.mxu0 0.0
      %2001 = vmatpush.msra.mxu0 0.0
      %2002 = vmatpush.msra.mxu0 0.0
      %2003 = vmatpush.msra.mxu0 0.0
      %2004 = vmatpush.msra.mxu0 0.0
      %v2005 = vand.u32 %v1346, 4294901760
      %2006 = vmatpush.msra.mxu0 %v2005
      %v2007 = vand.u32 %v1358, 4294901760
      %v2008 = vsub.f32 %v1358, %v2007
      %v2009 = vand.u32 %v2008, 4294901760
      %2010 = vmatmul.f32.gmra.mxu0 %v2009
      %v2011 = vpop.f32.mrf.mxu0
      %v2012 = vadd.f32 %v1948, %v2011
      %v2013 = vand.u32 %v1361, 4294901760
      %v2014 = vsub.f32 %v1361, %v2013
      %v2015 = vand.u32 %v2014, 4294901760
      %2016 = vmatmul.f32.gmra.mxu0 %v2015
      %v2017 = vpop.f32.mrf.mxu0
      %v2018 = vadd.f32 %v1953, %v2017
      %v2019 = vand.u32 %v1364, 4294901760
      %v2020 = vsub.f32 %v1364, %v2019
      %v2021 = vand.u32 %v2020, 4294901760
      %2022 = vmatmul.f32.gmra.mxu0 %v2021
      %v2023 = vpop.f32.mrf.mxu0
      %v2024 = vadd.f32 %v1958, %v2023
      %v2025 = vand.u32 %v1367, 4294901760
      %v2026 = vsub.f32 %v1367, %v2025
      %v2027 = vand.u32 %v2026, 4294901760
      %2028 = vmatmul.f32.gmra.mxu0 %v2027
      %v2029 = vpop.f32.mrf.mxu0
      %v2030 = vadd.f32 %v1963, %v2029
      %v2031 = vand.u32 %v1370, 4294901760
      %v2032 = vsub.f32 %v1370, %v2031
      %v2033 = vand.u32 %v2032, 4294901760
      %2034 = vmatmul.f32.gmra.mxu0 %v2033
      %v2035 = vpop.f32.mrf.mxu0
      %v2036 = vadd.f32 %v1968, %v2035
      %v2037 = vand.u32 %v1373, 4294901760
      %v2038 = vsub.f32 %v1373, %v2037
      %v2039 = vand.u32 %v2038, 4294901760
      %2040 = vmatmul.f32.gmra.mxu0 %v2039
      %v2041 = vpop.f32.mrf.mxu0
      %v2042 = vadd.f32 %v1973, %v2041
      %v2043 = vand.u32 %v1376, 4294901760
      %v2044 = vsub.f32 %v1376, %v2043
      %v2045 = vand.u32 %v2044, 4294901760
      %2046 = vmatmul.f32.gmra.mxu0 %v2045
      %v2047 = vpop.f32.mrf.mxu0
      %v2048 = vadd.f32 %v1978, %v2047
      %v2049 = vand.u32 %v1379, 4294901760
      %v2050 = vsub.f32 %v1379, %v2049
      %v2051 = vand.u32 %v2050, 4294901760
      %2052 = vmatmul.f32.gmra.mxu0 %v2051
      %v2053 = vpop.f32.mrf.mxu0
      %v2054 = vadd.f32 %v1983, %v2053
      %v2055 = vand.u32 %v1382, 4294901760
      %v2056 = vsub.f32 %v1382, %v2055
      %v2057 = vand.u32 %v2056, 4294901760
      %2058 = vmatmul.f32.gmra.mxu0 %v2057
      %v2059 = vpop.f32.mrf.mxu0
      %v2060 = vadd.f32 %v1988, %v2059
      %2061 = vdwg.mxu0
      %2062 = vmatpush.msra.mxu0 0.0
      %2063 = vmatpush.msra.mxu0 0.0
      %2064 = vmatpush.msra.mxu0 0.0
      %2065 = vmatpush.msra.mxu0 0.0
      %2066 = vmatpush.msra.mxu0 0.0
      %2067 = vmatpush.msra.mxu0 0.0
      %2068 = vmatpush.msra.mxu0 0.0
      %2069 = vmatpush.msra.mxu0 0.0
      %2070 = vmatpush.msra.mxu0 0.0
      %2071 = vmatpush.msra.mxu0 0.0
      %2072 = vmatpush.msra.mxu0 0.0
      %2073 = vmatpush.msra.mxu0 0.0
      %2074 = vmatpush.msra.mxu0 0.0
      %2075 = vmatpush.msra.mxu0 0.0
      %2076 = vmatpush.msra.mxu0 0.0
      %v2077 = vand.u32 %v1346, 4294901760
      %v2078 = vsub.f32 %v1346, %v2077
      %v2079 = vand.u32 %v2078, 4294901760
      %2080 = vmatpush.msra.mxu0 %v2079
      %v2081 = vand.u32 %v1358, 4294901760
      %2082 = vmatmul.f32.gmra.mxu0 %v2081
      %v2083 = vpop.f32.mrf.mxu0
      %v2084 = vadd.f32 %v2012, %v2083
      %v2085 = vand.u32 %v1361, 4294901760
      %2086 = vmatmul.f32.gmra.mxu0 %v2085
      %v2087 = vpop.f32.mrf.mxu0
      %v2088 = vadd.f32 %v2018, %v2087
      %v2089 = vand.u32 %v1364, 4294901760
      %2090 = vmatmul.f32.gmra.mxu0 %v2089
      %v2091 = vpop.f32.mrf.mxu0
      %v2092 = vadd.f32 %v2024, %v2091
      %v2093 = vand.u32 %v1367, 4294901760
      %2094 = vmatmul.f32.gmra.mxu0 %v2093
      %v2095 = vpop.f32.mrf.mxu0
      %v2096 = vadd.f32 %v2030, %v2095
      %v2097 = vand.u32 %v1370, 4294901760
      %2098 = vmatmul.f32.gmra.mxu0 %v2097
      %v2099 = vpop.f32.mrf.mxu0
      %v2100 = vadd.f32 %v2036, %v2099
      %v2101 = vand.u32 %v1373, 4294901760
      %2102 = vmatmul.f32.gmra.mxu0 %v2101
      %v2103 = vpop.f32.mrf.mxu0
      %v2104 = vadd.f32 %v2042, %v2103
      %v2105 = vand.u32 %v1376, 4294901760
      %2106 = vmatmul.f32.gmra.mxu0 %v2105
      %v2107 = vpop.f32.mrf.mxu0
      %v2108 = vadd.f32 %v2048, %v2107
      %v2109 = vand.u32 %v1379, 4294901760
      %2110 = vmatmul.f32.gmra.mxu0 %v2109
      %v2111 = vpop.f32.mrf.mxu0
      %v2112 = vadd.f32 %v2054, %v2111
      %v2113 = vand.u32 %v1382, 4294901760
      %2114 = vmatmul.f32.gmra.mxu0 %v2113
      %v2115 = vpop.f32.mrf.mxu0
      %v2116 = vadd.f32 %v2060, %v2115
      %2117 = vdwg.mxu0
      %2118 = vmatpush.msra.mxu0 0.0
      %2119 = vmatpush.msra.mxu0 0.0
      %2120 = vmatpush.msra.mxu0 0.0
      %2121 = vmatpush.msra.mxu0 0.0
      %2122 = vmatpush.msra.mxu0 0.0
      %2123 = vmatpush.msra.mxu0 0.0
      %2124 = vmatpush.msra.mxu0 0.0
      %2125 = vmatpush.msra.mxu0 0.0
      %2126 = vmatpush.msra.mxu0 0.0
      %2127 = vmatpush.msra.mxu0 0.0
      %2128 = vmatpush.msra.mxu0 0.0
      %2129 = vmatpush.msra.mxu0 0.0
      %2130 = vmatpush.msra.mxu0 0.0
      %2131 = vmatpush.msra.mxu0 0.0
      %2132 = vmatpush.msra.mxu0 0.0
      %v2133 = vand.u32 %v1346, 4294901760
      %2134 = vmatpush.msra.mxu0 %v2133
      %v2135 = vand.u32 %v1358, 4294901760
      %2136 = vmatmul.f32.gmra.mxu0 %v2135
      %v2137 = vpop.f32.mrf.mxu0
      %v2138 = vadd.f32 %v2084, %v2137
      %v2139 = vand.u32 %v1361, 4294901760
      %2140 = vmatmul.f32.gmra.mxu0 %v2139
      %v2141 = vpop.f32.mrf.mxu0
      %v2142 = vadd.f32 %v2088, %v2141
      %v2143 = vand.u32 %v1364, 4294901760
      %2144 = vmatmul.f32.gmra.mxu0 %v2143
      %v2145 = vpop.f32.mrf.mxu0
      %v2146 = vadd.f32 %v2092, %v2145
      %v2147 = vand.u32 %v1367, 4294901760
      %2148 = vmatmul.f32.gmra.mxu0 %v2147
      %v2149 = vpop.f32.mrf.mxu0
      %v2150 = vadd.f32 %v2096, %v2149
      %v2151 = vand.u32 %v1370, 4294901760
      %2152 = vmatmul.f32.gmra.mxu0 %v2151
      %v2153 = vpop.f32.mrf.mxu0
      %v2154 = vadd.f32 %v2100, %v2153
      %v2155 = vand.u32 %v1373, 4294901760
      %2156 = vmatmul.f32.gmra.mxu0 %v2155
      %v2157 = vpop.f32.mrf.mxu0
      %v2158 = vadd.f32 %v2104, %v2157
      %v2159 = vand.u32 %v1376, 4294901760
      %2160 = vmatmul.f32.gmra.mxu0 %v2159
      %v2161 = vpop.f32.mrf.mxu0
      %v2162 = vadd.f32 %v2108, %v2161
      %v2163 = vand.u32 %v1379, 4294901760
      %2164 = vmatmul.f32.gmra.mxu0 %v2163
      %v2165 = vpop.f32.mrf.mxu0
      %v2166 = vadd.f32 %v2112, %v2165
      %v2167 = vand.u32 %v1382, 4294901760
      %2168 = vmatmul.f32.gmra.mxu0 %v2167
      %v2169 = vpop.f32.mrf.mxu0
      %v2170 = vadd.f32 %v2116, %v2169
      %2171 = vdwg.mxu0
      %2172 = vrot.lane.b32.xlu0 %v1744, 17
      %v2173 = vpop.permute.xlu0 %2172
      %2174 = vrot.lane.b32.xlu0 %v2138, 17
      %v2175 = vpop.permute.xlu0 %2174
      %v2176 = vsel %vm1243, %v2173, %v2175
      %v2177 = vsel %vm1243, %v2175, %v2173
      %v2178 = vmul.f32 %v2177, %v1246
      %v2179 = vmul.f32 %v2176, %v1247
      %v2180 = vadd.f32 %v1760, %v2178
      %v2181 = vadd.f32 %v2154, %v2179
      %2182 = vrot.lane.b32.xlu0 %v1748, 16
      %v2183 = vpop.permute.xlu0 %2182
      %2184 = vrot.lane.b32.xlu0 %v2142, 16
      %v2185 = vpop.permute.xlu0 %2184
      %v2186 = vsel %vm1256, %v2183, %v2185
      %v2187 = vsel %vm1256, %v2185, %v2183
      %v2188 = vmul.f32 %v2187, %v1259
      %v2189 = vmul.f32 %v2186, %v1260
      %v2190 = vadd.f32 %v2180, %v2188
      %v2191 = vadd.f32 %v2181, %v2189
      %2192 = vrot.lane.b32.xlu0 %v1752, 15
      %v2193 = vpop.permute.xlu0 %2192
      %2194 = vrot.lane.b32.xlu0 %v2146, 15
      %v2195 = vpop.permute.xlu0 %2194
      %v2196 = vsel %vm1269, %v2193, %v2195
      %v2197 = vsel %vm1269, %v2195, %v2193
      %v2198 = vmul.f32 %v2197, %v1272
      %v2199 = vmul.f32 %v2196, %v1273
      %v2200 = vadd.f32 %v2190, %v2198
      %v2201 = vadd.f32 %v2191, %v2199
      %2202 = vrot.lane.b32.xlu0 %v1756, 1
      %v2203 = vpop.permute.xlu0 %2202
      %2204 = vrot.lane.b32.xlu0 %v2150, 1
      %v2205 = vpop.permute.xlu0 %2204
      %v2206 = vsel %vm1282, %v2203, %v2205
      %v2207 = vsel %vm1282, %v2205, %v2203
      %v2208 = vmul.f32 %v2207, %v1285
      %v2209 = vmul.f32 %v2206, %v1286
      %v2210 = vadd.f32 %v2200, %v2208
      %v2211 = vadd.f32 %v2201, %v2209
      %2212 = vrot.lane.b32.xlu0 %v1764, 127
      %v2213 = vpop.permute.xlu0 %2212
      %2214 = vrot.lane.b32.xlu0 %v2158, 127
      %v2215 = vpop.permute.xlu0 %2214
      %v2216 = vsel %vm1295, %v2213, %v2215
      %v2217 = vsel %vm1295, %v2215, %v2213
      %v2218 = vmul.f32 %v2216, %v1298
      %v2219 = vmul.f32 %v2217, %v1299
      %v2220 = vadd.f32 %v2210, %v2218
      %v2221 = vadd.f32 %v2211, %v2219
      %2222 = vrot.lane.b32.xlu0 %v1768, 113
      %v2223 = vpop.permute.xlu0 %2222
      %2224 = vrot.lane.b32.xlu0 %v2162, 113
      %v2225 = vpop.permute.xlu0 %2224
      %v2226 = vsel %vm1308, %v2223, %v2225
      %v2227 = vsel %vm1308, %v2225, %v2223
      %v2228 = vmul.f32 %v2226, %v1311
      %v2229 = vmul.f32 %v2227, %v1312
      %v2230 = vadd.f32 %v2220, %v2228
      %v2231 = vadd.f32 %v2221, %v2229
      %2232 = vrot.lane.b32.xlu0 %v1772, 112
      %v2233 = vpop.permute.xlu0 %2232
      %2234 = vrot.lane.b32.xlu0 %v2166, 112
      %v2235 = vpop.permute.xlu0 %2234
      %v2236 = vsel %vm1321, %v2233, %v2235
      %v2237 = vsel %vm1321, %v2235, %v2233
      %v2238 = vmul.f32 %v2236, %v1324
      %v2239 = vmul.f32 %v2237, %v1325
      %v2240 = vadd.f32 %v2230, %v2238
      %v2241 = vadd.f32 %v2231, %v2239
      %2242 = vrot.lane.b32.xlu0 %v1776, 111
      %v2243 = vpop.permute.xlu0 %2242
      %2244 = vrot.lane.b32.xlu0 %v2170, 111
      %v2245 = vpop.permute.xlu0 %2244
      %v2246 = vsel %vm1334, %v2243, %v2245
      %v2247 = vsel %vm1334, %v2245, %v2243
      %v2248 = vmul.f32 %v2246, %v1337
      %v2249 = vmul.f32 %v2247, %v1338
      %v2250 = vadd.f32 %v2240, %v2248
      %v2251 = vadd.f32 %v2241, %v2249
      %v2252 = vld [vmem:[%s7] sm:$0xff]
      %2254 = vset.pattern.permute.xlu0 0
      %2255 = vperm.xlu0 %2254, %v2252
      %v2256 = vpop.permute.xlu0 %2255
      %v2258 = vadd.f32 %v2250, %v2256
      %v2259 = vadd.f32 %v2251, %v2256
      %v2260 = vxor.u32 %v2258, 2147483648
      %v2261 = vxor.u32 %v2259, 2147483648
      %v2262 = vmul.f32 %v2260, 1.442695
      %v2263 = vpow.pop %v2262
      %v2264 = vmul.f32 %v2261, 1.442695
      %v2265 = vpow.pop %v2264
      %v2266 = vadd.f32 %v2263, 1.0
      %v2267 = vadd.f32 %v2265, 1.0
      %v2268 = vrcp.pop %v2266
      %v2269 = vmul.f32 %v2266, %v2268
      %v2270 = vsub.f32 1.0, %v2269
      %v2271 = vmul.f32 %v2268, %v2270
      %v2272 = vadd.f32 %v2268, %v2271
      %vm2273 = vweird.f32 %v2266
      %vm2274 = vweird.f32 %v2268
      %vm2275 = vmor %vm2273, %vm2274
      %v2276 = vsel %vm2275, %v2268, %v2272
      %v2277 = vand.u32 2147483647, %v2266
      %vm2278 = vcmp.eq.f32.partialorder %v2277, 8.507059e+37
      %v2279 = vand.u32 %v2266, 2147483648
      %v2280 = vor.u32 1.1754944e-38, %v2279
      %v2281 = vsel %vm2278, %v2280, %v2276
      %v2282 = vmul.f32 1.0, %v2281
      %v2283 = vrcp.pop %v2267
      %v2284 = vmul.f32 %v2267, %v2283
      %v2285 = vsub.f32 1.0, %v2284
      %v2286 = vmul.f32 %v2283, %v2285
      %v2287 = vadd.f32 %v2283, %v2286
      %vm2288 = vweird.f32 %v2267
      %vm2289 = vweird.f32 %v2283
      %vm2290 = vmor %vm2288, %vm2289
      %v2291 = vsel %vm2290, %v2283, %v2287
      %v2292 = vand.u32 2147483647, %v2267
      %vm2293 = vcmp.eq.f32.partialorder %v2292, 8.507059e+37
      %v2294 = vand.u32 %v2267, 2147483648
      %v2295 = vor.u32 1.1754944e-38, %v2294
      %v2296 = vsel %vm2293, %v2295, %v2291
      %v2297 = vmul.f32 1.0, %v2296
      %v2298 = vmul.f32 %v2258, %v2282
      %v2299 = vmul.f32 %v2259, %v2297
      %v2300 = vld [vmem:[%s330] sm:$0xff]
      %v2301 = vld [vmem:[%s330 + $0x8] sm:$0xff]
      %v2302 = vadd.f32 %v2298, %v2300
      %v2303 = vadd.f32 %v2299, %v2301
      %2304 = vst [vmem:[%s345] sm:$0xff] %v2302
      %2305 = vst [vmem:[%s345 + $0x8] sm:$0xff] %v2303
      %p2306 = scmp.lt.s32.totalorder %s19, 1
      %s2307 = scalar_select %p2306, %s19, 1
      %s2308 = smul.addr %s2307, 2
      %s2309 = smul.addr %s2308, 8
      %s2310 = scalar_lea.vmem %s8, %s2309
      // Predicated region
      $region53: #{_lambda_.3} parent=51 // pred_check
        %p2311 = pneg %p220
      $region54: #{_lambda_.3} parent=51 // pred_check_branch
        %2313 = sbr.rel (%p2311) target = $region56
      $region55: #{_lambda_.3} parent=51 // pred_region
        _
      $region56: #{_lambda_.3} parent=51 // pred_fallthru
        _
    $region52: #{_lambda_.3} parent=5 // pred_fallthru
      _
    %p2314 = scmp.le.s32.totalorder 2, %s14
    // Predicated region
    $region57: #{_lambda_.3} parent=5 // pred_check
      %p2315 = pneg %p2314
    $region58: #{_lambda_.3} parent=5 // pred_check_branch
      %2317 = sbr.rel (%p2315) target = $region60
    $region59: #{_lambda_.3} parent=5 // pred_region
      %s2318 = ssub.s32 %s14, 2
      // Predicated region
      $region61: #{_lambda_.3} parent=59 // pred_check
        %p2319 = pneg %p226
      $region62: #{_lambda_.3} parent=59 // pred_check_branch
        %2321 = sbr.rel (%p2319) target = $region64
      $region63: #{_lambda_.3} parent=59 // pred_region
        %p2322 = scmp.lt.s32.totalorder %s20, 1
        %s2323 = scalar_select %p2322, %s20, 1
        %s2324 = smul.addr %s2323, 2
        %s2325 = smul.addr %s2324, 8
        %s2326 = scalar_lea.vmem %s8, %s2325
      $region64: #{_lambda_.3} parent=59 // pred_fallthru
        _
    $region60: #{_lambda_.3} parent=5 // pred_fallthru
      _
  $region6: #{_lambda_.3} parent=0 // loop_footer
    %s18 = sadd.s32 1, %s14
  $region7: #{_lambda_.3} parent=0 // loop_footer_branch
    %13 = sbr.rel target = $region3
  $region8: #{_lambda_.3} parent=0 // loop_exit
    _

</llo_original>
